<compile_context>
chip_gen: v7x
topology: tpu7x:2x2x1
jax: 0.10.0
libtpu: 0.0.40
codegen_flags: <defaults>
</compile_context>

<pallas_src>
import numpy as np
import jax
import jax.numpy as jnp
from jax.experimental import pallas as pl
from jax.experimental.pallas import tpu as pltpu


# ----------------------------------------------------------------------------
# packed-parameter layout (shared by the host-side packer and the kernel)
# ----------------------------------------------------------------------------
def _param_layout(x_dim, z_dim, h):
    """Row (offset, size) pairs of the packed (rows, h) parameter array.

    Segment order: W1_x, W1_z, W1_rel, b1, W2, b2, W3, b3, W4, b4, W5, b5,
    W6 (zero-padded to h output columns), b6 (zero-padded).
    Each segment start is aligned to 16 rows (bf16 sublane packing).
    """
    sizes = (x_dim, z_dim, 3, 1, h, 1, h, 1, h, 1, h, 1, h, 1)
    offs, off = [], 0
    for n in sizes:
        offs.append((off, n))
        off += -(-n // 16) * 16
    return offs, off


def _pack_params(params, x_dim, z_dim, h):
    w1, b1, w2, b2, w3, b3, w4, b4, w5, b5, w6, b6 = params
    w6p = jnp.zeros((h, h), jnp.float32).at[:, : w6.shape[1]].set(w6)
    b6p = jnp.zeros((1, h), jnp.float32).at[:, : b6.shape[1]].set(b6)
    segs = [w1[:x_dim], w1[x_dim:x_dim + z_dim], w1[x_dim + z_dim:], b1,
            w2, b2, w3, b3, w4, b4, w5, b5, w6p, b6p]
    offs, total = _param_layout(x_dim, z_dim, h)
    packed = jnp.zeros((total, h), jnp.float32)
    for (start, n), s in zip(offs, segs):
        packed = packed.at[start:start + n, :].set(s.astype(jnp.float32))
    return packed


# ----------------------------------------------------------------------------
# kernel: one (batch b, point-tile) grid step
# ----------------------------------------------------------------------------
def _decoder_gnn_kernel(x_ref, z_ref, rp_ref, par_ref, out_ref):
    """
    x_ref  : (1, tp, x_dim)   bf16   target-point features for this tile
    z_ref  : (1, K, z_dim)    bf16   latent per keypoint slot (this batch elem)
    rp_ref : (1, deg, K, 3)   f32    pos[src] - pos[dst], src = (dst+d+1) % K
    par_ref: (rows, h)        bf16   packed weights/biases (_param_layout)
    out_ref: (1, K, tp, 3)    f32    per-node 3-d offsets
    """
    f32 = jnp.float32
    bf16 = jnp.bfloat16
    tp, x_dim = x_ref.shape[1], x_ref.shape[2]
    K, z_dim = z_ref.shape[1], z_ref.shape[2]
    deg = K - 1
    h = par_ref.shape[1]

    offs, _ = _param_layout(x_dim, z_dim, h)
    (w1x, w1z, w1r, b1, w2, b2, w3, b3,
     w4, b4, w5, b5, w6, b6) = [par_ref[a:a + n, :] for a, n in offs]

    # --- local_nn layer 1, factored: per-point + per-source-slot + geometry ---
    xh = jnp.dot(x_ref[0], w1x, preferred_element_type=f32)              # (tp, h)
    zh = jnp.dot(z_ref[0], w1z, preferred_element_type=f32)              # (K, h)
    rh = jnp.dot(rp_ref[0].reshape(deg * K, 3), w1r.astype(f32),
                 preferred_element_type=f32) + b1.astype(f32)            # (deg*K, h)

    h0 = zh[:, None, :] + xh[None, :, :]                                 # (K, tp, h) source-node term
    h0x = jnp.concatenate([h0, h0[:deg]], axis=0)                        # (2K-1, tp, h)
    # all-but-self gather: for dest kd and offset d, source = (kd + d + 1) % K
    gath = jnp.concatenate([h0x[d + 1:d + 1 + K] for d in range(deg)],
                           axis=0)                                       # (deg*K, tp, h)
    a1 = jnp.maximum(gath + rh[:, None, :], 0.0)                         # relu(layer 1), (deg*K, tp, h)

    # --- local_nn layers 2-3: single big matmuls over all edges ---
    a1 = a1.reshape(deg * K * tp, h)
    a2 = jnp.maximum(
        jnp.dot(a1.astype(bf16), w2, preferred_element_type=f32) + b2.astype(f32), 0.0)
    a3 = jnp.maximum(
        jnp.dot(a2.astype(bf16), w3, preferred_element_type=f32) + b3.astype(f32), 0.0)

    # --- aggr='max' over incoming edges ---
    agg = jnp.max(a3.reshape(deg, K * tp, h), axis=0)                    # (K*tp, h)

    # --- global_nn ---
    g4 = jnp.maximum(
        jnp.dot(agg.astype(bf16), w4, preferred_element_type=f32) + b4.astype(f32), 0.0)
    g5 = jnp.maximum(
        jnp.dot(g4.astype(bf16), w5, preferred_element_type=f32) + b5.astype(f32), 0.0)
    out = jnp.dot(g5.astype(bf16), w6, preferred_element_type=f32) + b6.astype(f32)  # (K*tp, h), cols 3.. are 0

    out_ref[0] = out[:, :3].reshape(K, tp, 3).astype(out_ref.dtype)


# ----------------------------------------------------------------------------
# host-side wrapper
# ----------------------------------------------------------------------------
def _pick_tile_p(P, max_tile=256):
    """Largest divisor of P that is <= max_tile and (multiple of 8 or == P)."""
    divs = [t for t in range(1, P + 1) if P % t == 0 and (t % 8 == 0 or t == P)]
    small = [t for t in divs if t <= max_tile]
    return max(small) if small else min(divs)


def init_params(key, x_dim, z_dim, h_dim, y_dim):
    """Deterministic synthetic weights (shapes from Decoder_gnn.__init__).

    Values are rounded to bf16-representable so the bf16 kernel and the f32
    reference consume identical parameters.
    """
    f_in = x_dim + z_dim + y_dim
    dims = [(f_in, h_dim), (h_dim, h_dim), (h_dim, h_dim),    # local_nn
            (h_dim, h_dim), (h_dim, h_dim), (h_dim, 3)]       # global_nn
    params = []
    for din, dout in dims:
        key, kw, kb = jax.random.split(key, 3)
        w = jax.random.normal(kw, (din, dout), jnp.float32) / np.sqrt(din)
        b = jax.random.normal(kb, (1, dout), jnp.float32) * 0.05
        params += [w.astype(jnp.bfloat16).astype(jnp.float32),
                   b.astype(jnp.bfloat16).astype(jnp.float32)]
    return params


def decoder_gnn_forward(x, z, pos, params, *, n_kps=8, tile_p=None, max_tile_p=256):
    B, P, x_dim = x.shape
    bs = z.shape[0]
    K = n_kps + 1
    z_dim = z.shape[-1]
    h_dim = params[0].shape[1]
    deg = K - 1
    assert params[0].shape[0] == x_dim + z_dim + 3, "local_nn expects 3-d rel-pos (y_dim == 3)"

    if tile_p is None:
        tile_p = _pick_tile_p(P, max_tile_p)
    assert P % tile_p == 0 and (tile_p % 8 == 0 or tile_p == P)

    # z.repeat(1, P, 1, 1) + torch.tile over batch  ->  per-(b, k) latent
    zb = jnp.tile(z[:, 0, :, :], (B // bs, 1, 1))                        # (B, K, z_dim)

    # relative positions: rp[b, d, kd] = pos[b, (kd+d+1)%K] - pos[b, kd]
    kd = np.arange(K)
    src = (kd[None, :] + np.arange(1, K)[:, None]) % K                   # (deg, K)
    rp = (pos[:, src, :] - pos[:, kd[None, :], :]).astype(jnp.float32)   # (B, deg, K, 3)

    packed = _pack_params(params, x_dim, z_dim, h_dim).astype(jnp.bfloat16)
    x_b = x.astype(jnp.bfloat16)
    z_b = zb.astype(jnp.bfloat16)
    n_rows = packed.shape[0]

    out = pl.pallas_call(
        _decoder_gnn_kernel,
        out_shape=jax.ShapeDtypeStruct((B, K, P, 3), jnp.float32),
        grid=(B, P // tile_p),
        in_specs=[
            pl.BlockSpec((1, tile_p, x_dim), lambda b, i: (b, i, 0)),
            pl.BlockSpec((1, K, z_dim), lambda b, i: (b, 0, 0)),
            pl.BlockSpec((1, deg, K, 3), lambda b, i: (b, 0, 0, 0)),
            pl.BlockSpec((n_rows, h_dim), lambda b, i: (0, 0)),
        ],
        out_specs=pl.BlockSpec((1, K, tile_p, 3), lambda b, i: (b, 0, i, 0)),
        compiler_params=pltpu.CompilerParams(
            dimension_semantics=("parallel", "parallel"),
            vmem_limit_bytes=48 * 1024 * 1024,
        ),
    )(x_b, z_b, rp, packed)

    out = jnp.transpose(out, (0, 2, 1, 3))                               # (B, P, K, 3)
    return out[:, :, :n_kps, :], out[:, :, n_kps:, :]


# ----------------------------------------------------------------------------
# pure-JAX reference (mirrors the PyTorch module directly)
# ----------------------------------------------------------------------------
def _reference(x, z, pos, params, n_kps):
    B, P, x_dim = x.shape
    K = n_kps + 1
    bs = z.shape[0]
    z_dim = z.shape[-1]
    w1, b1, w2, b2, w3, b3, w4, b4, w5, b5, w6, b6 = params

    x_rep = jnp.broadcast_to(x[:, :, None, :], (B, P, K, x_dim))
    z_rep = jnp.tile(jnp.broadcast_to(z, (bs, P, K, z_dim)), (B // bs, 1, 1, 1))
    pairs = jnp.concatenate([x_rep, z_rep], axis=-1)                     # (B, P, K, Fx)

    src_feat = jnp.broadcast_to(pairs[:, :, None, :, :], (B, P, K, K, x_dim + z_dim))
    relp = pos[:, None, :, :] - pos[:, :, None, :]                       # [b, kd, ks] = pos[ks]-pos[kd]
    relp = jnp.broadcast_to(relp[:, None], (B, P, K, K, 3))
    e = jnp.concatenate([src_feat, relp], axis=-1)                       # (B, P, K, K, Fin)

    h = jax.nn.relu(e @ w1 + b1)
    h = jax.nn.relu(h @ w2 + b2)
    h = jax.nn.relu(h @ w3 + b3)                                         # per-edge messages
    mask = ~jnp.eye(K, dtype=bool)                                       # no self loops
    h = jnp.where(mask[None, None, :, :, None], h, -jnp.inf)
    agg = jnp.max(h, axis=3)                                             # aggr='max' over sources

    g = jax.nn.relu(agg @ w4 + b4)
    g = jax.nn.relu(g @ w5 + b5)
    out = g @ w6 + b6                                                    # (B, P, K, 3)
    return out[:, :, :n_kps, :], out[:, :, n_kps:, :]


if __name__ == "__main__":
    x_dim, z_dim, h_dim, y_dim, n_kps = 3, 32, 32, 3, 8
    B, P, bs_z = 2, 8, 1
    K = n_kps + 1

    key = jax.random.PRNGKey(0)
    kx, kz, kpos, kw = jax.random.split(key, 4)
    # round inputs to bf16-representable so kernel (bf16) and reference (f32)
    # consume identical values
    q = lambda a: a.astype(jnp.bfloat16).astype(jnp.float32)
    x = q(jax.random.normal(kx, (B, P, x_dim), jnp.float32))
    z = q(jax.random.normal(kz, (bs_z, 1, K, z_dim), jnp.float32))
    pos = q(jax.random.normal(kpos, (B, K, 3), jnp.float32))
    params = init_params(kw, x_dim, z_dim, h_dim, y_dim)

    kp_ofs, ctr_ofs = decoder_gnn_forward(x, z, pos, params, n_kps=n_kps)
    jax.block_until_ready((kp_ofs, ctr_ofs))
    assert kp_ofs.shape == (B, P, n_kps, 3)
    assert ctr_ofs.shape == (B, P, 1, 3)

    # correctness check against an independent f32 reference (tolerance covers
    # the intentional bf16 MXU inputs; accumulation is f32 in the kernel)
    with jax.default_matmul_precision("highest"):
        ref_kp, ref_ctr = _reference(x, z, pos, params, n_kps)
    assert np.allclose(np.asarray(kp_ofs), np.asarray(ref_kp), atol=3e-2, rtol=3e-2)
    assert np.allclose(np.asarray(ctr_ofs), np.asarray(ref_ctr), atol=3e-2, rtol=3e-2)

    print("KERNEL_OK")
</pallas_src>

<mosaic_0001>
module attributes {stable_mosaic.version = 11 : i64} {
  func.func @_decoder_gnn_kernel(%arg0: i32, %arg1: i32, %arg2: memref<1x8x3xbf16, #tpu.memory_space<vmem>>, %arg3: memref<1x9x32xbf16, #tpu.memory_space<vmem>>, %arg4: memref<1x8x9x3xf32, #tpu.memory_space<vmem>>, %arg5: memref<320x32xbf16, #tpu.memory_space<vmem>>, %arg6: memref<1x9x8x3xf32, #tpu.memory_space<vmem>>) attributes {dimension_semantics = [#tpu.dimension_semantics<parallel>, #tpu.dimension_semantics<parallel>], iteration_bounds = array<i64: 2, 1>, scalar_prefetch = 0 : i64, scratch_operands = 0 : i64, tpu.core_type = #tpu.core_type<tc>, window_params = [{transform_indices = @transform_0, window_bounds = array<i64: 1, 8, 3>}, {transform_indices = @transform_1, window_bounds = array<i64: 1, 9, 32>}, {transform_indices = @transform_2, window_bounds = array<i64: 1, 8, 9, 3>}, {pipeline_mode = #tpu.pipeline_mode<synchronous>, transform_indices = @transform_3, window_bounds = array<i64: 320, 32>}, {transform_indices = @transform_4, window_bounds = array<i64: 1, 9, 8, 3>}]} {
    %c0 = arith.constant 0 : index
    %c0_0 = arith.constant 0 : index
    %0 = vector.load %arg5[%c0, %c0_0] : memref<320x32xbf16, #tpu.memory_space<vmem>>, vector<3x32xbf16>
    %c16 = arith.constant 16 : index
    %c0_1 = arith.constant 0 : index
    %1 = vector.load %arg5[%c16, %c0_1] : memref<320x32xbf16, #tpu.memory_space<vmem>>, vector<32x32xbf16>
    %c48 = arith.constant 48 : index
    %c0_2 = arith.constant 0 : index
    %2 = vector.load %arg5[%c48, %c0_2] : memref<320x32xbf16, #tpu.memory_space<vmem>>, vector<3x32xbf16>
    %c64 = arith.constant 64 : index
    %c0_3 = arith.constant 0 : index
    %3 = vector.load %arg5[%c64, %c0_3] : memref<320x32xbf16, #tpu.memory_space<vmem>>, vector<1x32xbf16>
    %c80 = arith.constant 80 : index
    %c0_4 = arith.constant 0 : index
    %4 = vector.load %arg5[%c80, %c0_4] : memref<320x32xbf16, #tpu.memory_space<vmem>>, vector<32x32xbf16>
    %c112 = arith.constant 112 : index
    %c0_5 = arith.constant 0 : index
    %5 = vector.load %arg5[%c112, %c0_5] : memref<320x32xbf16, #tpu.memory_space<vmem>>, vector<1x32xbf16>
    %c128 = arith.constant 128 : index
    %c0_6 = arith.constant 0 : index
    %6 = vector.load %arg5[%c128, %c0_6] : memref<320x32xbf16, #tpu.memory_space<vmem>>, vector<32x32xbf16>
    %c160 = arith.constant 160 : index
    %c0_7 = arith.constant 0 : index
    %7 = vector.load %arg5[%c160, %c0_7] : memref<320x32xbf16, #tpu.memory_space<vmem>>, vector<1x32xbf16>
    %c176 = arith.constant 176 : index
    %c0_8 = arith.constant 0 : index
    %8 = vector.load %arg5[%c176, %c0_8] : memref<320x32xbf16, #tpu.memory_space<vmem>>, vector<32x32xbf16>
    %c208 = arith.constant 208 : index
    %c0_9 = arith.constant 0 : index
    %9 = vector.load %arg5[%c208, %c0_9] : memref<320x32xbf16, #tpu.memory_space<vmem>>, vector<1x32xbf16>
    %c224 = arith.constant 224 : index
    %c0_10 = arith.constant 0 : index
    %10 = vector.load %arg5[%c224, %c0_10] : memref<320x32xbf16, #tpu.memory_space<vmem>>, vector<32x32xbf16>
    %c256 = arith.constant 256 : index
    %c0_11 = arith.constant 0 : index
    %11 = vector.load %arg5[%c256, %c0_11] : memref<320x32xbf16, #tpu.memory_space<vmem>>, vector<1x32xbf16>
    %c272 = arith.constant 272 : index
    %c0_12 = arith.constant 0 : index
    %12 = vector.load %arg5[%c272, %c0_12] : memref<320x32xbf16, #tpu.memory_space<vmem>>, vector<32x32xbf16>
    %c304 = arith.constant 304 : index
    %c0_13 = arith.constant 0 : index
    %13 = vector.load %arg5[%c304, %c0_13] : memref<320x32xbf16, #tpu.memory_space<vmem>>, vector<1x32xbf16>
    %c0_14 = arith.constant 0 : index
    %c0_15 = arith.constant 0 : index
    %c0_16 = arith.constant 0 : index
    %14 = vector.load %arg2[%c0_14, %c0_15, %c0_16] : memref<1x8x3xbf16, #tpu.memory_space<vmem>>, vector<1x8x3xbf16>
    %15 = vector.shape_cast %14 : vector<1x8x3xbf16> to vector<8x3xbf16>
    %cst = arith.constant dense<0.000000e+00> : vector<8x32xf32>
    %16 = tpu.matmul %15, %0, %cst {dimension_numbers = #tpu.dot_dimension_numbers<[1], [0], [0], [1], [0, 0, 1, 1], [], []>} : vector<8x3xbf16>, vector<3x32xbf16>, vector<8x32xf32> -> vector<8x32xf32>
    %c0_17 = arith.constant 0 : index
    %c0_18 = arith.constant 0 : index
    %c0_19 = arith.constant 0 : index
    %17 = vector.load %arg3[%c0_17, %c0_18, %c0_19] : memref<1x9x32xbf16, #tpu.memory_space<vmem>>, vector<1x9x32xbf16>
    %18 = vector.shape_cast %17 : vector<1x9x32xbf16> to vector<9x32xbf16>
    %cst_20 = arith.constant dense<0.000000e+00> : vector<9x32xf32>
    %19 = tpu.matmul %18, %1, %cst_20 {dimension_numbers = #tpu.dot_dimension_numbers<[1], [0], [0], [1], [0, 0, 1, 1], [], []>} : vector<9x32xbf16>, vector<32x32xbf16>, vector<9x32xf32> -> vector<9x32xf32>
    %c0_21 = arith.constant 0 : index
    %c0_22 = arith.constant 0 : index
    %c0_23 = arith.constant 0 : index
    %c0_24 = arith.constant 0 : index
    %20 = vector.load %arg4[%c0_21, %c0_22, %c0_23, %c0_24] : memref<1x8x9x3xf32, #tpu.memory_space<vmem>>, vector<1x8x9x3xf32>
    %21 = vector.shape_cast %20 : vector<1x8x9x3xf32> to vector<8x9x3xf32>
    %22 = vector.shape_cast %21 : vector<8x9x3xf32> to vector<72x3xf32>
    %23 = arith.extf %2 : vector<3x32xbf16> to vector<3x32xf32>
    %cst_25 = arith.constant dense<0.000000e+00> : vector<72x32xf32>
    %24 = tpu.matmul %22, %23, %cst_25 {dimension_numbers = #tpu.dot_dimension_numbers<[1], [0], [0], [1], [0, 0, 1, 1], [], []>} : vector<72x3xf32>, vector<3x32xf32>, vector<72x32xf32> -> vector<72x32xf32>
    %25 = arith.extf %3 : vector<1x32xbf16> to vector<1x32xf32>
    %26 = vector.broadcast %25 : vector<1x32xf32> to vector<72x32xf32>
    %27 = arith.addf %24, %26 : vector<72x32xf32>
    %28 = vector.shape_cast %19 : vector<9x32xf32> to vector<9x1x32xf32>
    %29 = vector.shape_cast %16 : vector<8x32xf32> to vector<1x8x32xf32>
    %30 = vector.broadcast %28 : vector<9x1x32xf32> to vector<9x8x32xf32>
    %31 = vector.broadcast %29 : vector<1x8x32xf32> to vector<9x8x32xf32>
    %32 = arith.addf %30, %31 : vector<9x8x32xf32>
    %33 = vector.extract_strided_slice %32 {offsets = [0, 0, 0], sizes = [8, 8, 32], strides = [1, 1, 1]} : vector<9x8x32xf32> to vector<8x8x32xf32>
    %34 = tpu.concatenate %32, %33 in 0 : vector<9x8x32xf32>, vector<8x8x32xf32> -> vector<17x8x32xf32>
    %35 = vector.extract_strided_slice %34 {offsets = [1, 0, 0], sizes = [9, 8, 32], strides = [1, 1, 1]} : vector<17x8x32xf32> to vector<9x8x32xf32>
    %36 = vector.extract_strided_slice %34 {offsets = [2, 0, 0], sizes = [9, 8, 32], strides = [1, 1, 1]} : vector<17x8x32xf32> to vector<9x8x32xf32>
    %37 = vector.extract_strided_slice %34 {offsets = [3, 0, 0], sizes = [9, 8, 32], strides = [1, 1, 1]} : vector<17x8x32xf32> to vector<9x8x32xf32>
    %38 = vector.extract_strided_slice %34 {offsets = [4, 0, 0], sizes = [9, 8, 32], strides = [1, 1, 1]} : vector<17x8x32xf32> to vector<9x8x32xf32>
    %39 = vector.extract_strided_slice %34 {offsets = [5, 0, 0], sizes = [9, 8, 32], strides = [1, 1, 1]} : vector<17x8x32xf32> to vector<9x8x32xf32>
    %40 = vector.extract_strided_slice %34 {offsets = [6, 0, 0], sizes = [9, 8, 32], strides = [1, 1, 1]} : vector<17x8x32xf32> to vector<9x8x32xf32>
    %41 = vector.extract_strided_slice %34 {offsets = [7, 0, 0], sizes = [9, 8, 32], strides = [1, 1, 1]} : vector<17x8x32xf32> to vector<9x8x32xf32>
    %42 = vector.extract_strided_slice %34 {offsets = [8, 0, 0], sizes = [9, 8, 32], strides = [1, 1, 1]} : vector<17x8x32xf32> to vector<9x8x32xf32>
    %43 = tpu.concatenate %35, %36, %37, %38, %39, %40, %41, %42 in 0 : vector<9x8x32xf32>, vector<9x8x32xf32>, vector<9x8x32xf32>, vector<9x8x32xf32>, vector<9x8x32xf32>, vector<9x8x32xf32>, vector<9x8x32xf32>, vector<9x8x32xf32> -> vector<72x8x32xf32>
    %44 = vector.shape_cast %27 : vector<72x32xf32> to vector<72x1x32xf32>
    %45 = vector.broadcast %44 : vector<72x1x32xf32> to vector<72x8x32xf32>
    %46 = arith.addf %43, %45 : vector<72x8x32xf32>
    %cst_26 = arith.constant 0.000000e+00 : f32
    %47 = vector.broadcast %cst_26 : f32 to vector<72x8x32xf32>
    %48 = arith.maximumf %46, %47 : vector<72x8x32xf32>
    %49 = vector.shape_cast %48 : vector<72x8x32xf32> to vector<576x32xf32>
    %50 = arith.truncf %49 : vector<576x32xf32> to vector<576x32xbf16>
    %cst_27 = arith.constant dense<0.000000e+00> : vector<576x32xf32>
    %51 = tpu.matmul %50, %4, %cst_27 {dimension_numbers = #tpu.dot_dimension_numbers<[1], [0], [0], [1], [0, 0, 1, 1], [], []>} : vector<576x32xbf16>, vector<32x32xbf16>, vector<576x32xf32> -> vector<576x32xf32>
    %52 = arith.extf %5 : vector<1x32xbf16> to vector<1x32xf32>
    %53 = vector.broadcast %52 : vector<1x32xf32> to vector<576x32xf32>
    %54 = arith.addf %51, %53 : vector<576x32xf32>
    %cst_28 = arith.constant 0.000000e+00 : f32
    %55 = vector.broadcast %cst_28 : f32 to vector<576x32xf32>
    %56 = arith.maximumf %54, %55 : vector<576x32xf32>
    %57 = arith.truncf %56 : vector<576x32xf32> to vector<576x32xbf16>
    %cst_29 = arith.constant dense<0.000000e+00> : vector<576x32xf32>
    %58 = tpu.matmul %57, %6, %cst_29 {dimension_numbers = #tpu.dot_dimension_numbers<[1], [0], [0], [1], [0, 0, 1, 1], [], []>} : vector<576x32xbf16>, vector<32x32xbf16>, vector<576x32xf32> -> vector<576x32xf32>
    %59 = arith.extf %7 : vector<1x32xbf16> to vector<1x32xf32>
    %60 = vector.broadcast %59 : vector<1x32xf32> to vector<576x32xf32>
    %61 = arith.addf %58, %60 : vector<576x32xf32>
    %cst_30 = arith.constant 0.000000e+00 : f32
    %62 = vector.broadcast %cst_30 : f32 to vector<576x32xf32>
    %63 = arith.maximumf %61, %62 : vector<576x32xf32>
    %64 = vector.shape_cast %63 : vector<576x32xf32> to vector<8x72x32xf32>
    %cst_31 = arith.constant dense<0xFF800000> : vector<72x32xf32>
    %65 = vector.multi_reduction <maximumf>, %64, %cst_31 [0] : vector<8x72x32xf32> to vector<72x32xf32>
    %66 = arith.truncf %65 : vector<72x32xf32> to vector<72x32xbf16>
    %cst_32 = arith.constant dense<0.000000e+00> : vector<72x32xf32>
    %67 = tpu.matmul %66, %8, %cst_32 {dimension_numbers = #tpu.dot_dimension_numbers<[1], [0], [0], [1], [0, 0, 1, 1], [], []>} : vector<72x32xbf16>, vector<32x32xbf16>, vector<72x32xf32> -> vector<72x32xf32>
    %68 = arith.extf %9 : vector<1x32xbf16> to vector<1x32xf32>
    %69 = vector.broadcast %68 : vector<1x32xf32> to vector<72x32xf32>
    %70 = arith.addf %67, %69 : vector<72x32xf32>
    %cst_33 = arith.constant 0.000000e+00 : f32
    %71 = vector.broadcast %cst_33 : f32 to vector<72x32xf32>
    %72 = arith.maximumf %70, %71 : vector<72x32xf32>
    %73 = arith.truncf %72 : vector<72x32xf32> to vector<72x32xbf16>
    %cst_34 = arith.constant dense<0.000000e+00> : vector<72x32xf32>
    %74 = tpu.matmul %73, %10, %cst_34 {dimension_numbers = #tpu.dot_dimension_numbers<[1], [0], [0], [1], [0, 0, 1, 1], [], []>} : vector<72x32xbf16>, vector<32x32xbf16>, vector<72x32xf32> -> vector<72x32xf32>
    %75 = arith.extf %11 : vector<1x32xbf16> to vector<1x32xf32>
    %76 = vector.broadcast %75 : vector<1x32xf32> to vector<72x32xf32>
    %77 = arith.addf %74, %76 : vector<72x32xf32>
    %cst_35 = arith.constant 0.000000e+00 : f32
    %78 = vector.broadcast %cst_35 : f32 to vector<72x32xf32>
    %79 = arith.maximumf %77, %78 : vector<72x32xf32>
    %80 = arith.truncf %79 : vector<72x32xf32> to vector<72x32xbf16>
    %cst_36 = arith.constant dense<0.000000e+00> : vector<72x32xf32>
    %81 = tpu.matmul %80, %12, %cst_36 {dimension_numbers = #tpu.dot_dimension_numbers<[1], [0], [0], [1], [0, 0, 1, 1], [], []>} : vector<72x32xbf16>, vector<32x32xbf16>, vector<72x32xf32> -> vector<72x32xf32>
    %82 = arith.extf %13 : vector<1x32xbf16> to vector<1x32xf32>
    %83 = vector.broadcast %82 : vector<1x32xf32> to vector<72x32xf32>
    %84 = arith.addf %81, %83 : vector<72x32xf32>
    %85 = vector.extract_strided_slice %84 {offsets = [0, 0], sizes = [72, 3], strides = [1, 1]} : vector<72x32xf32> to vector<72x3xf32>
    %86 = vector.shape_cast %85 : vector<72x3xf32> to vector<9x8x3xf32>
    %c0_37 = arith.constant 0 : index
    %c0_38 = arith.constant 0 : index
    %c0_39 = arith.constant 0 : index
    %c0_40 = arith.constant 0 : index
    %87 = vector.load %arg6[%c0_37, %c0_38, %c0_39, %c0_40] : memref<1x9x8x3xf32, #tpu.memory_space<vmem>>, vector<1x9x8x3xf32>
    %88 = vector.shape_cast %87 : vector<1x9x8x3xf32> to vector<9x8x3xf32>
    %89 = vector.shape_cast %86 : vector<9x8x3xf32> to vector<1x9x8x3xf32>
    tpu.vector_store %arg6[%c0_37, %c0_38, %c0_39, %c0_40], %89 {strides = array<i32>} : memref<1x9x8x3xf32, #tpu.memory_space<vmem>>, vector<1x9x8x3xf32>,
    return
  }
  func.func @transform_0(%arg0: i32, %arg1: i32) -> (i32, i32, i32) {
    %c0_i32 = arith.constant 0 : i32
    %c0_i32_0 = arith.constant 0 : i32
    return %arg0, %arg1, %c0_i32 : i32, i32, i32
  }
  func.func @transform_1(%arg0: i32, %arg1: i32) -> (i32, i32, i32) {
    %c0_i32 = arith.constant 0 : i32
    %c0_i32_0 = arith.constant 0 : i32
    %c0_i32_1 = arith.constant 0 : i32
    return %arg0, %c0_i32, %c0_i32_0 : i32, i32, i32
  }
  func.func @transform_2(%arg0: i32, %arg1: i32) -> (i32, i32, i32, i32) {
    %c0_i32 = arith.constant 0 : i32
    %c0_i32_0 = arith.constant 0 : i32
    %c0_i32_1 = arith.constant 0 : i32
    %c0_i32_2 = arith.constant 0 : i32
    return %arg0, %c0_i32, %c0_i32_0, %c0_i32_1 : i32, i32, i32, i32
  }
  func.func @transform_3(%arg0: i32, %arg1: i32) -> (i32, i32) {
    %c0_i32 = arith.constant 0 : i32
    %c0_i32_0 = arith.constant 0 : i32
    %c0_i32_1 = arith.constant 0 : i32
    return %c0_i32, %c0_i32_0 : i32, i32
  }
  func.func @transform_4(%arg0: i32, %arg1: i32) -> (i32, i32, i32, i32) {
    %c0_i32 = arith.constant 0 : i32
    %c0_i32_0 = arith.constant 0 : i32
    %c0_i32_1 = arith.constant 0 : i32
    return %arg0, %c0_i32, %arg1, %c0_i32_0 : i32, i32, i32, i32
  }
}

</mosaic_0001>

<llo_original>
// kernel: tpu_custom_call.1
$region0: #{tpu_custom_call.1}
  #allocation0 [shape = 'u32[]', space=smem, size = 0x4, offset = 0x4, fixed_abs, tag = 'smem constant byte address 0x4 - core index']
  #allocation1 [shape = 'u32[144,128]{1,0:T(1,128)}', space=vmem, size = 0x12000, scoped, tag = 'internal scratch']
  %s0 = inlined_call_operand.vmem [shape: bf16[2,8,3], index: 0, kind: input, shape index: {}]
  %s1 = inlined_call_operand.vmem [shape: bf16[2,9,32], index: 1, kind: input, shape index: {}]
  %s2 = inlined_call_operand.vmem [shape: f32[2,8,9,3], index: 2, kind: input, shape index: {}]
  %s3 = inlined_call_operand.vmem [shape: bf16[320,32], index: 3, kind: input, shape index: {}]
  %s4 = inlined_call_operand.vmem [shape: f32[2,9,8,3], index: 4, kind: output, shape index: {}]
  %s5 = sld [smem:[#allocation0]]
  $region49: #{tpu_custom_call.1} parent=0
    _
  %s7 = ssub.s32 1, %s5
  %s8 = scalar_select 0, %s7, %s5
  loop: start=0, step=1, limit=4
  $region2: #{tpu_custom_call.1} parent=0 // loop_pre_header
    _
  $region3: #{tpu_custom_call.1} parent=0 // loop_header
    %s10 = sphi 0, %s14
    %p11 = scmp.ge.s32.totalorder %s10, 4
    %s17 = sphi 0, %s29
    %s18 = sphi 0, %s25
    %s19 = sphi 0, %s17
    %s20 = sphi 0, %s18
    %s21 = sphi 0, %s19
    %s22 = sphi 0, %s20
    %s34 = sphi 0, %s36
    %s37 = sphi 0, %s34
    %s38 = sphi 0, %s37
    %s54 = sphi 0, %s38
    %s60 = sphi 0, %s62
    %s63 = sphi 0, %s60
    %s64 = sphi 0, %s63
    %s80 = sphi 0, %s64
    %s86 = sphi 0, %s88
    %s89 = sphi 0, %s86
    %s90 = sphi 0, %s89
    %s106 = sphi 0, %s90
    %s110 = sphi 0, %s110
    %s112 = sphi 0, %s110
    %s113 = sphi 0, %s112
    %s127 = sphi 0, %s113
    %s135 = sphi 0, %s137
    %s138 = sphi 0, %s135
    %s139 = sphi 0, %s138
    %s155 = sphi 0, %s139
  $region4: #{tpu_custom_call.1} parent=0 // loop_header_branch
    %13 = sbr.rel (%p11) target = $region8
  $region5: #{tpu_custom_call.1} parent=0 // loop_body
    %s15 = ssub.s32 %s10, 1
    %s16 = ssub.s32 %s10, 2
    %s23 = sadd.s32 1, %s18
    %p24 = scmp.ge.s32.totalorder %s23, 1
    %s25 = scalar_select %p24, 0, %s23
    %s26 = sadd.s32 1, %s17
    %s27 = scalar_select %p24, %s26, %s17
    %p28 = scmp.ge.s32.totalorder %s27, 2
    %s29 = scalar_select %p28, 0, %s27
    %s30 = ssub.s32 %s17, %s29
    %s31 = ssub.s32 %s18, %s25
    %s32 = sor.u32 %s30, %s31
    %p33 = scmp.eq.s32.totalorder %s32, 0
    %s35 = sadd.s32 %s34, 1
    %s36 = scalar_select %p33, %s34, %s35
    %p39 = pneg %p33
    %p40 = scmp.eq.s32.totalorder %s10, 1
    %p41 = por %p39, %p40
    %p42 = scmp.ne.s32.totalorder %s34, %s37
    %p43 = scmp.eq.s32.totalorder %s10, 0
    %p44 = por %p42, %p43
    %p45 = scmp.ne.s32.totalorder %s34, %s37
    %p46 = scmp.eq.s32.totalorder %s15, 1
    %p47 = por %p45, %p46
    %p48 = scmp.ne.s32.totalorder %s37, %s38
    %p49 = scmp.eq.s32.totalorder %s15, 0
    %p50 = por %p48, %p49
    %p51 = scmp.ne.s32.totalorder %s37, %s38
    %p52 = scmp.eq.s32.totalorder %s16, 1
    %p53 = por %p51, %p52
    %p55 = scmp.ne.s32.totalorder %s38, %s54
    %p56 = scmp.eq.s32.totalorder %s16, 0
    %p57 = por %p55, %p56
    %s58 = ssub.s32 %s17, %s29
    %p59 = scmp.eq.s32.totalorder %s58, 0
    %s61 = sadd.s32 %s60, 1
    %s62 = scalar_select %p59, %s60, %s61
    %p65 = pneg %p59
    %p66 = scmp.eq.s32.totalorder %s10, 1
    %p67 = por %p65, %p66
    %p68 = scmp.ne.s32.totalorder %s60, %s63
    %p69 = scmp.eq.s32.totalorder %s10, 0
    %p70 = por %p68, %p69
    %p71 = scmp.ne.s32.totalorder %s60, %s63
    %p72 = scmp.eq.s32.totalorder %s15, 1
    %p73 = por %p71, %p72
    %p74 = scmp.ne.s32.totalorder %s63, %s64
    %p75 = scmp.eq.s32.totalorder %s15, 0
    %p76 = por %p74, %p75
    %p77 = scmp.ne.s32.totalorder %s63, %s64
    %p78 = scmp.eq.s32.totalorder %s16, 1
    %p79 = por %p77, %p78
    %p81 = scmp.ne.s32.totalorder %s64, %s80
    %p82 = scmp.eq.s32.totalorder %s16, 0
    %p83 = por %p81, %p82
    %s84 = ssub.s32 %s17, %s29
    %p85 = scmp.eq.s32.totalorder %s84, 0
    %s87 = sadd.s32 %s86, 1
    %s88 = scalar_select %p85, %s86, %s87
    %p91 = pneg %p85
    %p92 = scmp.eq.s32.totalorder %s10, 1
    %p93 = por %p91, %p92
    %p94 = scmp.ne.s32.totalorder %s86, %s89
    %p95 = scmp.eq.s32.totalorder %s10, 0
    %p96 = por %p94, %p95
    %p97 = scmp.ne.s32.totalorder %s86, %s89
    %p98 = scmp.eq.s32.totalorder %s15, 1
    %p99 = por %p97, %p98
    %p100 = scmp.ne.s32.totalorder %s89, %s90
    %p101 = scmp.eq.s32.totalorder %s15, 0
    %p102 = por %p100, %p101
    %p103 = scmp.ne.s32.totalorder %s89, %s90
    %p104 = scmp.eq.s32.totalorder %s16, 1
    %p105 = por %p103, %p104
    %p107 = scmp.ne.s32.totalorder %s90, %s106
    %p108 = scmp.eq.s32.totalorder %s16, 0
    %p109 = por %p107, %p108
    %s111 = sadd.s32 %s110, 1
    %p114 = scmp.eq.s32.totalorder %s10, 1
    %p115 = scmp.ne.s32.totalorder %s110, %s112
    %p116 = scmp.eq.s32.totalorder %s10, 0
    %p117 = por %p115, %p116
    %p118 = scmp.ne.s32.totalorder %s110, %s112
    %p119 = scmp.eq.s32.totalorder %s15, 1
    %p120 = por %p118, %p119
    %p121 = scmp.ne.s32.totalorder %s112, %s113
    %p122 = scmp.eq.s32.totalorder %s15, 0
    %p123 = por %p121, %p122
    %p124 = scmp.ne.s32.totalorder %s112, %s113
    %p125 = scmp.eq.s32.totalorder %s16, 1
    %p126 = por %p124, %p125
    %p128 = scmp.ne.s32.totalorder %s113, %s127
    %p129 = scmp.eq.s32.totalorder %s16, 0
    %p130 = por %p128, %p129
    %s131 = ssub.s32 %s17, %s29
    %s132 = ssub.s32 %s18, %s25
    %s133 = sor.u32 %s131, %s132
    %p134 = scmp.eq.s32.totalorder %s133, 0
    %s136 = sadd.s32 %s135, 1
    %s137 = scalar_select %p134, %s135, %s136
    %p140 = pneg %p134
    %p141 = scmp.eq.s32.totalorder %s10, 1
    %p142 = por %p140, %p141
    %p143 = scmp.ne.s32.totalorder %s135, %s138
    %p144 = scmp.eq.s32.totalorder %s10, 0
    %p145 = por %p143, %p144
    %p146 = scmp.ne.s32.totalorder %s135, %s138
    %p147 = scmp.eq.s32.totalorder %s15, 1
    %p148 = por %p146, %p147
    %p149 = scmp.ne.s32.totalorder %s138, %s139
    %p150 = scmp.eq.s32.totalorder %s15, 0
    %p151 = por %p149, %p150
    %p152 = scmp.ne.s32.totalorder %s138, %s139
    %p153 = scmp.eq.s32.totalorder %s16, 1
    %p154 = por %p152, %p153
    %p156 = scmp.ne.s32.totalorder %s139, %s155
    %p157 = scmp.eq.s32.totalorder %s16, 0
    %p158 = por %p156, %p157
    %p159 = scmp.le.s32.totalorder 1, %s10
    %p160 = scmp.lt.s32.totalorder %s10, 3
    %p161 = pnand %p159, %p160
    %p162 = pneg %p161
    // Predicated region
    $region9: #{tpu_custom_call.1} parent=5 // pred_check
      _
    $region10: #{tpu_custom_call.1} parent=5 // pred_check_branch
      %164 = sbr.rel (%p161) target = $region12
    $region11: #{tpu_custom_call.1} parent=5 // pred_region
      %s165 = ssub.s32 %s10, 1
      // Predicated region
      $region13: #{tpu_custom_call.1} parent=11 // pred_check
        %p166 = pneg %p123
      $region14: #{tpu_custom_call.1} parent=11 // pred_check_branch
        %168 = sbr.rel (%p166) target = $region16
      $region15: #{tpu_custom_call.1} parent=11 // pred_region
        _
      $region16: #{tpu_custom_call.1} parent=11 // pred_fallthru
        _
    $region12: #{tpu_custom_call.1} parent=5 // pred_fallthru
      _
    %p169 = scmp.lt.s32.totalorder %s10, 2
    // Predicated region
    $region17: #{tpu_custom_call.1} parent=5 // pred_check
      %p170 = pneg %p169
    $region18: #{tpu_custom_call.1} parent=5 // pred_check_branch
      %172 = sbr.rel (%p170) target = $region20
    $region19: #{tpu_custom_call.1} parent=5 // pred_region
      // Predicated region
      $region21: #{tpu_custom_call.1} parent=19 // pred_check
        %p173 = pneg %p44
      $region22: #{tpu_custom_call.1} parent=19 // pred_check_branch
        %175 = sbr.rel (%p173) target = $region24
      $region23: #{tpu_custom_call.1} parent=19 // pred_region
        %p176 = scmp.lt.s32.totalorder %s17, 1
        %s177 = scalar_select %p176, %s17, 1
        %p178 = scmp.lt.s32.totalorder %s18, 0
        %s179 = scalar_select %p178, %s18, 0
        %s180 = sadd.s32 %s179, %s177
        %s181 = smul.addr %s180, 4
        %s182 = scalar_lea.vmem %s0, %s181
      $region24: #{tpu_custom_call.1} parent=19 // pred_fallthru
        _
      // Predicated region
      $region25: #{tpu_custom_call.1} parent=19 // pred_check
        %p183 = pneg %p70
      $region26: #{tpu_custom_call.1} parent=19 // pred_check_branch
        %185 = sbr.rel (%p183) target = $region28
      $region27: #{tpu_custom_call.1} parent=19 // pred_region
        %p186 = scmp.lt.s32.totalorder %s17, 1
        %s187 = scalar_select %p186, %s17, 1
        %s188 = smul.addr %s187, 2
        %s189 = smul.addr %s188, 4
        %s190 = scalar_lea.vmem %s1, %s189
      $region28: #{tpu_custom_call.1} parent=19 // pred_fallthru
        _
      // Predicated region
      $region29: #{tpu_custom_call.1} parent=19 // pred_check
        %p191 = pneg %p96
      $region30: #{tpu_custom_call.1} parent=19 // pred_check_branch
        %193 = sbr.rel (%p191) target = $region32
      $region31: #{tpu_custom_call.1} parent=19 // pred_region
        %p194 = scmp.lt.s32.totalorder %s17, 1
        %s195 = scalar_select %p194, %s17, 1
        %s196 = smul.addr %s195, 16
        %s197 = smul.addr %s196, 8
        %s198 = scalar_lea.vmem %s2, %s197
      $region32: #{tpu_custom_call.1} parent=19 // pred_fallthru
        _
    $region20: #{tpu_custom_call.1} parent=5 // pred_fallthru
      _
    %p199 = scmp.le.s32.totalorder 1, %s10
    %p200 = scmp.lt.s32.totalorder %s10, 3
    %p201 = pnand %p199, %p200
    %p202 = pneg %p201
    // Predicated region
    $region33: #{tpu_custom_call.1} parent=5 // pred_check
      _
    $region34: #{tpu_custom_call.1} parent=5 // pred_check_branch
      %204 = sbr.rel (%p201) target = $region36
    $region35: #{tpu_custom_call.1} parent=5 // pred_region
      %s205 = ssub.s32 %s10, 1
      %p206 = scmp.lt.s32.totalorder %s19, 1
      %s207 = scalar_select %p206, %s19, 1
      %p208 = scmp.lt.s32.totalorder %s20, 0
      %s209 = scalar_select %p208, %s20, 0
      %s210 = sadd.s32 %s209, %s207
      %s211 = smul.addr %s210, 4
      %s212 = scalar_lea.vmem %s0, %s211
      %p213 = pneg %p50
      %p214 = pneg %p47
      %p215 = scmp.lt.s32.totalorder %s19, 1
      %s216 = scalar_select %p215, %s19, 1
      %s217 = smul.addr %s216, 2
      %s218 = smul.addr %s217, 4
      %s219 = scalar_lea.vmem %s1, %s218
      %p220 = pneg %p76
      %p221 = pneg %p73
      %p222 = scmp.lt.s32.totalorder %s19, 1
      %s223 = scalar_select %p222, %s19, 1
      %s224 = smul.addr %s223, 16
      %s225 = smul.addr %s224, 8
      %s226 = scalar_lea.vmem %s2, %s225
      %p227 = pneg %p102
      %p228 = pneg %p99
      %p229 = pneg %p123
      %p230 = pneg %p120
      %p231 = pneg %p151
      %p232 = pneg %p148
      %p233 = scmp.lt.s32.totalorder %s19, 1
      %s234 = scalar_select %p233, %s19, 1
      %p235 = scmp.lt.s32.totalorder %s20, 0
      %s236 = scalar_select %p235, %s20, 0
      %s237 = smul.addr %s234, 9
      %s238 = sadd.s32 %s236, %s237
      %s239 = smul.addr %s238, 8
      %s240 = scalar_lea.vmem %s4, %s239
      %p241 = scmp.lt.s32.totalorder %s19, 1
      %s242 = scalar_select %p241, %s19, 1
      %p243 = scmp.lt.s32.totalorder %s20, 0
      %s244 = scalar_select %p243, %s20, 0
      %s245 = sadd.s32 %s244, %s242
      %s246 = smul.addr %s245, 4
      %s247 = scalar_lea.vmem %s0, %s246
      %p248 = scmp.lt.s32.totalorder %s19, 1
      %s249 = scalar_select %p248, %s19, 1
      %s250 = smul.addr %s249, 2
      %s251 = smul.addr %s250, 4
      %s252 = scalar_lea.vmem %s1, %s251
      %p253 = scmp.lt.s32.totalorder %s19, 1
      %s254 = scalar_select %p253, %s19, 1
      %s255 = smul.addr %s254, 16
      %s256 = smul.addr %s255, 8
      %s257 = scalar_lea.vmem %s2, %s256
      %p258 = scmp.lt.s32.totalorder %s19, 1
      %s259 = scalar_select %p258, %s19, 1
      %p260 = scmp.lt.s32.totalorder %s20, 0
      %s261 = scalar_select %p260, %s20, 0
      %s262 = smul.addr %s259, 9
      %s263 = sadd.s32 %s261, %s262
      %s264 = smul.addr %s263, 8
      %s265 = scalar_lea.vmem %s4, %s264
      %v267 = vld [vmem:[%s3] sm:$0x3]
      %v268 = vld [vmem:[%s3 + $0x8] sm:$0xf]
      %v269 = vld [vmem:[%s3 + $0xc] sm:$0xf]
      %v270 = vld [vmem:[%s3 + $0x10] sm:$0xf]
      %v271 = vld [vmem:[%s3 + $0x14] sm:$0xf]
      %v272 = vld [vmem:[%s3 + $0x18] sm:$0x3]
      %v273 = vld [vmem:[%s3 + $0x20] sm:$0x1]
      %v274 = vld [vmem:[%s3 + $0x28] sm:$0xf]
      %v275 = vld [vmem:[%s3 + $0x2c] sm:$0xf]
      %v276 = vld [vmem:[%s3 + $0x30] sm:$0xf]
      %v277 = vld [vmem:[%s3 + $0x34] sm:$0xf]
      %v278 = vld [vmem:[%s3 + $0x38] sm:$0x1]
      %v279 = vld [vmem:[%s3 + $0x40] sm:$0xf]
      %v280 = vld [vmem:[%s3 + $0x44] sm:$0xf]
      %v281 = vld [vmem:[%s3 + $0x48] sm:$0xf]
      %v282 = vld [vmem:[%s3 + $0x4c] sm:$0xf]
      %v283 = vld [vmem:[%s3 + $0x50] sm:$0x1]
      %v284 = vld [vmem:[%s3 + $0x58] sm:$0xf]
      %v285 = vld [vmem:[%s3 + $0x5c] sm:$0xf]
      %v286 = vld [vmem:[%s3 + $0x60] sm:$0xf]
      %v287 = vld [vmem:[%s3 + $0x64] sm:$0xf]
      %v288 = vld [vmem:[%s3 + $0x68] sm:$0x1]
      %v289 = vld [vmem:[%s3 + $0x70] sm:$0xf]
      %v290 = vld [vmem:[%s3 + $0x74] sm:$0xf]
      %v291 = vld [vmem:[%s3 + $0x78] sm:$0xf]
      %v292 = vld [vmem:[%s3 + $0x7c] sm:$0xf]
      %v293 = vld [vmem:[%s3 + $0x80] sm:$0x1]
      %v294 = vld [vmem:[%s3 + $0x88] sm:$0xf]
      %v295 = vld [vmem:[%s3 + $0x8c] sm:$0xf]
      %v296 = vld [vmem:[%s3 + $0x90] sm:$0xf]
      %v297 = vld [vmem:[%s3 + $0x94] sm:$0xf]
      %v298 = vld [vmem:[%s3 + $0x98] sm:$0x1]
      %v299 = vld [vmem:[%s247] sm:$0xf]
      %vm300 = vcmask 23552
      %v302 = vsel %vm300, %v299, 0
      %vm304 = vcmask 1040384
      %vm305 = vcmask 1041408
      %v306 = vsel %vm304, 4294967295, 65535
      %v307 = vsel %vm305, %v306, 0
      %v309 = vand.u32 %v267, %v307
      %311 = vmatprep.subr.bf16.mxu0 0
      %312 = vmatpush1.bf16.msra.mxu0 %v309
      %313 = vmatprep.subr.bf16.mxu0 0
      %314 = vmatpush1.bf16.msra.mxu0 0
      %315 = vmatprep.subr.bf16.mxu0 0
      %316 = vmatpush1.bf16.msra.mxu0 0
      %317 = vmatprep.subr.bf16.mxu0 0
      %318 = vmatpush1.bf16.msra.mxu0 0
      %319 = vmatprep.subr.bf16.mxu0 0
      %320 = vmatpush1.bf16.msra.mxu0 0
      %321 = vmatprep.subr.bf16.mxu0 0
      %322 = vmatpush1.bf16.msra.mxu0 0
      %323 = vmatprep.subr.bf16.mxu0 0
      %324 = vmatpush1.bf16.msra.mxu0 0
      %325 = vmatprep.subr.bf16.mxu0 0
      %326 = vmatpush1.bf16.msra.mxu0 0
      %327 = vmatprep.subr.bf16.mxu0 0
      %328 = vmatpush1.bf16.msra.mxu0 0
      %329 = vmatprep.subr.bf16.mxu0 0
      %330 = vmatpush1.bf16.msra.mxu0 0
      %331 = vmatprep.subr.bf16.mxu0 0
      %332 = vmatpush1.bf16.msra.mxu0 0
      %333 = vmatprep.subr.bf16.mxu0 0
      %334 = vmatpush1.bf16.msra.mxu0 0
      %335 = vmatprep.subr.bf16.mxu0 0
      %336 = vmatpush1.bf16.msra.mxu0 0
      %337 = vmatprep.subr.bf16.mxu0 0
      %338 = vmatpush1.bf16.msra.mxu0 0
      %339 = vmatprep.subr.bf16.mxu0 0
      %340 = vmatpush1.bf16.msra.mxu0 0
      %341 = vmatprep.subr.bf16.mxu0 0
      %342 = vmatpush1.bf16.msra.mxu0 0
      %343 = vmatprep.mubr.bf16.mxu0 0
      %344 = vmatmul.mubr.bf16.gmra.mrb[0].mxu0 %v302
      %v345 = vpop.f32.mrb[0].mxu0
      %v346 = vadd.f32 0.0, %v345
      %v347 = vpop.f32.mrb[0].mxu0
      %v348 = vpop.f32.mrb[0].mxu0
      %v349 = vpop.f32.mrb[0].mxu0
      %350 = vdwg.mxu0
      %v351 = vld [vmem:[%s252] sm:$0xf]
      %v352 = vld [vmem:[%s252 + $0x4] sm:$0x1]
      %v355 = vunpack.c.l.b16 %v351
      %v356 = vunpack.c.l.b16 %v352
      %v357 = vpack.c.b16 %v356, %v355
      %v362 = vunpack.c.l.b16 %v268
      %v363 = vunpack.c.l.b16 %v269
      %v364 = vunpack.c.l.b16 %v270
      %v365 = vunpack.c.l.b16 %v271
      %v366 = vpack.c.b16 %v363, %v362
      %v367 = vpack.c.b16 %v365, %v364
      %vm370 = vcmask 261120
      %v372 = vsel %vm370, %v357, 0
      %374 = vmatprep.subr.bf16.mxu0 0
      %375 = vmatpush1.bf16.msra.mxu0 %v366
      %376 = vmatprep.subr.bf16.mxu0 0
      %377 = vmatpush1.bf16.msra.mxu0 %v367
      %378 = vmatprep.subr.bf16.mxu0 0
      %379 = vmatpush1.bf16.msra.mxu0 0
      %380 = vmatprep.subr.bf16.mxu0 0
      %381 = vmatpush1.bf16.msra.mxu0 0
      %382 = vmatprep.subr.bf16.mxu0 0
      %383 = vmatpush1.bf16.msra.mxu0 0
      %384 = vmatprep.subr.bf16.mxu0 0
      %385 = vmatpush1.bf16.msra.mxu0 0
      %386 = vmatprep.subr.bf16.mxu0 0
      %387 = vmatpush1.bf16.msra.mxu0 0
      %388 = vmatprep.subr.bf16.mxu0 0
      %389 = vmatpush1.bf16.msra.mxu0 0
      %390 = vmatprep.subr.bf16.mxu0 0
      %391 = vmatpush1.bf16.msra.mxu0 0
      %392 = vmatprep.subr.bf16.mxu0 0
      %393 = vmatpush1.bf16.msra.mxu0 0
      %394 = vmatprep.subr.bf16.mxu0 0
      %395 = vmatpush1.bf16.msra.mxu0 0
      %396 = vmatprep.subr.bf16.mxu0 0
      %397 = vmatpush1.bf16.msra.mxu0 0
      %398 = vmatprep.subr.bf16.mxu0 0
      %399 = vmatpush1.bf16.msra.mxu0 0
      %400 = vmatprep.subr.bf16.mxu0 0
      %401 = vmatpush1.bf16.msra.mxu0 0
      %402 = vmatprep.subr.bf16.mxu0 0
      %403 = vmatpush1.bf16.msra.mxu0 0
      %404 = vmatprep.subr.bf16.mxu0 0
      %405 = vmatpush1.bf16.msra.mxu0 0
      %406 = vmatprep.mubr.bf16.mxu0 0
      %407 = vmatmul.mubr.bf16.gmra.mrb[0].mxu0 %v372
      %v408 = vpop.f32.mrb[0].mxu0
      %v409 = vadd.f32 0.0, %v408
      %v410 = vpop.f32.mrb[0].mxu0
      %v411 = vpop.f32.mrb[0].mxu0
      %v412 = vadd.f32 0.0, %v411
      %v413 = vpop.f32.mrb[0].mxu0
      %414 = vdwg.mxu0
      %v415 = vld [vmem:[%s257] sm:$0xff]
      %v416 = vld [vmem:[%s257 + $0x8] sm:$0x1]
      %v417 = vld [vmem:[%s257 + $0x10] sm:$0xff]
      %v418 = vld [vmem:[%s257 + $0x18] sm:$0x1]
      %v419 = vld [vmem:[%s257 + $0x20] sm:$0xff]
      %v420 = vld [vmem:[%s257 + $0x28] sm:$0x1]
      %v421 = vld [vmem:[%s257 + $0x30] sm:$0xff]
      %v422 = vld [vmem:[%s257 + $0x38] sm:$0x1]
      %v423 = vld [vmem:[%s257 + $0x40] sm:$0xff]
      %v424 = vld [vmem:[%s257 + $0x48] sm:$0x1]
      %v425 = vld [vmem:[%s257 + $0x50] sm:$0xff]
      %v426 = vld [vmem:[%s257 + $0x58] sm:$0x1]
      %v427 = vld [vmem:[%s257 + $0x60] sm:$0xff]
      %v428 = vld [vmem:[%s257 + $0x68] sm:$0x1]
      %v429 = vld [vmem:[%s257 + $0x70] sm:$0xff]
      %v430 = vld [vmem:[%s257 + $0x78] sm:$0x1]
      %v447 = vcombine.high %v415, %v415
      %v449 = vunpack.c.l.s4 1966171168
      %v450 = vunpack.c.0.s8 %v449
      %v451 = vlaneseq
      %v452 = vshrl.u32 %v451, 7
      %v453 = vsub.s32 %v450, %v452
      %v454 = vrot.slane %v415, %v453
      %v456 = vunpack.c.l.s4 1966171168
      %v457 = vunpack.c.0.s8 %v456
      %v458 = vlaneseq
      %v459 = vshrl.u32 %v458, 7
      %v460 = vsub.s32 %v457, %v459
      %v461 = vrot.slane %v447, %v460
      %v462 = vcombine.high %v454, %v454
      %v463 = vcombine.high %v461, %v461
      %v465 = vunpack.c.l.s4 1966171168
      %v466 = vunpack.c.0.s8 %v465
      %v467 = vlaneseq
      %v468 = vshrl.u32 %v467, 7
      %v469 = vsub.s32 %v466, %v468
      %v470 = vrot.slane %v454, %v469
      %v472 = vunpack.c.l.s4 1966171168
      %v473 = vunpack.c.0.s8 %v472
      %v474 = vlaneseq
      %v475 = vshrl.u32 %v474, 7
      %v476 = vsub.s32 %v473, %v475
      %v477 = vrot.slane %v461, %v476
      %v479 = vunpack.c.l.s4 1966171168
      %v480 = vunpack.c.0.s8 %v479
      %v481 = vlaneseq
      %v482 = vshrl.u32 %v481, 7
      %v483 = vsub.s32 %v480, %v482
      %v484 = vrot.slane %v462, %v483
      %v486 = vunpack.c.l.s4 1966171168
      %v487 = vunpack.c.0.s8 %v486
      %v488 = vlaneseq
      %v489 = vshrl.u32 %v488, 7
      %v490 = vsub.s32 %v487, %v489
      %v491 = vrot.slane %v463, %v490
      %v492 = vcombine.high %v470, %v470
      %v493 = vcombine.high %v477, %v477
      %v494 = vcombine.high %v484, %v484
      %v495 = vcombine.high %v491, %v491
      %v497 = vunpack.c.l.s4 1966171168
      %v498 = vunpack.c.0.s8 %v497
      %v499 = vlaneseq
      %v500 = vshrl.u32 %v499, 7
      %v501 = vsub.s32 %v498, %v500
      %v502 = vrot.slane %v416, %v501
      %v504 = vunpack.c.l.s4 1966171168
      %v505 = vunpack.c.0.s8 %v504
      %v506 = vlaneseq
      %v507 = vshrl.u32 %v506, 7
      %v508 = vsub.s32 %v505, %v507
      %v509 = vrot.slane %v502, %v508
      %v510 = vcombine.high %v417, %v417
      %v512 = vunpack.c.l.s4 1966171168
      %v513 = vunpack.c.0.s8 %v512
      %v514 = vlaneseq
      %v515 = vshrl.u32 %v514, 7
      %v516 = vsub.s32 %v513, %v515
      %v517 = vrot.slane %v417, %v516
      %v519 = vunpack.c.l.s4 1966171168
      %v520 = vunpack.c.0.s8 %v519
      %v521 = vlaneseq
      %v522 = vshrl.u32 %v521, 7
      %v523 = vsub.s32 %v520, %v522
      %v524 = vrot.slane %v510, %v523
      %v525 = vcombine.high %v517, %v517
      %v526 = vcombine.high %v524, %v524
      %v528 = vunpack.c.l.s4 1966171168
      %v529 = vunpack.c.0.s8 %v528
      %v530 = vlaneseq
      %v531 = vshrl.u32 %v530, 7
      %v532 = vsub.s32 %v529, %v531
      %v533 = vrot.slane %v517, %v532
      %v535 = vunpack.c.l.s4 1966171168
      %v536 = vunpack.c.0.s8 %v535
      %v537 = vlaneseq
      %v538 = vshrl.u32 %v537, 7
      %v539 = vsub.s32 %v536, %v538
      %v540 = vrot.slane %v524, %v539
      %v542 = vunpack.c.l.s4 1966171168
      %v543 = vunpack.c.0.s8 %v542
      %v544 = vlaneseq
      %v545 = vshrl.u32 %v544, 7
      %v546 = vsub.s32 %v543, %v545
      %v547 = vrot.slane %v525, %v546
      %v549 = vunpack.c.l.s4 1966171168
      %v550 = vunpack.c.0.s8 %v549
      %v551 = vlaneseq
      %v552 = vshrl.u32 %v551, 7
      %v553 = vsub.s32 %v550, %v552
      %v554 = vrot.slane %v526, %v553
      %v555 = vcombine.high %v533, %v533
      %v556 = vcombine.high %v540, %v540
      %v557 = vcombine.high %v547, %v547
      %v558 = vcombine.high %v554, %v554
      %v560 = vunpack.c.l.s4 1966171168
      %v561 = vunpack.c.0.s8 %v560
      %v562 = vlaneseq
      %v563 = vshrl.u32 %v562, 7
      %v564 = vsub.s32 %v561, %v563
      %v565 = vrot.slane %v418, %v564
      %v567 = vunpack.c.l.s4 1966171168
      %v568 = vunpack.c.0.s8 %v567
      %v569 = vlaneseq
      %v570 = vshrl.u32 %v569, 7
      %v571 = vsub.s32 %v568, %v570
      %v572 = vrot.slane %v565, %v571
      %v573 = vcombine.high %v419, %v419
      %v575 = vunpack.c.l.s4 1966171168
      %v576 = vunpack.c.0.s8 %v575
      %v577 = vlaneseq
      %v578 = vshrl.u32 %v577, 7
      %v579 = vsub.s32 %v576, %v578
      %v580 = vrot.slane %v419, %v579
      %v582 = vunpack.c.l.s4 1966171168
      %v583 = vunpack.c.0.s8 %v582
      %v584 = vlaneseq
      %v585 = vshrl.u32 %v584, 7
      %v586 = vsub.s32 %v583, %v585
      %v587 = vrot.slane %v573, %v586
      %v588 = vcombine.high %v580, %v580
      %v589 = vcombine.high %v587, %v587
      %v591 = vunpack.c.l.s4 1966171168
      %v592 = vunpack.c.0.s8 %v591
      %v593 = vlaneseq
      %v594 = vshrl.u32 %v593, 7
      %v595 = vsub.s32 %v592, %v594
      %v596 = vrot.slane %v580, %v595
      %v598 = vunpack.c.l.s4 1966171168
      %v599 = vunpack.c.0.s8 %v598
      %v600 = vlaneseq
      %v601 = vshrl.u32 %v600, 7
      %v602 = vsub.s32 %v599, %v601
      %v603 = vrot.slane %v587, %v602
      %v605 = vunpack.c.l.s4 1966171168
      %v606 = vunpack.c.0.s8 %v605
      %v607 = vlaneseq
      %v608 = vshrl.u32 %v607, 7
      %v609 = vsub.s32 %v606, %v608
      %v610 = vrot.slane %v588, %v609
      %v612 = vunpack.c.l.s4 1966171168
      %v613 = vunpack.c.0.s8 %v612
      %v614 = vlaneseq
      %v615 = vshrl.u32 %v614, 7
      %v616 = vsub.s32 %v613, %v615
      %v617 = vrot.slane %v589, %v616
      %v618 = vcombine.high %v596, %v596
      %v619 = vcombine.high %v603, %v603
      %v620 = vcombine.high %v610, %v610
      %v621 = vcombine.high %v617, %v617
      %v623 = vunpack.c.l.s4 1966171168
      %v624 = vunpack.c.0.s8 %v623
      %v625 = vlaneseq
      %v626 = vshrl.u32 %v625, 7
      %v627 = vsub.s32 %v624, %v626
      %v628 = vrot.slane %v420, %v627
      %v630 = vunpack.c.l.s4 1966171168
      %v631 = vunpack.c.0.s8 %v630
      %v632 = vlaneseq
      %v633 = vshrl.u32 %v632, 7
      %v634 = vsub.s32 %v631, %v633
      %v635 = vrot.slane %v628, %v634
      %v636 = vcombine.high %v421, %v421
      %v638 = vunpack.c.l.s4 1966171168
      %v639 = vunpack.c.0.s8 %v638
      %v640 = vlaneseq
      %v641 = vshrl.u32 %v640, 7
      %v642 = vsub.s32 %v639, %v641
      %v643 = vrot.slane %v421, %v642
      %v645 = vunpack.c.l.s4 1966171168
      %v646 = vunpack.c.0.s8 %v645
      %v647 = vlaneseq
      %v648 = vshrl.u32 %v647, 7
      %v649 = vsub.s32 %v646, %v648
      %v650 = vrot.slane %v636, %v649
      %v651 = vcombine.high %v643, %v643
      %v652 = vcombine.high %v650, %v650
      %v654 = vunpack.c.l.s4 1966171168
      %v655 = vunpack.c.0.s8 %v654
      %v656 = vlaneseq
      %v657 = vshrl.u32 %v656, 7
      %v658 = vsub.s32 %v655, %v657
      %v659 = vrot.slane %v643, %v658
      %v661 = vunpack.c.l.s4 1966171168
      %v662 = vunpack.c.0.s8 %v661
      %v663 = vlaneseq
      %v664 = vshrl.u32 %v663, 7
      %v665 = vsub.s32 %v662, %v664
      %v666 = vrot.slane %v650, %v665
      %v668 = vunpack.c.l.s4 1966171168
      %v669 = vunpack.c.0.s8 %v668
      %v670 = vlaneseq
      %v671 = vshrl.u32 %v670, 7
      %v672 = vsub.s32 %v669, %v671
      %v673 = vrot.slane %v651, %v672
      %v675 = vunpack.c.l.s4 1966171168
      %v676 = vunpack.c.0.s8 %v675
      %v677 = vlaneseq
      %v678 = vshrl.u32 %v677, 7
      %v679 = vsub.s32 %v676, %v678
      %v680 = vrot.slane %v652, %v679
      %v681 = vcombine.high %v659, %v659
      %v682 = vcombine.high %v666, %v666
      %v683 = vcombine.high %v673, %v673
      %v684 = vcombine.high %v680, %v680
      %v686 = vunpack.c.l.s4 1966171168
      %v687 = vunpack.c.0.s8 %v686
      %v688 = vlaneseq
      %v689 = vshrl.u32 %v688, 7
      %v690 = vsub.s32 %v687, %v689
      %v691 = vrot.slane %v422, %v690
      %v693 = vunpack.c.l.s4 1966171168
      %v694 = vunpack.c.0.s8 %v693
      %v695 = vlaneseq
      %v696 = vshrl.u32 %v695, 7
      %v697 = vsub.s32 %v694, %v696
      %v698 = vrot.slane %v691, %v697
      %v699 = vcombine.high %v423, %v423
      %v701 = vunpack.c.l.s4 1966171168
      %v702 = vunpack.c.0.s8 %v701
      %v703 = vlaneseq
      %v704 = vshrl.u32 %v703, 7
      %v705 = vsub.s32 %v702, %v704
      %v706 = vrot.slane %v423, %v705
      %v708 = vunpack.c.l.s4 1966171168
      %v709 = vunpack.c.0.s8 %v708
      %v710 = vlaneseq
      %v711 = vshrl.u32 %v710, 7
      %v712 = vsub.s32 %v709, %v711
      %v713 = vrot.slane %v699, %v712
      %v714 = vcombine.high %v706, %v706
      %v715 = vcombine.high %v713, %v713
      %v717 = vunpack.c.l.s4 1966171168
      %v718 = vunpack.c.0.s8 %v717
      %v719 = vlaneseq
      %v720 = vshrl.u32 %v719, 7
      %v721 = vsub.s32 %v718, %v720
      %v722 = vrot.slane %v706, %v721
      %v724 = vunpack.c.l.s4 1966171168
      %v725 = vunpack.c.0.s8 %v724
      %v726 = vlaneseq
      %v727 = vshrl.u32 %v726, 7
      %v728 = vsub.s32 %v725, %v727
      %v729 = vrot.slane %v713, %v728
      %v731 = vunpack.c.l.s4 1966171168
      %v732 = vunpack.c.0.s8 %v731
      %v733 = vlaneseq
      %v734 = vshrl.u32 %v733, 7
      %v735 = vsub.s32 %v732, %v734
      %v736 = vrot.slane %v714, %v735
      %v738 = vunpack.c.l.s4 1966171168
      %v739 = vunpack.c.0.s8 %v738
      %v740 = vlaneseq
      %v741 = vshrl.u32 %v740, 7
      %v742 = vsub.s32 %v739, %v741
      %v743 = vrot.slane %v715, %v742
      %v744 = vcombine.high %v722, %v722
      %v745 = vcombine.high %v729, %v729
      %v746 = vcombine.high %v736, %v736
      %v747 = vcombine.high %v743, %v743
      %v749 = vunpack.c.l.s4 1966171168
      %v750 = vunpack.c.0.s8 %v749
      %v751 = vlaneseq
      %v752 = vshrl.u32 %v751, 7
      %v753 = vsub.s32 %v750, %v752
      %v754 = vrot.slane %v424, %v753
      %v756 = vunpack.c.l.s4 1966171168
      %v757 = vunpack.c.0.s8 %v756
      %v758 = vlaneseq
      %v759 = vshrl.u32 %v758, 7
      %v760 = vsub.s32 %v757, %v759
      %v761 = vrot.slane %v754, %v760
      %v762 = vcombine.high %v425, %v425
      %v764 = vunpack.c.l.s4 1966171168
      %v765 = vunpack.c.0.s8 %v764
      %v766 = vlaneseq
      %v767 = vshrl.u32 %v766, 7
      %v768 = vsub.s32 %v765, %v767
      %v769 = vrot.slane %v425, %v768
      %v771 = vunpack.c.l.s4 1966171168
      %v772 = vunpack.c.0.s8 %v771
      %v773 = vlaneseq
      %v774 = vshrl.u32 %v773, 7
      %v775 = vsub.s32 %v772, %v774
      %v776 = vrot.slane %v762, %v775
      %v777 = vcombine.high %v769, %v769
      %v778 = vcombine.high %v776, %v776
      %v780 = vunpack.c.l.s4 1966171168
      %v781 = vunpack.c.0.s8 %v780
      %v782 = vlaneseq
      %v783 = vshrl.u32 %v782, 7
      %v784 = vsub.s32 %v781, %v783
      %v785 = vrot.slane %v769, %v784
      %v787 = vunpack.c.l.s4 1966171168
      %v788 = vunpack.c.0.s8 %v787
      %v789 = vlaneseq
      %v790 = vshrl.u32 %v789, 7
      %v791 = vsub.s32 %v788, %v790
      %v792 = vrot.slane %v776, %v791
      %v794 = vunpack.c.l.s4 1966171168
      %v795 = vunpack.c.0.s8 %v794
      %v796 = vlaneseq
      %v797 = vshrl.u32 %v796, 7
      %v798 = vsub.s32 %v795, %v797
      %v799 = vrot.slane %v777, %v798
      %v801 = vunpack.c.l.s4 1966171168
      %v802 = vunpack.c.0.s8 %v801
      %v803 = vlaneseq
      %v804 = vshrl.u32 %v803, 7
      %v805 = vsub.s32 %v802, %v804
      %v806 = vrot.slane %v778, %v805
      %v807 = vcombine.high %v785, %v785
      %v808 = vcombine.high %v792, %v792
      %v809 = vcombine.high %v799, %v799
      %v810 = vcombine.high %v806, %v806
      %v812 = vunpack.c.l.s4 1966171168
      %v813 = vunpack.c.0.s8 %v812
      %v814 = vlaneseq
      %v815 = vshrl.u32 %v814, 7
      %v816 = vsub.s32 %v813, %v815
      %v817 = vrot.slane %v426, %v816
      %v819 = vunpack.c.l.s4 1966171168
      %v820 = vunpack.c.0.s8 %v819
      %v821 = vlaneseq
      %v822 = vshrl.u32 %v821, 7
      %v823 = vsub.s32 %v820, %v822
      %v824 = vrot.slane %v817, %v823
      %v825 = vcombine.high %v427, %v427
      %v827 = vunpack.c.l.s4 1966171168
      %v828 = vunpack.c.0.s8 %v827
      %v829 = vlaneseq
      %v830 = vshrl.u32 %v829, 7
      %v831 = vsub.s32 %v828, %v830
      %v832 = vrot.slane %v427, %v831
      %v834 = vunpack.c.l.s4 1966171168
      %v835 = vunpack.c.0.s8 %v834
      %v836 = vlaneseq
      %v837 = vshrl.u32 %v836, 7
      %v838 = vsub.s32 %v835, %v837
      %v839 = vrot.slane %v825, %v838
      %v840 = vcombine.high %v832, %v832
      %v841 = vcombine.high %v839, %v839
      %v843 = vunpack.c.l.s4 1966171168
      %v844 = vunpack.c.0.s8 %v843
      %v845 = vlaneseq
      %v846 = vshrl.u32 %v845, 7
      %v847 = vsub.s32 %v844, %v846
      %v848 = vrot.slane %v832, %v847
      %v850 = vunpack.c.l.s4 1966171168
      %v851 = vunpack.c.0.s8 %v850
      %v852 = vlaneseq
      %v853 = vshrl.u32 %v852, 7
      %v854 = vsub.s32 %v851, %v853
      %v855 = vrot.slane %v839, %v854
      %v857 = vunpack.c.l.s4 1966171168
      %v858 = vunpack.c.0.s8 %v857
      %v859 = vlaneseq
      %v860 = vshrl.u32 %v859, 7
      %v861 = vsub.s32 %v858, %v860
      %v862 = vrot.slane %v840, %v861
      %v864 = vunpack.c.l.s4 1966171168
      %v865 = vunpack.c.0.s8 %v864
      %v866 = vlaneseq
      %v867 = vshrl.u32 %v866, 7
      %v868 = vsub.s32 %v865, %v867
      %v869 = vrot.slane %v841, %v868
      %v870 = vcombine.high %v848, %v848
      %v871 = vcombine.high %v855, %v855
      %v872 = vcombine.high %v862, %v862
      %v873 = vcombine.high %v869, %v869
      %v875 = vunpack.c.l.s4 1966171168
      %v876 = vunpack.c.0.s8 %v875
      %v877 = vlaneseq
      %v878 = vshrl.u32 %v877, 7
      %v879 = vsub.s32 %v876, %v878
      %v880 = vrot.slane %v428, %v879
      %v882 = vunpack.c.l.s4 1966171168
      %v883 = vunpack.c.0.s8 %v882
      %v884 = vlaneseq
      %v885 = vshrl.u32 %v884, 7
      %v886 = vsub.s32 %v883, %v885
      %v887 = vrot.slane %v880, %v886
      %v888 = vcombine.high %v429, %v429
      %v890 = vunpack.c.l.s4 1966171168
      %v891 = vunpack.c.0.s8 %v890
      %v892 = vlaneseq
      %v893 = vshrl.u32 %v892, 7
      %v894 = vsub.s32 %v891, %v893
      %v895 = vrot.slane %v429, %v894
      %v897 = vunpack.c.l.s4 1966171168
      %v898 = vunpack.c.0.s8 %v897
      %v899 = vlaneseq
      %v900 = vshrl.u32 %v899, 7
      %v901 = vsub.s32 %v898, %v900
      %v902 = vrot.slane %v888, %v901
      %v903 = vcombine.high %v895, %v895
      %v904 = vcombine.high %v902, %v902
      %v906 = vunpack.c.l.s4 1966171168
      %v907 = vunpack.c.0.s8 %v906
      %v908 = vlaneseq
      %v909 = vshrl.u32 %v908, 7
      %v910 = vsub.s32 %v907, %v909
      %v911 = vrot.slane %v895, %v910
      %v913 = vunpack.c.l.s4 1966171168
      %v914 = vunpack.c.0.s8 %v913
      %v915 = vlaneseq
      %v916 = vshrl.u32 %v915, 7
      %v917 = vsub.s32 %v914, %v916
      %v918 = vrot.slane %v902, %v917
      %v920 = vunpack.c.l.s4 1966171168
      %v921 = vunpack.c.0.s8 %v920
      %v922 = vlaneseq
      %v923 = vshrl.u32 %v922, 7
      %v924 = vsub.s32 %v921, %v923
      %v925 = vrot.slane %v903, %v924
      %v927 = vunpack.c.l.s4 1966171168
      %v928 = vunpack.c.0.s8 %v927
      %v929 = vlaneseq
      %v930 = vshrl.u32 %v929, 7
      %v931 = vsub.s32 %v928, %v930
      %v932 = vrot.slane %v904, %v931
      %v933 = vcombine.high %v911, %v911
      %v934 = vcombine.high %v918, %v918
      %v935 = vcombine.high %v925, %v925
      %v936 = vcombine.high %v932, %v932
      %v938 = vunpack.c.l.s4 1966171168
      %v939 = vunpack.c.0.s8 %v938
      %v940 = vlaneseq
      %v941 = vshrl.u32 %v940, 7
      %v942 = vsub.s32 %v939, %v941
      %v943 = vrot.slane %v430, %v942
      %v945 = vunpack.c.l.s4 1966171168
      %v946 = vunpack.c.0.s8 %v945
      %v947 = vlaneseq
      %v948 = vshrl.u32 %v947, 7
      %v949 = vsub.s32 %v946, %v948
      %v950 = vrot.slane %v943, %v949
      %v951 = vunpack.c.l.bf16 %v272
      %v952 = vunpack.c.l.bf16 %v273
      %v953 = vlaneseq
      %v954 = vshrl.u32 %v953, 7
      %v955 = vsub.s32 0, %v954
      %v956 = vrot.slane %v952, %v955
      %v957 = vcombine.low %v470, %v484
      %v958 = vcombine.low %v492, %v494
      %v959 = vcombine.low %v477, %v491
      %v960 = vcombine.low %v493, %v495
      %v962 = vunpack.c.l.s4 1966171168
      %v963 = vunpack.c.0.s8 %v962
      %v964 = vlaneseq
      %v965 = vshrl.u32 %v964, 7
      %v966 = vsub.s32 %v963, %v965
      %v967 = vrot.slane %v957, %v966
      %v969 = vunpack.c.l.s4 1966171168
      %v970 = vunpack.c.0.s8 %v969
      %v971 = vlaneseq
      %v972 = vshrl.u32 %v971, 7
      %v973 = vsub.s32 %v970, %v972
      %v974 = vrot.slane %v958, %v973
      %v976 = vunpack.c.l.s4 1966171168
      %v977 = vunpack.c.0.s8 %v976
      %v978 = vlaneseq
      %v979 = vshrl.u32 %v978, 7
      %v980 = vsub.s32 %v977, %v979
      %v981 = vrot.slane %v959, %v980
      %v983 = vunpack.c.l.s4 1966171168
      %v984 = vunpack.c.0.s8 %v983
      %v985 = vlaneseq
      %v986 = vshrl.u32 %v985, 7
      %v987 = vsub.s32 %v984, %v986
      %v988 = vrot.slane %v960, %v987
      %v989 = vcombine.low %v967, %v974
      %v990 = vcombine.low %v981, %v988
      %v992 = vunpack.c.l.s4 1966171168
      %v993 = vunpack.c.0.s8 %v992
      %v994 = vlaneseq
      %v995 = vshrl.u32 %v994, 7
      %v996 = vsub.s32 %v993, %v995
      %v997 = vrot.slane %v989, %v996
      %v999 = vunpack.c.l.s4 1966171168
      %v1000 = vunpack.c.0.s8 %v999
      %v1001 = vlaneseq
      %v1002 = vshrl.u32 %v1001, 7
      %v1003 = vsub.s32 %v1000, %v1002
      %v1004 = vrot.slane %v990, %v1003
      %v1005 = vcombine.low %v997, %v1004
      %v1006 = vcombine.low %v509, %v533
      %v1007 = vcombine.low %v547, %v555
      %v1008 = vcombine.low %v557, %v540
      %v1009 = vcombine.low %v554, %v556
      %v1011 = vunpack.c.l.s4 1966171168
      %v1012 = vunpack.c.0.s8 %v1011
      %v1013 = vlaneseq
      %v1014 = vshrl.u32 %v1013, 7
      %v1015 = vsub.s32 %v1012, %v1014
      %v1016 = vrot.slane %v1006, %v1015
      %v1018 = vunpack.c.l.s4 1966171168
      %v1019 = vunpack.c.0.s8 %v1018
      %v1020 = vlaneseq
      %v1021 = vshrl.u32 %v1020, 7
      %v1022 = vsub.s32 %v1019, %v1021
      %v1023 = vrot.slane %v1007, %v1022
      %v1025 = vunpack.c.l.s4 1966171168
      %v1026 = vunpack.c.0.s8 %v1025
      %v1027 = vlaneseq
      %v1028 = vshrl.u32 %v1027, 7
      %v1029 = vsub.s32 %v1026, %v1028
      %v1030 = vrot.slane %v1008, %v1029
      %v1032 = vunpack.c.l.s4 1966171168
      %v1033 = vunpack.c.0.s8 %v1032
      %v1034 = vlaneseq
      %v1035 = vshrl.u32 %v1034, 7
      %v1036 = vsub.s32 %v1033, %v1035
      %v1037 = vrot.slane %v1009, %v1036
      %v1038 = vcombine.low %v1016, %v1023
      %v1039 = vcombine.low %v1030, %v1037
      %v1041 = vunpack.c.l.s4 1966171168
      %v1042 = vunpack.c.0.s8 %v1041
      %v1043 = vlaneseq
      %v1044 = vshrl.u32 %v1043, 7
      %v1045 = vsub.s32 %v1042, %v1044
      %v1046 = vrot.slane %v1038, %v1045
      %v1048 = vunpack.c.l.s4 1966171168
      %v1049 = vunpack.c.0.s8 %v1048
      %v1050 = vlaneseq
      %v1051 = vshrl.u32 %v1050, 7
      %v1052 = vsub.s32 %v1049, %v1051
      %v1053 = vrot.slane %v1039, %v1052
      %v1054 = vcombine.low %v1046, %v1053
      %v1055 = vcombine.low %v558, %v572
      %v1056 = vcombine.low %v596, %v610
      %v1057 = vcombine.low %v618, %v620
      %v1058 = vcombine.low %v603, %v617
      %v1060 = vunpack.c.l.s4 1966171168
      %v1061 = vunpack.c.0.s8 %v1060
      %v1062 = vlaneseq
      %v1063 = vshrl.u32 %v1062, 7
      %v1064 = vsub.s32 %v1061, %v1063
      %v1065 = vrot.slane %v1055, %v1064
      %v1067 = vunpack.c.l.s4 1966171168
      %v1068 = vunpack.c.0.s8 %v1067
      %v1069 = vlaneseq
      %v1070 = vshrl.u32 %v1069, 7
      %v1071 = vsub.s32 %v1068, %v1070
      %v1072 = vrot.slane %v1056, %v1071
      %v1074 = vunpack.c.l.s4 1966171168
      %v1075 = vunpack.c.0.s8 %v1074
      %v1076 = vlaneseq
      %v1077 = vshrl.u32 %v1076, 7
      %v1078 = vsub.s32 %v1075, %v1077
      %v1079 = vrot.slane %v1057, %v1078
      %v1081 = vunpack.c.l.s4 1966171168
      %v1082 = vunpack.c.0.s8 %v1081
      %v1083 = vlaneseq
      %v1084 = vshrl.u32 %v1083, 7
      %v1085 = vsub.s32 %v1082, %v1084
      %v1086 = vrot.slane %v1058, %v1085
      %v1087 = vcombine.low %v1065, %v1072
      %v1088 = vcombine.low %v1079, %v1086
      %v1090 = vunpack.c.l.s4 1966171168
      %v1091 = vunpack.c.0.s8 %v1090
      %v1092 = vlaneseq
      %v1093 = vshrl.u32 %v1092, 7
      %v1094 = vsub.s32 %v1091, %v1093
      %v1095 = vrot.slane %v1087, %v1094
      %v1097 = vunpack.c.l.s4 1966171168
      %v1098 = vunpack.c.0.s8 %v1097
      %v1099 = vlaneseq
      %v1100 = vshrl.u32 %v1099, 7
      %v1101 = vsub.s32 %v1098, %v1100
      %v1102 = vrot.slane %v1088, %v1101
      %v1103 = vcombine.low %v1095, %v1102
      %v1104 = vcombine.low %v619, %v621
      %v1105 = vcombine.low %v635, %v659
      %v1106 = vcombine.low %v673, %v681
      %v1107 = vcombine.low %v683, %v666
      %v1109 = vunpack.c.l.s4 1966171168
      %v1110 = vunpack.c.0.s8 %v1109
      %v1111 = vlaneseq
      %v1112 = vshrl.u32 %v1111, 7
      %v1113 = vsub.s32 %v1110, %v1112
      %v1114 = vrot.slane %v1104, %v1113
      %v1116 = vunpack.c.l.s4 1966171168
      %v1117 = vunpack.c.0.s8 %v1116
      %v1118 = vlaneseq
      %v1119 = vshrl.u32 %v1118, 7
      %v1120 = vsub.s32 %v1117, %v1119
      %v1121 = vrot.slane %v1105, %v1120
      %v1123 = vunpack.c.l.s4 1966171168
      %v1124 = vunpack.c.0.s8 %v1123
      %v1125 = vlaneseq
      %v1126 = vshrl.u32 %v1125, 7
      %v1127 = vsub.s32 %v1124, %v1126
      %v1128 = vrot.slane %v1106, %v1127
      %v1130 = vunpack.c.l.s4 1966171168
      %v1131 = vunpack.c.0.s8 %v1130
      %v1132 = vlaneseq
      %v1133 = vshrl.u32 %v1132, 7
      %v1134 = vsub.s32 %v1131, %v1133
      %v1135 = vrot.slane %v1107, %v1134
      %v1136 = vcombine.low %v1114, %v1121
      %v1137 = vcombine.low %v1128, %v1135
      %v1139 = vunpack.c.l.s4 1966171168
      %v1140 = vunpack.c.0.s8 %v1139
      %v1141 = vlaneseq
      %v1142 = vshrl.u32 %v1141, 7
      %v1143 = vsub.s32 %v1140, %v1142
      %v1144 = vrot.slane %v1136, %v1143
      %v1146 = vunpack.c.l.s4 1966171168
      %v1147 = vunpack.c.0.s8 %v1146
      %v1148 = vlaneseq
      %v1149 = vshrl.u32 %v1148, 7
      %v1150 = vsub.s32 %v1147, %v1149
      %v1151 = vrot.slane %v1137, %v1150
      %v1152 = vcombine.low %v1144, %v1151
      %v1153 = vcombine.low %v680, %v682
      %v1154 = vcombine.low %v684, %v698
      %v1155 = vcombine.low %v722, %v736
      %v1156 = vcombine.low %v744, %v746
      %v1158 = vunpack.c.l.s4 1966171168
      %v1159 = vunpack.c.0.s8 %v1158
      %v1160 = vlaneseq
      %v1161 = vshrl.u32 %v1160, 7
      %v1162 = vsub.s32 %v1159, %v1161
      %v1163 = vrot.slane %v1153, %v1162
      %v1165 = vunpack.c.l.s4 1966171168
      %v1166 = vunpack.c.0.s8 %v1165
      %v1167 = vlaneseq
      %v1168 = vshrl.u32 %v1167, 7
      %v1169 = vsub.s32 %v1166, %v1168
      %v1170 = vrot.slane %v1154, %v1169
      %v1172 = vunpack.c.l.s4 1966171168
      %v1173 = vunpack.c.0.s8 %v1172
      %v1174 = vlaneseq
      %v1175 = vshrl.u32 %v1174, 7
      %v1176 = vsub.s32 %v1173, %v1175
      %v1177 = vrot.slane %v1155, %v1176
      %v1179 = vunpack.c.l.s4 1966171168
      %v1180 = vunpack.c.0.s8 %v1179
      %v1181 = vlaneseq
      %v1182 = vshrl.u32 %v1181, 7
      %v1183 = vsub.s32 %v1180, %v1182
      %v1184 = vrot.slane %v1156, %v1183
      %v1185 = vcombine.low %v1163, %v1170
      %v1186 = vcombine.low %v1177, %v1184
      %v1188 = vunpack.c.l.s4 1966171168
      %v1189 = vunpack.c.0.s8 %v1188
      %v1190 = vlaneseq
      %v1191 = vshrl.u32 %v1190, 7
      %v1192 = vsub.s32 %v1189, %v1191
      %v1193 = vrot.slane %v1185, %v1192
      %v1195 = vunpack.c.l.s4 1966171168
      %v1196 = vunpack.c.0.s8 %v1195
      %v1197 = vlaneseq
      %v1198 = vshrl.u32 %v1197, 7
      %v1199 = vsub.s32 %v1196, %v1198
      %v1200 = vrot.slane %v1186, %v1199
      %v1201 = vcombine.low %v1193, %v1200
      %v1202 = vcombine.low %v729, %v743
      %v1203 = vcombine.low %v745, %v747
      %v1204 = vcombine.low %v761, %v785
      %v1205 = vcombine.low %v799, %v807
      %v1207 = vunpack.c.l.s4 1966171168
      %v1208 = vunpack.c.0.s8 %v1207
      %v1209 = vlaneseq
      %v1210 = vshrl.u32 %v1209, 7
      %v1211 = vsub.s32 %v1208, %v1210
      %v1212 = vrot.slane %v1202, %v1211
      %v1214 = vunpack.c.l.s4 1966171168
      %v1215 = vunpack.c.0.s8 %v1214
      %v1216 = vlaneseq
      %v1217 = vshrl.u32 %v1216, 7
      %v1218 = vsub.s32 %v1215, %v1217
      %v1219 = vrot.slane %v1203, %v1218
      %v1221 = vunpack.c.l.s4 1966171168
      %v1222 = vunpack.c.0.s8 %v1221
      %v1223 = vlaneseq
      %v1224 = vshrl.u32 %v1223, 7
      %v1225 = vsub.s32 %v1222, %v1224
      %v1226 = vrot.slane %v1204, %v1225
      %v1228 = vunpack.c.l.s4 1966171168
      %v1229 = vunpack.c.0.s8 %v1228
      %v1230 = vlaneseq
      %v1231 = vshrl.u32 %v1230, 7
      %v1232 = vsub.s32 %v1229, %v1231
      %v1233 = vrot.slane %v1205, %v1232
      %v1234 = vcombine.low %v1212, %v1219
      %v1235 = vcombine.low %v1226, %v1233
      %v1237 = vunpack.c.l.s4 1966171168
      %v1238 = vunpack.c.0.s8 %v1237
      %v1239 = vlaneseq
      %v1240 = vshrl.u32 %v1239, 7
      %v1241 = vsub.s32 %v1238, %v1240
      %v1242 = vrot.slane %v1234, %v1241
      %v1244 = vunpack.c.l.s4 1966171168
      %v1245 = vunpack.c.0.s8 %v1244
      %v1246 = vlaneseq
      %v1247 = vshrl.u32 %v1246, 7
      %v1248 = vsub.s32 %v1245, %v1247
      %v1249 = vrot.slane %v1235, %v1248
      %v1250 = vcombine.low %v1242, %v1249
      %v1251 = vcombine.low %v809, %v792
      %v1252 = vcombine.low %v806, %v808
      %v1253 = vcombine.low %v810, %v824
      %v1254 = vcombine.low %v848, %v862
      %v1256 = vunpack.c.l.s4 1966171168
      %v1257 = vunpack.c.0.s8 %v1256
      %v1258 = vlaneseq
      %v1259 = vshrl.u32 %v1258, 7
      %v1260 = vsub.s32 %v1257, %v1259
      %v1261 = vrot.slane %v1251, %v1260
      %v1263 = vunpack.c.l.s4 1966171168
      %v1264 = vunpack.c.0.s8 %v1263
      %v1265 = vlaneseq
      %v1266 = vshrl.u32 %v1265, 7
      %v1267 = vsub.s32 %v1264, %v1266
      %v1268 = vrot.slane %v1252, %v1267
      %v1270 = vunpack.c.l.s4 1966171168
      %v1271 = vunpack.c.0.s8 %v1270
      %v1272 = vlaneseq
      %v1273 = vshrl.u32 %v1272, 7
      %v1274 = vsub.s32 %v1271, %v1273
      %v1275 = vrot.slane %v1253, %v1274
      %v1277 = vunpack.c.l.s4 1966171168
      %v1278 = vunpack.c.0.s8 %v1277
      %v1279 = vlaneseq
      %v1280 = vshrl.u32 %v1279, 7
      %v1281 = vsub.s32 %v1278, %v1280
      %v1282 = vrot.slane %v1254, %v1281
      %v1283 = vcombine.low %v1261, %v1268
      %v1284 = vcombine.low %v1275, %v1282
      %v1286 = vunpack.c.l.s4 1966171168
      %v1287 = vunpack.c.0.s8 %v1286
      %v1288 = vlaneseq
      %v1289 = vshrl.u32 %v1288, 7
      %v1290 = vsub.s32 %v1287, %v1289
      %v1291 = vrot.slane %v1283, %v1290
      %v1293 = vunpack.c.l.s4 1966171168
      %v1294 = vunpack.c.0.s8 %v1293
      %v1295 = vlaneseq
      %v1296 = vshrl.u32 %v1295, 7
      %v1297 = vsub.s32 %v1294, %v1296
      %v1298 = vrot.slane %v1284, %v1297
      %v1299 = vcombine.low %v1291, %v1298
      %v1300 = vcombine.low %v870, %v872
      %v1301 = vcombine.low %v855, %v869
      %v1302 = vcombine.low %v871, %v873
      %v1303 = vcombine.low %v887, %v911
      %v1305 = vunpack.c.l.s4 1966171168
      %v1306 = vunpack.c.0.s8 %v1305
      %v1307 = vlaneseq
      %v1308 = vshrl.u32 %v1307, 7
      %v1309 = vsub.s32 %v1306, %v1308
      %v1310 = vrot.slane %v1300, %v1309
      %v1312 = vunpack.c.l.s4 1966171168
      %v1313 = vunpack.c.0.s8 %v1312
      %v1314 = vlaneseq
      %v1315 = vshrl.u32 %v1314, 7
      %v1316 = vsub.s32 %v1313, %v1315
      %v1317 = vrot.slane %v1301, %v1316
      %v1319 = vunpack.c.l.s4 1966171168
      %v1320 = vunpack.c.0.s8 %v1319
      %v1321 = vlaneseq
      %v1322 = vshrl.u32 %v1321, 7
      %v1323 = vsub.s32 %v1320, %v1322
      %v1324 = vrot.slane %v1302, %v1323
      %v1326 = vunpack.c.l.s4 1966171168
      %v1327 = vunpack.c.0.s8 %v1326
      %v1328 = vlaneseq
      %v1329 = vshrl.u32 %v1328, 7
      %v1330 = vsub.s32 %v1327, %v1329
      %v1331 = vrot.slane %v1303, %v1330
      %v1332 = vcombine.low %v1310, %v1317
      %v1333 = vcombine.low %v1324, %v1331
      %v1335 = vunpack.c.l.s4 1966171168
      %v1336 = vunpack.c.0.s8 %v1335
      %v1337 = vlaneseq
      %v1338 = vshrl.u32 %v1337, 7
      %v1339 = vsub.s32 %v1336, %v1338
      %v1340 = vrot.slane %v1332, %v1339
      %v1342 = vunpack.c.l.s4 1966171168
      %v1343 = vunpack.c.0.s8 %v1342
      %v1344 = vlaneseq
      %v1345 = vshrl.u32 %v1344, 7
      %v1346 = vsub.s32 %v1343, %v1345
      %v1347 = vrot.slane %v1333, %v1346
      %v1348 = vcombine.low %v1340, %v1347
      %v1349 = vcombine.low %v925, %v933
      %v1350 = vcombine.low %v935, %v918
      %v1351 = vcombine.low %v932, %v934
      %v1352 = vcombine.low %v936, %v950
      %v1354 = vunpack.c.l.s4 1966171168
      %v1355 = vunpack.c.0.s8 %v1354
      %v1356 = vlaneseq
      %v1357 = vshrl.u32 %v1356, 7
      %v1358 = vsub.s32 %v1355, %v1357
      %v1359 = vrot.slane %v1349, %v1358
      %v1361 = vunpack.c.l.s4 1966171168
      %v1362 = vunpack.c.0.s8 %v1361
      %v1363 = vlaneseq
      %v1364 = vshrl.u32 %v1363, 7
      %v1365 = vsub.s32 %v1362, %v1364
      %v1366 = vrot.slane %v1350, %v1365
      %v1368 = vunpack.c.l.s4 1966171168
      %v1369 = vunpack.c.0.s8 %v1368
      %v1370 = vlaneseq
      %v1371 = vshrl.u32 %v1370, 7
      %v1372 = vsub.s32 %v1369, %v1371
      %v1373 = vrot.slane %v1351, %v1372
      %v1375 = vunpack.c.l.s4 1966171168
      %v1376 = vunpack.c.0.s8 %v1375
      %v1377 = vlaneseq
      %v1378 = vshrl.u32 %v1377, 7
      %v1379 = vsub.s32 %v1376, %v1378
      %v1380 = vrot.slane %v1352, %v1379
      %v1381 = vcombine.low %v1359, %v1366
      %v1382 = vcombine.low %v1373, %v1380
      %v1384 = vunpack.c.l.s4 1966171168
      %v1385 = vunpack.c.0.s8 %v1384
      %v1386 = vlaneseq
      %v1387 = vshrl.u32 %v1386, 7
      %v1388 = vsub.s32 %v1385, %v1387
      %v1389 = vrot.slane %v1381, %v1388
      %v1391 = vunpack.c.l.s4 1966171168
      %v1392 = vunpack.c.0.s8 %v1391
      %v1393 = vlaneseq
      %v1394 = vshrl.u32 %v1393, 7
      %v1395 = vsub.s32 %v1392, %v1394
      %v1396 = vrot.slane %v1382, %v1395
      %v1397 = vcombine.low %v1389, %v1396
      %v1398 = vsel %vm300, %v1005, 0
      %v1400 = vsel %vm300, %v1054, 0
      %v1402 = vsel %vm300, %v1103, 0
      %v1404 = vsel %vm300, %v1152, 0
      %v1406 = vsel %vm300, %v1201, 0
      %v1408 = vsel %vm300, %v1250, 0
      %v1410 = vsel %vm300, %v1299, 0
      %v1412 = vsel %vm300, %v1348, 0
      %v1414 = vsel %vm300, %v1397, 0
      %vm1416 = vcmask 1042432
      %v1418 = vsel %vm1416, %v951, 0
      %1420 = vmatprep.subr.mxu0 0.0
      %1421 = vmatpush1.msra.mxu0 %v1418
      %1422 = vmatprep.subr.mxu0 0.0
      %1423 = vmatpush1.msra.mxu0 0.0
      %1424 = vmatprep.subr.mxu0 0.0
      %1425 = vmatpush1.msra.mxu0 0.0
      %1426 = vmatprep.subr.mxu0 0.0
      %1427 = vmatpush1.msra.mxu0 0.0
      %1428 = vmatprep.subr.mxu0 0.0
      %1429 = vmatpush1.msra.mxu0 0.0
      %1430 = vmatprep.subr.mxu0 0.0
      %1431 = vmatpush1.msra.mxu0 0.0
      %1432 = vmatprep.subr.mxu0 0.0
      %1433 = vmatpush1.msra.mxu0 0.0
      %1434 = vmatprep.subr.mxu0 0.0
      %1435 = vmatpush1.msra.mxu0 0.0
      %1436 = vmatprep.subr.mxu0 0.0
      %1437 = vmatpush1.msra.mxu0 0.0
      %1438 = vmatprep.subr.mxu0 0.0
      %1439 = vmatpush1.msra.mxu0 0.0
      %1440 = vmatprep.subr.mxu0 0.0
      %1441 = vmatpush1.msra.mxu0 0.0
      %1442 = vmatprep.subr.mxu0 0.0
      %1443 = vmatpush1.msra.mxu0 0.0
      %1444 = vmatprep.subr.mxu0 0.0
      %1445 = vmatpush1.msra.mxu0 0.0
      %1446 = vmatprep.subr.mxu0 0.0
      %1447 = vmatpush1.msra.mxu0 0.0
      %1448 = vmatprep.subr.mxu0 0.0
      %1449 = vmatpush1.msra.mxu0 0.0
      %1450 = vmatprep.subr.mxu0 0.0
      %1451 = vmatpush1.msra.mxu0 0.0
      %1452 = vmatprep.subr.mxu0 0.0
      %1453 = vmatpush1.msra.mxu0 0.0
      %1454 = vmatprep.subr.mxu0 0.0
      %1455 = vmatpush1.msra.mxu0 0.0
      %1456 = vmatprep.subr.mxu0 0.0
      %1457 = vmatpush1.msra.mxu0 0.0
      %1458 = vmatprep.subr.mxu0 0.0
      %1459 = vmatpush1.msra.mxu0 0.0
      %1460 = vmatprep.subr.mxu0 0.0
      %1461 = vmatpush1.msra.mxu0 0.0
      %1462 = vmatprep.subr.mxu0 0.0
      %1463 = vmatpush1.msra.mxu0 0.0
      %1464 = vmatprep.subr.mxu0 0.0
      %1465 = vmatpush1.msra.mxu0 0.0
      %1466 = vmatprep.subr.mxu0 0.0
      %1467 = vmatpush1.msra.mxu0 0.0
      %1468 = vmatprep.subr.mxu0 0.0
      %1469 = vmatpush1.msra.mxu0 0.0
      %1470 = vmatprep.subr.mxu0 0.0
      %1471 = vmatpush1.msra.mxu0 0.0
      %1472 = vmatprep.subr.mxu0 0.0
      %1473 = vmatpush1.msra.mxu0 0.0
      %1474 = vmatprep.subr.mxu0 0.0
      %1475 = vmatpush1.msra.mxu0 0.0
      %1476 = vmatprep.subr.mxu0 0.0
      %1477 = vmatpush1.msra.mxu0 0.0
      %1478 = vmatprep.subr.mxu0 0.0
      %1479 = vmatpush1.msra.mxu0 0.0
      %1480 = vmatprep.subr.mxu0 0.0
      %1481 = vmatpush1.msra.mxu0 0.0
      %1482 = vmatprep.subr.mxu0 0.0
      %1483 = vmatpush1.msra.mxu0 0.0
      %1484 = vmatprep.mubr.f32.mxu0 0.0
      %1485 = vmatmul.mubr.f32.gmra.mrb[0].mxu0 %v1398
      %v1486 = vpop.f32.mrb[0].mxu0
      %v1487 = vadd.f32 %v956, %v1486
      %v1488 = vpop.f32.mrb[0].mxu0
      %1489 = vmatprep.mubr.f32.mxu0 0.0
      %1490 = vmatmul.mubr.f32.gmra.mrb[0].mxu0 %v1400
      %v1491 = vpop.f32.mrb[0].mxu0
      %v1492 = vadd.f32 %v956, %v1491
      %v1493 = vpop.f32.mrb[0].mxu0
      %1494 = vmatprep.mubr.f32.mxu0 0.0
      %1495 = vmatmul.mubr.f32.gmra.mrb[0].mxu0 %v1402
      %v1496 = vpop.f32.mrb[0].mxu0
      %v1497 = vadd.f32 %v956, %v1496
      %v1498 = vpop.f32.mrb[0].mxu0
      %1499 = vmatprep.mubr.f32.mxu0 0.0
      %1500 = vmatmul.mubr.f32.gmra.mrb[0].mxu0 %v1404
      %v1501 = vpop.f32.mrb[0].mxu0
      %v1502 = vadd.f32 %v956, %v1501
      %v1503 = vpop.f32.mrb[0].mxu0
      %1504 = vmatprep.mubr.f32.mxu0 0.0
      %1505 = vmatmul.mubr.f32.gmra.mrb[0].mxu0 %v1406
      %v1506 = vpop.f32.mrb[0].mxu0
      %v1507 = vadd.f32 %v956, %v1506
      %v1508 = vpop.f32.mrb[0].mxu0
      %1509 = vmatprep.mubr.f32.mxu0 0.0
      %1510 = vmatmul.mubr.f32.gmra.mrb[0].mxu0 %v1408
      %v1511 = vpop.f32.mrb[0].mxu0
      %v1512 = vadd.f32 %v956, %v1511
      %v1513 = vpop.f32.mrb[0].mxu0
      %1514 = vmatprep.mubr.f32.mxu0 0.0
      %1515 = vmatmul.mubr.f32.gmra.mrb[0].mxu0 %v1410
      %v1516 = vpop.f32.mrb[0].mxu0
      %v1517 = vadd.f32 %v956, %v1516
      %v1518 = vpop.f32.mrb[0].mxu0
      %1519 = vmatprep.mubr.f32.mxu0 0.0
      %1520 = vmatmul.mubr.f32.gmra.mrb[0].mxu0 %v1412
      %v1521 = vpop.f32.mrb[0].mxu0
      %v1522 = vadd.f32 %v956, %v1521
      %v1523 = vpop.f32.mrb[0].mxu0
      %1524 = vmatprep.mubr.f32.mxu0 0.0
      %1525 = vmatmul.mubr.f32.gmra.mrb[0].mxu0 %v1414
      %v1526 = vpop.f32.mrb[0].mxu0
      %v1527 = vadd.f32 %v956, %v1526
      %v1528 = vpop.f32.mrb[0].mxu0
      %1529 = vdwg.mxu0
      %v1532 = vcombine.high %v409, %v409
      %v1534 = vunpack.c.l.s4 1966171168
      %v1535 = vunpack.c.0.s8 %v1534
      %v1536 = vlaneseq
      %v1537 = vshrl.u32 %v1536, 7
      %v1538 = vsub.s32 %v1535, %v1537
      %v1539 = vrot.slane %v409, %v1538
      %v1541 = vunpack.c.l.s4 1966171168
      %v1542 = vunpack.c.0.s8 %v1541
      %v1543 = vlaneseq
      %v1544 = vshrl.u32 %v1543, 7
      %v1545 = vsub.s32 %v1542, %v1544
      %v1546 = vrot.slane %v1532, %v1545
      %v1547 = vcombine.high %v1539, %v1539
      %v1548 = vcombine.high %v1546, %v1546
      %v1550 = vunpack.c.l.s4 1966171168
      %v1551 = vunpack.c.0.s8 %v1550
      %v1552 = vlaneseq
      %v1553 = vshrl.u32 %v1552, 7
      %v1554 = vsub.s32 %v1551, %v1553
      %v1555 = vrot.slane %v1539, %v1554
      %v1557 = vunpack.c.l.s4 1966171168
      %v1558 = vunpack.c.0.s8 %v1557
      %v1559 = vlaneseq
      %v1560 = vshrl.u32 %v1559, 7
      %v1561 = vsub.s32 %v1558, %v1560
      %v1562 = vrot.slane %v1546, %v1561
      %v1564 = vunpack.c.l.s4 1966171168
      %v1565 = vunpack.c.0.s8 %v1564
      %v1566 = vlaneseq
      %v1567 = vshrl.u32 %v1566, 7
      %v1568 = vsub.s32 %v1565, %v1567
      %v1569 = vrot.slane %v1547, %v1568
      %v1571 = vunpack.c.l.s4 1966171168
      %v1572 = vunpack.c.0.s8 %v1571
      %v1573 = vlaneseq
      %v1574 = vshrl.u32 %v1573, 7
      %v1575 = vsub.s32 %v1572, %v1574
      %v1576 = vrot.slane %v1548, %v1575
      %v1577 = vcombine.high %v1555, %v1555
      %v1578 = vcombine.high %v1562, %v1562
      %v1579 = vcombine.high %v1569, %v1569
      %v1580 = vcombine.high %v1576, %v1576
      %v1582 = vunpack.c.l.s4 1966171168
      %v1583 = vunpack.c.0.s8 %v1582
      %v1584 = vlaneseq
      %v1585 = vshrl.u32 %v1584, 7
      %v1586 = vsub.s32 %v1583, %v1585
      %v1587 = vrot.slane %v412, %v1586
      %v1589 = vunpack.c.l.s4 1966171168
      %v1590 = vunpack.c.0.s8 %v1589
      %v1591 = vlaneseq
      %v1592 = vshrl.u32 %v1591, 7
      %v1593 = vsub.s32 %v1590, %v1592
      %v1594 = vrot.slane %v1587, %v1593
      %v1595 = vlaneseq
      %v1596 = vshrl.u32 %v1595, 7
      %v1597 = vsub.s32 0, %v1596
      %v1598 = vrot.slane %v1555, %v1597
      %v1599 = vlaneseq
      %v1600 = vshrl.u32 %v1599, 7
      %v1601 = vsub.s32 0, %v1600
      %v1602 = vrot.slane %v1569, %v1601
      %v1603 = vlaneseq
      %v1604 = vshrl.u32 %v1603, 7
      %v1605 = vsub.s32 0, %v1604
      %v1606 = vrot.slane %v1577, %v1605
      %v1607 = vlaneseq
      %v1608 = vshrl.u32 %v1607, 7
      %v1609 = vsub.s32 0, %v1608
      %v1610 = vrot.slane %v1579, %v1609
      %v1611 = vlaneseq
      %v1612 = vshrl.u32 %v1611, 7
      %v1613 = vsub.s32 0, %v1612
      %v1614 = vrot.slane %v1562, %v1613
      %v1615 = vlaneseq
      %v1616 = vshrl.u32 %v1615, 7
      %v1617 = vsub.s32 0, %v1616
      %v1618 = vrot.slane %v1576, %v1617
      %v1619 = vlaneseq
      %v1620 = vshrl.u32 %v1619, 7
      %v1621 = vsub.s32 0, %v1620
      %v1622 = vrot.slane %v1578, %v1621
      %v1623 = vlaneseq
      %v1624 = vshrl.u32 %v1623, 7
      %v1625 = vsub.s32 0, %v1624
      %v1626 = vrot.slane %v1580, %v1625
      %v1627 = vlaneseq
      %v1628 = vshrl.u32 %v1627, 7
      %v1629 = vsub.s32 0, %v1628
      %v1630 = vrot.slane %v1594, %v1629
      %v1640 = vadd.f32 %v1598, %v346
      %v1641 = vadd.f32 %v1602, %v346
      %v1642 = vadd.f32 %v1606, %v346
      %v1643 = vadd.f32 %v1610, %v346
      %v1644 = vadd.f32 %v1614, %v346
      %v1645 = vadd.f32 %v1618, %v346
      %v1646 = vadd.f32 %v1622, %v346
      %v1647 = vadd.f32 %v1626, %v346
      %v1648 = vadd.f32 %v1630, %v346
      %v1658 = vcombine.high %v1487, %v1487
      %v1660 = vunpack.c.l.s4 1966171168
      %v1661 = vunpack.c.0.s8 %v1660
      %v1662 = vlaneseq
      %v1663 = vshrl.u32 %v1662, 7
      %v1664 = vsub.s32 %v1661, %v1663
      %v1665 = vrot.slane %v1487, %v1664
      %v1667 = vunpack.c.l.s4 1966171168
      %v1668 = vunpack.c.0.s8 %v1667
      %v1669 = vlaneseq
      %v1670 = vshrl.u32 %v1669, 7
      %v1671 = vsub.s32 %v1668, %v1670
      %v1672 = vrot.slane %v1658, %v1671
      %v1673 = vcombine.high %v1665, %v1665
      %v1674 = vcombine.high %v1672, %v1672
      %v1676 = vunpack.c.l.s4 1966171168
      %v1677 = vunpack.c.0.s8 %v1676
      %v1678 = vlaneseq
      %v1679 = vshrl.u32 %v1678, 7
      %v1680 = vsub.s32 %v1677, %v1679
      %v1681 = vrot.slane %v1665, %v1680
      %v1683 = vunpack.c.l.s4 1966171168
      %v1684 = vunpack.c.0.s8 %v1683
      %v1685 = vlaneseq
      %v1686 = vshrl.u32 %v1685, 7
      %v1687 = vsub.s32 %v1684, %v1686
      %v1688 = vrot.slane %v1672, %v1687
      %v1690 = vunpack.c.l.s4 1966171168
      %v1691 = vunpack.c.0.s8 %v1690
      %v1692 = vlaneseq
      %v1693 = vshrl.u32 %v1692, 7
      %v1694 = vsub.s32 %v1691, %v1693
      %v1695 = vrot.slane %v1673, %v1694
      %v1697 = vunpack.c.l.s4 1966171168
      %v1698 = vunpack.c.0.s8 %v1697
      %v1699 = vlaneseq
      %v1700 = vshrl.u32 %v1699, 7
      %v1701 = vsub.s32 %v1698, %v1700
      %v1702 = vrot.slane %v1674, %v1701
      %v1703 = vcombine.high %v1681, %v1681
      %v1704 = vcombine.high %v1688, %v1688
      %v1705 = vcombine.high %v1695, %v1695
      %v1706 = vcombine.high %v1702, %v1702
      %v1707 = vcombine.high %v1492, %v1492
      %v1709 = vunpack.c.l.s4 1966171168
      %v1710 = vunpack.c.0.s8 %v1709
      %v1711 = vlaneseq
      %v1712 = vshrl.u32 %v1711, 7
      %v1713 = vsub.s32 %v1710, %v1712
      %v1714 = vrot.slane %v1492, %v1713
      %v1716 = vunpack.c.l.s4 1966171168
      %v1717 = vunpack.c.0.s8 %v1716
      %v1718 = vlaneseq
      %v1719 = vshrl.u32 %v1718, 7
      %v1720 = vsub.s32 %v1717, %v1719
      %v1721 = vrot.slane %v1707, %v1720
      %v1722 = vcombine.high %v1714, %v1714
      %v1723 = vcombine.high %v1721, %v1721
      %v1725 = vunpack.c.l.s4 1966171168
      %v1726 = vunpack.c.0.s8 %v1725
      %v1727 = vlaneseq
      %v1728 = vshrl.u32 %v1727, 7
      %v1729 = vsub.s32 %v1726, %v1728
      %v1730 = vrot.slane %v1714, %v1729
      %v1732 = vunpack.c.l.s4 1966171168
      %v1733 = vunpack.c.0.s8 %v1732
      %v1734 = vlaneseq
      %v1735 = vshrl.u32 %v1734, 7
      %v1736 = vsub.s32 %v1733, %v1735
      %v1737 = vrot.slane %v1721, %v1736
      %v1739 = vunpack.c.l.s4 1966171168
      %v1740 = vunpack.c.0.s8 %v1739
      %v1741 = vlaneseq
      %v1742 = vshrl.u32 %v1741, 7
      %v1743 = vsub.s32 %v1740, %v1742
      %v1744 = vrot.slane %v1722, %v1743
      %v1746 = vunpack.c.l.s4 1966171168
      %v1747 = vunpack.c.0.s8 %v1746
      %v1748 = vlaneseq
      %v1749 = vshrl.u32 %v1748, 7
      %v1750 = vsub.s32 %v1747, %v1749
      %v1751 = vrot.slane %v1723, %v1750
      %v1752 = vcombine.high %v1730, %v1730
      %v1753 = vcombine.high %v1737, %v1737
      %v1754 = vcombine.high %v1744, %v1744
      %v1755 = vcombine.high %v1751, %v1751
      %v1756 = vcombine.high %v1497, %v1497
      %v1758 = vunpack.c.l.s4 1966171168
      %v1759 = vunpack.c.0.s8 %v1758
      %v1760 = vlaneseq
      %v1761 = vshrl.u32 %v1760, 7
      %v1762 = vsub.s32 %v1759, %v1761
      %v1763 = vrot.slane %v1497, %v1762
      %v1765 = vunpack.c.l.s4 1966171168
      %v1766 = vunpack.c.0.s8 %v1765
      %v1767 = vlaneseq
      %v1768 = vshrl.u32 %v1767, 7
      %v1769 = vsub.s32 %v1766, %v1768
      %v1770 = vrot.slane %v1756, %v1769
      %v1771 = vcombine.high %v1763, %v1763
      %v1772 = vcombine.high %v1770, %v1770
      %v1774 = vunpack.c.l.s4 1966171168
      %v1775 = vunpack.c.0.s8 %v1774
      %v1776 = vlaneseq
      %v1777 = vshrl.u32 %v1776, 7
      %v1778 = vsub.s32 %v1775, %v1777
      %v1779 = vrot.slane %v1763, %v1778
      %v1781 = vunpack.c.l.s4 1966171168
      %v1782 = vunpack.c.0.s8 %v1781
      %v1783 = vlaneseq
      %v1784 = vshrl.u32 %v1783, 7
      %v1785 = vsub.s32 %v1782, %v1784
      %v1786 = vrot.slane %v1770, %v1785
      %v1788 = vunpack.c.l.s4 1966171168
      %v1789 = vunpack.c.0.s8 %v1788
      %v1790 = vlaneseq
      %v1791 = vshrl.u32 %v1790, 7
      %v1792 = vsub.s32 %v1789, %v1791
      %v1793 = vrot.slane %v1771, %v1792
      %v1795 = vunpack.c.l.s4 1966171168
      %v1796 = vunpack.c.0.s8 %v1795
      %v1797 = vlaneseq
      %v1798 = vshrl.u32 %v1797, 7
      %v1799 = vsub.s32 %v1796, %v1798
      %v1800 = vrot.slane %v1772, %v1799
      %v1801 = vcombine.high %v1779, %v1779
      %v1802 = vcombine.high %v1786, %v1786
      %v1803 = vcombine.high %v1793, %v1793
      %v1804 = vcombine.high %v1800, %v1800
      %v1805 = vcombine.high %v1502, %v1502
      %v1807 = vunpack.c.l.s4 1966171168
      %v1808 = vunpack.c.0.s8 %v1807
      %v1809 = vlaneseq
      %v1810 = vshrl.u32 %v1809, 7
      %v1811 = vsub.s32 %v1808, %v1810
      %v1812 = vrot.slane %v1502, %v1811
      %v1814 = vunpack.c.l.s4 1966171168
      %v1815 = vunpack.c.0.s8 %v1814
      %v1816 = vlaneseq
      %v1817 = vshrl.u32 %v1816, 7
      %v1818 = vsub.s32 %v1815, %v1817
      %v1819 = vrot.slane %v1805, %v1818
      %v1820 = vcombine.high %v1812, %v1812
      %v1821 = vcombine.high %v1819, %v1819
      %v1823 = vunpack.c.l.s4 1966171168
      %v1824 = vunpack.c.0.s8 %v1823
      %v1825 = vlaneseq
      %v1826 = vshrl.u32 %v1825, 7
      %v1827 = vsub.s32 %v1824, %v1826
      %v1828 = vrot.slane %v1812, %v1827
      %v1830 = vunpack.c.l.s4 1966171168
      %v1831 = vunpack.c.0.s8 %v1830
      %v1832 = vlaneseq
      %v1833 = vshrl.u32 %v1832, 7
      %v1834 = vsub.s32 %v1831, %v1833
      %v1835 = vrot.slane %v1819, %v1834
      %v1837 = vunpack.c.l.s4 1966171168
      %v1838 = vunpack.c.0.s8 %v1837
      %v1839 = vlaneseq
      %v1840 = vshrl.u32 %v1839, 7
      %v1841 = vsub.s32 %v1838, %v1840
      %v1842 = vrot.slane %v1820, %v1841
      %v1844 = vunpack.c.l.s4 1966171168
      %v1845 = vunpack.c.0.s8 %v1844
      %v1846 = vlaneseq
      %v1847 = vshrl.u32 %v1846, 7
      %v1848 = vsub.s32 %v1845, %v1847
      %v1849 = vrot.slane %v1821, %v1848
      %v1850 = vcombine.high %v1828, %v1828
      %v1851 = vcombine.high %v1835, %v1835
      %v1852 = vcombine.high %v1842, %v1842
      %v1853 = vcombine.high %v1849, %v1849
      %v1854 = vcombine.high %v1507, %v1507
      %v1856 = vunpack.c.l.s4 1966171168
      %v1857 = vunpack.c.0.s8 %v1856
      %v1858 = vlaneseq
      %v1859 = vshrl.u32 %v1858, 7
      %v1860 = vsub.s32 %v1857, %v1859
      %v1861 = vrot.slane %v1507, %v1860
      %v1863 = vunpack.c.l.s4 1966171168
      %v1864 = vunpack.c.0.s8 %v1863
      %v1865 = vlaneseq
      %v1866 = vshrl.u32 %v1865, 7
      %v1867 = vsub.s32 %v1864, %v1866
      %v1868 = vrot.slane %v1854, %v1867
      %v1869 = vcombine.high %v1861, %v1861
      %v1870 = vcombine.high %v1868, %v1868
      %v1872 = vunpack.c.l.s4 1966171168
      %v1873 = vunpack.c.0.s8 %v1872
      %v1874 = vlaneseq
      %v1875 = vshrl.u32 %v1874, 7
      %v1876 = vsub.s32 %v1873, %v1875
      %v1877 = vrot.slane %v1861, %v1876
      %v1879 = vunpack.c.l.s4 1966171168
      %v1880 = vunpack.c.0.s8 %v1879
      %v1881 = vlaneseq
      %v1882 = vshrl.u32 %v1881, 7
      %v1883 = vsub.s32 %v1880, %v1882
      %v1884 = vrot.slane %v1868, %v1883
      %v1886 = vunpack.c.l.s4 1966171168
      %v1887 = vunpack.c.0.s8 %v1886
      %v1888 = vlaneseq
      %v1889 = vshrl.u32 %v1888, 7
      %v1890 = vsub.s32 %v1887, %v1889
      %v1891 = vrot.slane %v1869, %v1890
      %v1893 = vunpack.c.l.s4 1966171168
      %v1894 = vunpack.c.0.s8 %v1893
      %v1895 = vlaneseq
      %v1896 = vshrl.u32 %v1895, 7
      %v1897 = vsub.s32 %v1894, %v1896
      %v1898 = vrot.slane %v1870, %v1897
      %v1899 = vcombine.high %v1877, %v1877
      %v1900 = vcombine.high %v1884, %v1884
      %v1901 = vcombine.high %v1891, %v1891
      %v1902 = vcombine.high %v1898, %v1898
      %v1903 = vcombine.high %v1512, %v1512
      %v1905 = vunpack.c.l.s4 1966171168
      %v1906 = vunpack.c.0.s8 %v1905
      %v1907 = vlaneseq
      %v1908 = vshrl.u32 %v1907, 7
      %v1909 = vsub.s32 %v1906, %v1908
      %v1910 = vrot.slane %v1512, %v1909
      %v1912 = vunpack.c.l.s4 1966171168
      %v1913 = vunpack.c.0.s8 %v1912
      %v1914 = vlaneseq
      %v1915 = vshrl.u32 %v1914, 7
      %v1916 = vsub.s32 %v1913, %v1915
      %v1917 = vrot.slane %v1903, %v1916
      %v1918 = vcombine.high %v1910, %v1910
      %v1919 = vcombine.high %v1917, %v1917
      %v1921 = vunpack.c.l.s4 1966171168
      %v1922 = vunpack.c.0.s8 %v1921
      %v1923 = vlaneseq
      %v1924 = vshrl.u32 %v1923, 7
      %v1925 = vsub.s32 %v1922, %v1924
      %v1926 = vrot.slane %v1910, %v1925
      %v1928 = vunpack.c.l.s4 1966171168
      %v1929 = vunpack.c.0.s8 %v1928
      %v1930 = vlaneseq
      %v1931 = vshrl.u32 %v1930, 7
      %v1932 = vsub.s32 %v1929, %v1931
      %v1933 = vrot.slane %v1917, %v1932
      %v1935 = vunpack.c.l.s4 1966171168
      %v1936 = vunpack.c.0.s8 %v1935
      %v1937 = vlaneseq
      %v1938 = vshrl.u32 %v1937, 7
      %v1939 = vsub.s32 %v1936, %v1938
      %v1940 = vrot.slane %v1918, %v1939
      %v1942 = vunpack.c.l.s4 1966171168
      %v1943 = vunpack.c.0.s8 %v1942
      %v1944 = vlaneseq
      %v1945 = vshrl.u32 %v1944, 7
      %v1946 = vsub.s32 %v1943, %v1945
      %v1947 = vrot.slane %v1919, %v1946
      %v1948 = vcombine.high %v1926, %v1926
      %v1949 = vcombine.high %v1933, %v1933
      %v1950 = vcombine.high %v1940, %v1940
      %v1951 = vcombine.high %v1947, %v1947
      %v1952 = vcombine.high %v1517, %v1517
      %v1954 = vunpack.c.l.s4 1966171168
      %v1955 = vunpack.c.0.s8 %v1954
      %v1956 = vlaneseq
      %v1957 = vshrl.u32 %v1956, 7
      %v1958 = vsub.s32 %v1955, %v1957
      %v1959 = vrot.slane %v1517, %v1958
      %v1961 = vunpack.c.l.s4 1966171168
      %v1962 = vunpack.c.0.s8 %v1961
      %v1963 = vlaneseq
      %v1964 = vshrl.u32 %v1963, 7
      %v1965 = vsub.s32 %v1962, %v1964
      %v1966 = vrot.slane %v1952, %v1965
      %v1967 = vcombine.high %v1959, %v1959
      %v1968 = vcombine.high %v1966, %v1966
      %v1970 = vunpack.c.l.s4 1966171168
      %v1971 = vunpack.c.0.s8 %v1970
      %v1972 = vlaneseq
      %v1973 = vshrl.u32 %v1972, 7
      %v1974 = vsub.s32 %v1971, %v1973
      %v1975 = vrot.slane %v1959, %v1974
      %v1977 = vunpack.c.l.s4 1966171168
      %v1978 = vunpack.c.0.s8 %v1977
      %v1979 = vlaneseq
      %v1980 = vshrl.u32 %v1979, 7
      %v1981 = vsub.s32 %v1978, %v1980
      %v1982 = vrot.slane %v1966, %v1981
      %v1984 = vunpack.c.l.s4 1966171168
      %v1985 = vunpack.c.0.s8 %v1984
      %v1986 = vlaneseq
      %v1987 = vshrl.u32 %v1986, 7
      %v1988 = vsub.s32 %v1985, %v1987
      %v1989 = vrot.slane %v1967, %v1988
      %v1991 = vunpack.c.l.s4 1966171168
      %v1992 = vunpack.c.0.s8 %v1991
      %v1993 = vlaneseq
      %v1994 = vshrl.u32 %v1993, 7
      %v1995 = vsub.s32 %v1992, %v1994
      %v1996 = vrot.slane %v1968, %v1995
      %v1997 = vcombine.high %v1975, %v1975
      %v1998 = vcombine.high %v1982, %v1982
      %v1999 = vcombine.high %v1989, %v1989
      %v2000 = vcombine.high %v1996, %v1996
      %v2001 = vcombine.high %v1522, %v1522
      %v2003 = vunpack.c.l.s4 1966171168
      %v2004 = vunpack.c.0.s8 %v2003
      %v2005 = vlaneseq
      %v2006 = vshrl.u32 %v2005, 7
      %v2007 = vsub.s32 %v2004, %v2006
      %v2008 = vrot.slane %v1522, %v2007
      %v2010 = vunpack.c.l.s4 1966171168
      %v2011 = vunpack.c.0.s8 %v2010
      %v2012 = vlaneseq
      %v2013 = vshrl.u32 %v2012, 7
      %v2014 = vsub.s32 %v2011, %v2013
      %v2015 = vrot.slane %v2001, %v2014
      %v2016 = vcombine.high %v2008, %v2008
      %v2017 = vcombine.high %v2015, %v2015
      %v2019 = vunpack.c.l.s4 1966171168
      %v2020 = vunpack.c.0.s8 %v2019
      %v2021 = vlaneseq
      %v2022 = vshrl.u32 %v2021, 7
      %v2023 = vsub.s32 %v2020, %v2022
      %v2024 = vrot.slane %v2008, %v2023
      %v2026 = vunpack.c.l.s4 1966171168
      %v2027 = vunpack.c.0.s8 %v2026
      %v2028 = vlaneseq
      %v2029 = vshrl.u32 %v2028, 7
      %v2030 = vsub.s32 %v2027, %v2029
      %v2031 = vrot.slane %v2015, %v2030
      %v2033 = vunpack.c.l.s4 1966171168
      %v2034 = vunpack.c.0.s8 %v2033
      %v2035 = vlaneseq
      %v2036 = vshrl.u32 %v2035, 7
      %v2037 = vsub.s32 %v2034, %v2036
      %v2038 = vrot.slane %v2016, %v2037
      %v2040 = vunpack.c.l.s4 1966171168
      %v2041 = vunpack.c.0.s8 %v2040
      %v2042 = vlaneseq
      %v2043 = vshrl.u32 %v2042, 7
      %v2044 = vsub.s32 %v2041, %v2043
      %v2045 = vrot.slane %v2017, %v2044
      %v2046 = vcombine.high %v2024, %v2024
      %v2047 = vcombine.high %v2031, %v2031
      %v2048 = vcombine.high %v2038, %v2038
      %v2049 = vcombine.high %v2045, %v2045
      %v2050 = vcombine.high %v1527, %v1527
      %v2052 = vunpack.c.l.s4 1966171168
      %v2053 = vunpack.c.0.s8 %v2052
      %v2054 = vlaneseq
      %v2055 = vshrl.u32 %v2054, 7
      %v2056 = vsub.s32 %v2053, %v2055
      %v2057 = vrot.slane %v1527, %v2056
      %v2059 = vunpack.c.l.s4 1966171168
      %v2060 = vunpack.c.0.s8 %v2059
      %v2061 = vlaneseq
      %v2062 = vshrl.u32 %v2061, 7
      %v2063 = vsub.s32 %v2060, %v2062
      %v2064 = vrot.slane %v2050, %v2063
      %v2065 = vcombine.high %v2057, %v2057
      %v2066 = vcombine.high %v2064, %v2064
      %v2068 = vunpack.c.l.s4 1966171168
      %v2069 = vunpack.c.0.s8 %v2068
      %v2070 = vlaneseq
      %v2071 = vshrl.u32 %v2070, 7
      %v2072 = vsub.s32 %v2069, %v2071
      %v2073 = vrot.slane %v2057, %v2072
      %v2075 = vunpack.c.l.s4 1966171168
      %v2076 = vunpack.c.0.s8 %v2075
      %v2077 = vlaneseq
      %v2078 = vshrl.u32 %v2077, 7
      %v2079 = vsub.s32 %v2076, %v2078
      %v2080 = vrot.slane %v2064, %v2079
      %v2082 = vunpack.c.l.s4 1966171168
      %v2083 = vunpack.c.0.s8 %v2082
      %v2084 = vlaneseq
      %v2085 = vshrl.u32 %v2084, 7
      %v2086 = vsub.s32 %v2083, %v2085
      %v2087 = vrot.slane %v2065, %v2086
      %v2089 = vunpack.c.l.s4 1966171168
      %v2090 = vunpack.c.0.s8 %v2089
      %v2091 = vlaneseq
      %v2092 = vshrl.u32 %v2091, 7
      %v2093 = vsub.s32 %v2090, %v2092
      %v2094 = vrot.slane %v2066, %v2093
      %v2095 = vcombine.high %v2073, %v2073
      %v2096 = vcombine.high %v2080, %v2080
      %v2097 = vcombine.high %v2087, %v2087
      %v2098 = vcombine.high %v2094, %v2094
      %v2099 = vlaneseq
      %v2100 = vshrl.u32 %v2099, 7
      %v2101 = vsub.s32 0, %v2100
      %v2102 = vrot.slane %v1681, %v2101
      %v2103 = vlaneseq
      %v2104 = vshrl.u32 %v2103, 7
      %v2105 = vsub.s32 0, %v2104
      %v2106 = vrot.slane %v1695, %v2105
      %v2107 = vlaneseq
      %v2108 = vshrl.u32 %v2107, 7
      %v2109 = vsub.s32 0, %v2108
      %v2110 = vrot.slane %v1703, %v2109
      %v2111 = vlaneseq
      %v2112 = vshrl.u32 %v2111, 7
      %v2113 = vsub.s32 0, %v2112
      %v2114 = vrot.slane %v1705, %v2113
      %v2115 = vlaneseq
      %v2116 = vshrl.u32 %v2115, 7
      %v2117 = vsub.s32 0, %v2116
      %v2118 = vrot.slane %v1688, %v2117
      %v2119 = vlaneseq
      %v2120 = vshrl.u32 %v2119, 7
      %v2121 = vsub.s32 0, %v2120
      %v2122 = vrot.slane %v1702, %v2121
      %v2123 = vlaneseq
      %v2124 = vshrl.u32 %v2123, 7
      %v2125 = vsub.s32 0, %v2124
      %v2126 = vrot.slane %v1704, %v2125
      %v2127 = vlaneseq
      %v2128 = vshrl.u32 %v2127, 7
      %v2129 = vsub.s32 0, %v2128
      %v2130 = vrot.slane %v1706, %v2129
      %v2131 = vlaneseq
      %v2132 = vshrl.u32 %v2131, 7
      %v2133 = vsub.s32 0, %v2132
      %v2134 = vrot.slane %v1730, %v2133
      %v2135 = vlaneseq
      %v2136 = vshrl.u32 %v2135, 7
      %v2137 = vsub.s32 0, %v2136
      %v2138 = vrot.slane %v1744, %v2137
      %v2139 = vlaneseq
      %v2140 = vshrl.u32 %v2139, 7
      %v2141 = vsub.s32 0, %v2140
      %v2142 = vrot.slane %v1752, %v2141
      %v2143 = vlaneseq
      %v2144 = vshrl.u32 %v2143, 7
      %v2145 = vsub.s32 0, %v2144
      %v2146 = vrot.slane %v1754, %v2145
      %v2147 = vlaneseq
      %v2148 = vshrl.u32 %v2147, 7
      %v2149 = vsub.s32 0, %v2148
      %v2150 = vrot.slane %v1737, %v2149
      %v2151 = vlaneseq
      %v2152 = vshrl.u32 %v2151, 7
      %v2153 = vsub.s32 0, %v2152
      %v2154 = vrot.slane %v1751, %v2153
      %v2155 = vlaneseq
      %v2156 = vshrl.u32 %v2155, 7
      %v2157 = vsub.s32 0, %v2156
      %v2158 = vrot.slane %v1753, %v2157
      %v2159 = vlaneseq
      %v2160 = vshrl.u32 %v2159, 7
      %v2161 = vsub.s32 0, %v2160
      %v2162 = vrot.slane %v1755, %v2161
      %v2163 = vlaneseq
      %v2164 = vshrl.u32 %v2163, 7
      %v2165 = vsub.s32 0, %v2164
      %v2166 = vrot.slane %v1779, %v2165
      %v2167 = vlaneseq
      %v2168 = vshrl.u32 %v2167, 7
      %v2169 = vsub.s32 0, %v2168
      %v2170 = vrot.slane %v1793, %v2169
      %v2171 = vlaneseq
      %v2172 = vshrl.u32 %v2171, 7
      %v2173 = vsub.s32 0, %v2172
      %v2174 = vrot.slane %v1801, %v2173
      %v2175 = vlaneseq
      %v2176 = vshrl.u32 %v2175, 7
      %v2177 = vsub.s32 0, %v2176
      %v2178 = vrot.slane %v1803, %v2177
      %v2179 = vlaneseq
      %v2180 = vshrl.u32 %v2179, 7
      %v2181 = vsub.s32 0, %v2180
      %v2182 = vrot.slane %v1786, %v2181
      %v2183 = vlaneseq
      %v2184 = vshrl.u32 %v2183, 7
      %v2185 = vsub.s32 0, %v2184
      %v2186 = vrot.slane %v1800, %v2185
      %v2187 = vlaneseq
      %v2188 = vshrl.u32 %v2187, 7
      %v2189 = vsub.s32 0, %v2188
      %v2190 = vrot.slane %v1802, %v2189
      %v2191 = vlaneseq
      %v2192 = vshrl.u32 %v2191, 7
      %v2193 = vsub.s32 0, %v2192
      %v2194 = vrot.slane %v1804, %v2193
      %v2195 = vlaneseq
      %v2196 = vshrl.u32 %v2195, 7
      %v2197 = vsub.s32 0, %v2196
      %v2198 = vrot.slane %v1828, %v2197
      %v2199 = vlaneseq
      %v2200 = vshrl.u32 %v2199, 7
      %v2201 = vsub.s32 0, %v2200
      %v2202 = vrot.slane %v1842, %v2201
      %v2203 = vlaneseq
      %v2204 = vshrl.u32 %v2203, 7
      %v2205 = vsub.s32 0, %v2204
      %v2206 = vrot.slane %v1850, %v2205
      %v2207 = vlaneseq
      %v2208 = vshrl.u32 %v2207, 7
      %v2209 = vsub.s32 0, %v2208
      %v2210 = vrot.slane %v1852, %v2209
      %v2211 = vlaneseq
      %v2212 = vshrl.u32 %v2211, 7
      %v2213 = vsub.s32 0, %v2212
      %v2214 = vrot.slane %v1835, %v2213
      %v2215 = vlaneseq
      %v2216 = vshrl.u32 %v2215, 7
      %v2217 = vsub.s32 0, %v2216
      %v2218 = vrot.slane %v1849, %v2217
      %v2219 = vlaneseq
      %v2220 = vshrl.u32 %v2219, 7
      %v2221 = vsub.s32 0, %v2220
      %v2222 = vrot.slane %v1851, %v2221
      %v2223 = vlaneseq
      %v2224 = vshrl.u32 %v2223, 7
      %v2225 = vsub.s32 0, %v2224
      %v2226 = vrot.slane %v1853, %v2225
      %v2227 = vlaneseq
      %v2228 = vshrl.u32 %v2227, 7
      %v2229 = vsub.s32 0, %v2228
      %v2230 = vrot.slane %v1877, %v2229
      %v2231 = vlaneseq
      %v2232 = vshrl.u32 %v2231, 7
      %v2233 = vsub.s32 0, %v2232
      %v2234 = vrot.slane %v1891, %v2233
      %v2235 = vlaneseq
      %v2236 = vshrl.u32 %v2235, 7
      %v2237 = vsub.s32 0, %v2236
      %v2238 = vrot.slane %v1899, %v2237
      %v2239 = vlaneseq
      %v2240 = vshrl.u32 %v2239, 7
      %v2241 = vsub.s32 0, %v2240
      %v2242 = vrot.slane %v1901, %v2241
      %v2243 = vlaneseq
      %v2244 = vshrl.u32 %v2243, 7
      %v2245 = vsub.s32 0, %v2244
      %v2246 = vrot.slane %v1884, %v2245
      %v2247 = vlaneseq
      %v2248 = vshrl.u32 %v2247, 7
      %v2249 = vsub.s32 0, %v2248
      %v2250 = vrot.slane %v1898, %v2249
      %v2251 = vlaneseq
      %v2252 = vshrl.u32 %v2251, 7
      %v2253 = vsub.s32 0, %v2252
      %v2254 = vrot.slane %v1900, %v2253
      %v2255 = vlaneseq
      %v2256 = vshrl.u32 %v2255, 7
      %v2257 = vsub.s32 0, %v2256
      %v2258 = vrot.slane %v1902, %v2257
      %v2259 = vlaneseq
      %v2260 = vshrl.u32 %v2259, 7
      %v2261 = vsub.s32 0, %v2260
      %v2262 = vrot.slane %v1926, %v2261
      %v2263 = vlaneseq
      %v2264 = vshrl.u32 %v2263, 7
      %v2265 = vsub.s32 0, %v2264
      %v2266 = vrot.slane %v1940, %v2265
      %v2267 = vlaneseq
      %v2268 = vshrl.u32 %v2267, 7
      %v2269 = vsub.s32 0, %v2268
      %v2270 = vrot.slane %v1948, %v2269
      %v2271 = vlaneseq
      %v2272 = vshrl.u32 %v2271, 7
      %v2273 = vsub.s32 0, %v2272
      %v2274 = vrot.slane %v1950, %v2273
      %v2275 = vlaneseq
      %v2276 = vshrl.u32 %v2275, 7
      %v2277 = vsub.s32 0, %v2276
      %v2278 = vrot.slane %v1933, %v2277
      %v2279 = vlaneseq
      %v2280 = vshrl.u32 %v2279, 7
      %v2281 = vsub.s32 0, %v2280
      %v2282 = vrot.slane %v1947, %v2281
      %v2283 = vlaneseq
      %v2284 = vshrl.u32 %v2283, 7
      %v2285 = vsub.s32 0, %v2284
      %v2286 = vrot.slane %v1949, %v2285
      %v2287 = vlaneseq
      %v2288 = vshrl.u32 %v2287, 7
      %v2289 = vsub.s32 0, %v2288
      %v2290 = vrot.slane %v1951, %v2289
      %v2291 = vlaneseq
      %v2292 = vshrl.u32 %v2291, 7
      %v2293 = vsub.s32 0, %v2292
      %v2294 = vrot.slane %v1975, %v2293
      %v2295 = vlaneseq
      %v2296 = vshrl.u32 %v2295, 7
      %v2297 = vsub.s32 0, %v2296
      %v2298 = vrot.slane %v1989, %v2297
      %v2299 = vlaneseq
      %v2300 = vshrl.u32 %v2299, 7
      %v2301 = vsub.s32 0, %v2300
      %v2302 = vrot.slane %v1997, %v2301
      %v2303 = vlaneseq
      %v2304 = vshrl.u32 %v2303, 7
      %v2305 = vsub.s32 0, %v2304
      %v2306 = vrot.slane %v1999, %v2305
      %v2307 = vlaneseq
      %v2308 = vshrl.u32 %v2307, 7
      %v2309 = vsub.s32 0, %v2308
      %v2310 = vrot.slane %v1982, %v2309
      %v2311 = vlaneseq
      %v2312 = vshrl.u32 %v2311, 7
      %v2313 = vsub.s32 0, %v2312
      %v2314 = vrot.slane %v1996, %v2313
      %v2315 = vlaneseq
      %v2316 = vshrl.u32 %v2315, 7
      %v2317 = vsub.s32 0, %v2316
      %v2318 = vrot.slane %v1998, %v2317
      %v2319 = vlaneseq
      %v2320 = vshrl.u32 %v2319, 7
      %v2321 = vsub.s32 0, %v2320
      %v2322 = vrot.slane %v2000, %v2321
      %v2323 = vlaneseq
      %v2324 = vshrl.u32 %v2323, 7
      %v2325 = vsub.s32 0, %v2324
      %v2326 = vrot.slane %v2024, %v2325
      %v2327 = vlaneseq
      %v2328 = vshrl.u32 %v2327, 7
      %v2329 = vsub.s32 0, %v2328
      %v2330 = vrot.slane %v2038, %v2329
      %v2331 = vlaneseq
      %v2332 = vshrl.u32 %v2331, 7
      %v2333 = vsub.s32 0, %v2332
      %v2334 = vrot.slane %v2046, %v2333
      %v2335 = vlaneseq
      %v2336 = vshrl.u32 %v2335, 7
      %v2337 = vsub.s32 0, %v2336
      %v2338 = vrot.slane %v2048, %v2337
      %v2339 = vlaneseq
      %v2340 = vshrl.u32 %v2339, 7
      %v2341 = vsub.s32 0, %v2340
      %v2342 = vrot.slane %v2031, %v2341
      %v2343 = vlaneseq
      %v2344 = vshrl.u32 %v2343, 7
      %v2345 = vsub.s32 0, %v2344
      %v2346 = vrot.slane %v2045, %v2345
      %v2347 = vlaneseq
      %v2348 = vshrl.u32 %v2347, 7
      %v2349 = vsub.s32 0, %v2348
      %v2350 = vrot.slane %v2047, %v2349
      %v2351 = vlaneseq
      %v2352 = vshrl.u32 %v2351, 7
      %v2353 = vsub.s32 0, %v2352
      %v2354 = vrot.slane %v2049, %v2353
      %v2355 = vlaneseq
      %v2356 = vshrl.u32 %v2355, 7
      %v2357 = vsub.s32 0, %v2356
      %v2358 = vrot.slane %v2073, %v2357
      %v2359 = vlaneseq
      %v2360 = vshrl.u32 %v2359, 7
      %v2361 = vsub.s32 0, %v2360
      %v2362 = vrot.slane %v2087, %v2361
      %v2363 = vlaneseq
      %v2364 = vshrl.u32 %v2363, 7
      %v2365 = vsub.s32 0, %v2364
      %v2366 = vrot.slane %v2095, %v2365
      %v2367 = vlaneseq
      %v2368 = vshrl.u32 %v2367, 7
      %v2369 = vsub.s32 0, %v2368
      %v2370 = vrot.slane %v2097, %v2369
      %v2371 = vlaneseq
      %v2372 = vshrl.u32 %v2371, 7
      %v2373 = vsub.s32 0, %v2372
      %v2374 = vrot.slane %v2080, %v2373
      %v2375 = vlaneseq
      %v2376 = vshrl.u32 %v2375, 7
      %v2377 = vsub.s32 0, %v2376
      %v2378 = vrot.slane %v2094, %v2377
      %v2379 = vlaneseq
      %v2380 = vshrl.u32 %v2379, 7
      %v2381 = vsub.s32 0, %v2380
      %v2382 = vrot.slane %v2096, %v2381
      %v2383 = vlaneseq
      %v2384 = vshrl.u32 %v2383, 7
      %v2385 = vsub.s32 0, %v2384
      %v2386 = vrot.slane %v2098, %v2385
      %v2459 = vadd.f32 %v1641, %v2102
      %v2460 = vadd.f32 %v1642, %v2106
      %v2461 = vadd.f32 %v1643, %v2110
      %v2462 = vadd.f32 %v1644, %v2114
      %v2463 = vadd.f32 %v1645, %v2118
      %v2464 = vadd.f32 %v1646, %v2122
      %v2465 = vadd.f32 %v1647, %v2126
      %v2466 = vadd.f32 %v1648, %v2130
      %v2467 = vadd.f32 %v1640, %v2134
      %v2468 = vadd.f32 %v1642, %v2138
      %v2469 = vadd.f32 %v1643, %v2142
      %v2470 = vadd.f32 %v1644, %v2146
      %v2471 = vadd.f32 %v1645, %v2150
      %v2472 = vadd.f32 %v1646, %v2154
      %v2473 = vadd.f32 %v1647, %v2158
      %v2474 = vadd.f32 %v1648, %v2162
      %v2475 = vadd.f32 %v1640, %v2166
      %v2476 = vadd.f32 %v1641, %v2170
      %v2477 = vadd.f32 %v1643, %v2174
      %v2478 = vadd.f32 %v1644, %v2178
      %v2479 = vadd.f32 %v1645, %v2182
      %v2480 = vadd.f32 %v1646, %v2186
      %v2481 = vadd.f32 %v1647, %v2190
      %v2482 = vadd.f32 %v1648, %v2194
      %v2483 = vadd.f32 %v1640, %v2198
      %v2484 = vadd.f32 %v1641, %v2202
      %v2485 = vadd.f32 %v1642, %v2206
      %v2486 = vadd.f32 %v1644, %v2210
      %v2487 = vadd.f32 %v1645, %v2214
      %v2488 = vadd.f32 %v1646, %v2218
      %v2489 = vadd.f32 %v1647, %v2222
      %v2490 = vadd.f32 %v1648, %v2226
      %v2491 = vadd.f32 %v1640, %v2230
      %v2492 = vadd.f32 %v1641, %v2234
      %v2493 = vadd.f32 %v1642, %v2238
      %v2494 = vadd.f32 %v1643, %v2242
      %v2495 = vadd.f32 %v1645, %v2246
      %v2496 = vadd.f32 %v1646, %v2250
      %v2497 = vadd.f32 %v1647, %v2254
      %v2498 = vadd.f32 %v1648, %v2258
      %v2499 = vadd.f32 %v1640, %v2262
      %v2500 = vadd.f32 %v1641, %v2266
      %v2501 = vadd.f32 %v1642, %v2270
      %v2502 = vadd.f32 %v1643, %v2274
      %v2503 = vadd.f32 %v1644, %v2278
      %v2504 = vadd.f32 %v1646, %v2282
      %v2505 = vadd.f32 %v1647, %v2286
      %v2506 = vadd.f32 %v1648, %v2290
      %v2507 = vadd.f32 %v1640, %v2294
      %v2508 = vadd.f32 %v1641, %v2298
      %v2509 = vadd.f32 %v1642, %v2302
      %v2510 = vadd.f32 %v1643, %v2306
      %v2511 = vadd.f32 %v1644, %v2310
      %v2512 = vadd.f32 %v1645, %v2314
      %v2513 = vadd.f32 %v1647, %v2318
      %v2514 = vadd.f32 %v1648, %v2322
      %v2515 = vadd.f32 %v1640, %v2326
      %v2516 = vadd.f32 %v1641, %v2330
      %v2517 = vadd.f32 %v1642, %v2334
      %v2518 = vadd.f32 %v1643, %v2338
      %v2519 = vadd.f32 %v1644, %v2342
      %v2520 = vadd.f32 %v1645, %v2346
      %v2521 = vadd.f32 %v1646, %v2350
      %v2522 = vadd.f32 %v1648, %v2354
      %v2523 = vadd.f32 %v1640, %v2358
      %v2524 = vadd.f32 %v1641, %v2362
      %v2525 = vadd.f32 %v1642, %v2366
      %v2526 = vadd.f32 %v1643, %v2370
      %v2527 = vadd.f32 %v1644, %v2374
      %v2528 = vadd.f32 %v1645, %v2378
      %v2529 = vadd.f32 %v1646, %v2382
      %v2530 = vadd.f32 %v1647, %v2386
      %v2531 = vmax.f32 %v2459, 0.0
      %v2532 = vmax.f32 %v2460, 0.0
      %v2533 = vmax.f32 %v2461, 0.0
      %v2534 = vmax.f32 %v2462, 0.0
      %v2535 = vmax.f32 %v2463, 0.0
      %v2536 = vmax.f32 %v2464, 0.0
      %v2537 = vmax.f32 %v2465, 0.0
      %v2538 = vmax.f32 %v2466, 0.0
      %v2539 = vmax.f32 %v2467, 0.0
      %v2540 = vmax.f32 %v2468, 0.0
      %v2541 = vmax.f32 %v2469, 0.0
      %v2542 = vmax.f32 %v2470, 0.0
      %v2543 = vmax.f32 %v2471, 0.0
      %v2544 = vmax.f32 %v2472, 0.0
      %v2545 = vmax.f32 %v2473, 0.0
      %v2546 = vmax.f32 %v2474, 0.0
      %v2547 = vmax.f32 %v2475, 0.0
      %v2548 = vmax.f32 %v2476, 0.0
      %v2549 = vmax.f32 %v2477, 0.0
      %v2550 = vmax.f32 %v2478, 0.0
      %v2551 = vmax.f32 %v2479, 0.0
      %v2552 = vmax.f32 %v2480, 0.0
      %v2553 = vmax.f32 %v2481, 0.0
      %v2554 = vmax.f32 %v2482, 0.0
      %v2555 = vmax.f32 %v2483, 0.0
      %v2556 = vmax.f32 %v2484, 0.0
      %v2557 = vmax.f32 %v2485, 0.0
      %v2558 = vmax.f32 %v2486, 0.0
      %v2559 = vmax.f32 %v2487, 0.0
      %v2560 = vmax.f32 %v2488, 0.0
      %v2561 = vmax.f32 %v2489, 0.0
      %v2562 = vmax.f32 %v2490, 0.0
      %v2563 = vmax.f32 %v2491, 0.0
      %v2564 = vmax.f32 %v2492, 0.0
      %v2565 = vmax.f32 %v2493, 0.0
      %v2566 = vmax.f32 %v2494, 0.0
      %v2567 = vmax.f32 %v2495, 0.0
      %v2568 = vmax.f32 %v2496, 0.0
      %v2569 = vmax.f32 %v2497, 0.0
      %v2570 = vmax.f32 %v2498, 0.0
      %v2571 = vmax.f32 %v2499, 0.0
      %v2572 = vmax.f32 %v2500, 0.0
      %v2573 = vmax.f32 %v2501, 0.0
      %v2574 = vmax.f32 %v2502, 0.0
      %v2575 = vmax.f32 %v2503, 0.0
      %v2576 = vmax.f32 %v2504, 0.0
      %v2577 = vmax.f32 %v2505, 0.0
      %v2578 = vmax.f32 %v2506, 0.0
      %v2579 = vmax.f32 %v2507, 0.0
      %v2580 = vmax.f32 %v2508, 0.0
      %v2581 = vmax.f32 %v2509, 0.0
      %v2582 = vmax.f32 %v2510, 0.0
      %v2583 = vmax.f32 %v2511, 0.0
      %v2584 = vmax.f32 %v2512, 0.0
      %v2585 = vmax.f32 %v2513, 0.0
      %v2586 = vmax.f32 %v2514, 0.0
      %v2587 = vmax.f32 %v2515, 0.0
      %v2588 = vmax.f32 %v2516, 0.0
      %v2589 = vmax.f32 %v2517, 0.0
      %v2590 = vmax.f32 %v2518, 0.0
      %v2591 = vmax.f32 %v2519, 0.0
      %v2592 = vmax.f32 %v2520, 0.0
      %v2593 = vmax.f32 %v2521, 0.0
      %v2594 = vmax.f32 %v2522, 0.0
      %v2595 = vmax.f32 %v2523, 0.0
      %v2596 = vmax.f32 %v2524, 0.0
      %v2597 = vmax.f32 %v2525, 0.0
      %v2598 = vmax.f32 %v2526, 0.0
      %v2599 = vmax.f32 %v2527, 0.0
      %v2600 = vmax.f32 %v2528, 0.0
      %v2601 = vmax.f32 %v2529, 0.0
      %v2602 = vmax.f32 %v2530, 0.0
      %v2603 = vpack.c.bf16 %v2532, %v2531
      %v2604 = vpack.c.bf16 %v2534, %v2533
      %v2605 = vpack.c.bf16 %v2536, %v2535
      %v2606 = vpack.c.bf16 %v2538, %v2537
      %v2607 = vpack.c.bf16 %v2540, %v2539
      %v2608 = vpack.c.bf16 %v2542, %v2541
      %v2609 = vpack.c.bf16 %v2544, %v2543
      %v2610 = vpack.c.bf16 %v2546, %v2545
      %v2611 = vpack.c.bf16 %v2548, %v2547
      %v2612 = vpack.c.bf16 %v2550, %v2549
      %v2613 = vpack.c.bf16 %v2552, %v2551
      %v2614 = vpack.c.bf16 %v2554, %v2553
      %v2615 = vpack.c.bf16 %v2556, %v2555
      %v2616 = vpack.c.bf16 %v2558, %v2557
      %v2617 = vpack.c.bf16 %v2560, %v2559
      %v2618 = vpack.c.bf16 %v2562, %v2561
      %v2619 = vpack.c.bf16 %v2564, %v2563
      %v2620 = vpack.c.bf16 %v2566, %v2565
      %v2621 = vpack.c.bf16 %v2568, %v2567
      %v2622 = vpack.c.bf16 %v2570, %v2569
      %v2623 = vpack.c.bf16 %v2572, %v2571
      %v2624 = vpack.c.bf16 %v2574, %v2573
      %v2625 = vpack.c.bf16 %v2576, %v2575
      %v2626 = vpack.c.bf16 %v2578, %v2577
      %v2627 = vpack.c.bf16 %v2580, %v2579
      %v2628 = vpack.c.bf16 %v2582, %v2581
      %v2629 = vpack.c.bf16 %v2584, %v2583
      %v2630 = vpack.c.bf16 %v2586, %v2585
      %v2631 = vpack.c.bf16 %v2588, %v2587
      %v2632 = vpack.c.bf16 %v2590, %v2589
      %v2633 = vpack.c.bf16 %v2592, %v2591
      %v2634 = vpack.c.bf16 %v2594, %v2593
      %v2635 = vpack.c.bf16 %v2596, %v2595
      %v2636 = vpack.c.bf16 %v2598, %v2597
      %v2637 = vpack.c.bf16 %v2600, %v2599
      %v2638 = vpack.c.bf16 %v2602, %v2601
      %v2639 = vunpack.c.l.bf16 %v278
      %v2640 = vlaneseq
      %v2641 = vshrl.u32 %v2640, 7
      %v2642 = vsub.s32 0, %v2641
      %v2643 = vrot.slane %v2639, %v2642
      %v2648 = vunpack.c.l.b16 %v274
      %v2649 = vunpack.c.l.b16 %v275
      %v2650 = vunpack.c.l.b16 %v276
      %v2651 = vunpack.c.l.b16 %v277
      %v2652 = vpack.c.b16 %v2649, %v2648
      %v2653 = vpack.c.b16 %v2651, %v2650
      %v2657 = vsel %vm370, %v2603, 0
      %v2660 = vsel %vm370, %v2604, 0
      %v2663 = vsel %vm370, %v2605, 0
      %v2666 = vsel %vm370, %v2606, 0
      %v2669 = vsel %vm370, %v2607, 0
      %v2672 = vsel %vm370, %v2608, 0
      %v2675 = vsel %vm370, %v2609, 0
      %v2678 = vsel %vm370, %v2610, 0
      %v2681 = vsel %vm370, %v2611, 0
      %v2684 = vsel %vm370, %v2612, 0
      %v2687 = vsel %vm370, %v2613, 0
      %v2690 = vsel %vm370, %v2614, 0
      %v2693 = vsel %vm370, %v2615, 0
      %v2696 = vsel %vm370, %v2616, 0
      %v2699 = vsel %vm370, %v2617, 0
      %v2702 = vsel %vm370, %v2618, 0
      %v2705 = vsel %vm370, %v2619, 0
      %v2708 = vsel %vm370, %v2620, 0
      %v2711 = vsel %vm370, %v2621, 0
      %v2714 = vsel %vm370, %v2622, 0
      %v2717 = vsel %vm370, %v2623, 0
      %v2720 = vsel %vm370, %v2624, 0
      %v2723 = vsel %vm370, %v2625, 0
      %v2726 = vsel %vm370, %v2626, 0
      %v2729 = vsel %vm370, %v2627, 0
      %v2732 = vsel %vm370, %v2628, 0
      %v2735 = vsel %vm370, %v2629, 0
      %v2738 = vsel %vm370, %v2630, 0
      %v2741 = vsel %vm370, %v2631, 0
      %v2744 = vsel %vm370, %v2632, 0
      %v2747 = vsel %vm370, %v2633, 0
      %v2750 = vsel %vm370, %v2634, 0
      %v2753 = vsel %vm370, %v2635, 0
      %v2756 = vsel %vm370, %v2636, 0
      %v2759 = vsel %vm370, %v2637, 0
      %v2762 = vsel %vm370, %v2638, 0
      %2764 = vmatprep.subr.bf16.mxu0 0
      %2765 = vmatpush1.bf16.msra.mxu0 %v2652
      %2766 = vmatprep.subr.bf16.mxu0 0
      %2767 = vmatpush1.bf16.msra.mxu0 %v2653
      %2768 = vmatprep.subr.bf16.mxu0 0
      %2769 = vmatpush1.bf16.msra.mxu0 0
      %2770 = vmatprep.subr.bf16.mxu0 0
      %2771 = vmatpush1.bf16.msra.mxu0 0
      %2772 = vmatprep.subr.bf16.mxu0 0
      %2773 = vmatpush1.bf16.msra.mxu0 0
      %2774 = vmatprep.subr.bf16.mxu0 0
      %2775 = vmatpush1.bf16.msra.mxu0 0
      %2776 = vmatprep.subr.bf16.mxu0 0
      %2777 = vmatpush1.bf16.msra.mxu0 0
      %2778 = vmatprep.subr.bf16.mxu0 0
      %2779 = vmatpush1.bf16.msra.mxu0 0
      %2780 = vmatprep.subr.bf16.mxu0 0
      %2781 = vmatpush1.bf16.msra.mxu0 0
      %2782 = vmatprep.subr.bf16.mxu0 0
      %2783 = vmatpush1.bf16.msra.mxu0 0
      %2784 = vmatprep.subr.bf16.mxu0 0
      %2785 = vmatpush1.bf16.msra.mxu0 0
      %2786 = vmatprep.subr.bf16.mxu0 0
      %2787 = vmatpush1.bf16.msra.mxu0 0
      %2788 = vmatprep.subr.bf16.mxu0 0
      %2789 = vmatpush1.bf16.msra.mxu0 0
      %2790 = vmatprep.subr.bf16.mxu0 0
      %2791 = vmatpush1.bf16.msra.mxu0 0
      %2792 = vmatprep.subr.bf16.mxu0 0
      %2793 = vmatpush1.bf16.msra.mxu0 0
      %2794 = vmatprep.subr.bf16.mxu0 0
      %2795 = vmatpush1.bf16.msra.mxu0 0
      %2796 = vmatprep.mubr.bf16.mxu0 0
      %2797 = vmatmul.mubr.bf16.gmra.mrb[0].mxu0 %v2657
      %v2798 = vpop.f32.mrb[0].mxu0
      %v2799 = vadd.f32 %v2643, %v2798
      %v2800 = vpop.f32.mrb[0].mxu0
      %v2801 = vpop.f32.mrb[0].mxu0
      %v2802 = vadd.f32 %v2643, %v2801
      %v2803 = vpop.f32.mrb[0].mxu0
      %2804 = vmatprep.mubr.bf16.mxu0 0
      %2805 = vmatmul.mubr.bf16.gmra.mrb[0].mxu0 %v2660
      %v2806 = vpop.f32.mrb[0].mxu0
      %v2807 = vadd.f32 %v2643, %v2806
      %v2808 = vpop.f32.mrb[0].mxu0
      %v2809 = vpop.f32.mrb[0].mxu0
      %v2810 = vadd.f32 %v2643, %v2809
      %v2811 = vpop.f32.mrb[0].mxu0
      %2812 = vmatprep.mubr.bf16.mxu0 0
      %2813 = vmatmul.mubr.bf16.gmra.mrb[0].mxu0 %v2663
      %v2814 = vpop.f32.mrb[0].mxu0
      %v2815 = vadd.f32 %v2643, %v2814
      %v2816 = vpop.f32.mrb[0].mxu0
      %v2817 = vpop.f32.mrb[0].mxu0
      %v2818 = vadd.f32 %v2643, %v2817
      %v2819 = vpop.f32.mrb[0].mxu0
      %2820 = vmatprep.mubr.bf16.mxu0 0
      %2821 = vmatmul.mubr.bf16.gmra.mrb[0].mxu0 %v2666
      %v2822 = vpop.f32.mrb[0].mxu0
      %v2823 = vadd.f32 %v2643, %v2822
      %v2824 = vpop.f32.mrb[0].mxu0
      %v2825 = vpop.f32.mrb[0].mxu0
      %v2826 = vadd.f32 %v2643, %v2825
      %v2827 = vpop.f32.mrb[0].mxu0
      %2828 = vmatprep.mubr.bf16.mxu0 0
      %2829 = vmatmul.mubr.bf16.gmra.mrb[0].mxu0 %v2669
      %v2830 = vpop.f32.mrb[0].mxu0
      %v2831 = vadd.f32 %v2643, %v2830
      %v2832 = vpop.f32.mrb[0].mxu0
      %v2833 = vpop.f32.mrb[0].mxu0
      %v2834 = vadd.f32 %v2643, %v2833
      %v2835 = vpop.f32.mrb[0].mxu0
      %2836 = vmatprep.mubr.bf16.mxu0 0
      %2837 = vmatmul.mubr.bf16.gmra.mrb[0].mxu0 %v2672
      %v2838 = vpop.f32.mrb[0].mxu0
      %v2839 = vadd.f32 %v2643, %v2838
      %v2840 = vpop.f32.mrb[0].mxu0
      %v2841 = vpop.f32.mrb[0].mxu0
      %v2842 = vadd.f32 %v2643, %v2841
      %v2843 = vpop.f32.mrb[0].mxu0
      %2844 = vmatprep.mubr.bf16.mxu0 0
      %2845 = vmatmul.mubr.bf16.gmra.mrb[0].mxu0 %v2675
      %v2846 = vpop.f32.mrb[0].mxu0
      %v2847 = vadd.f32 %v2643, %v2846
      %v2848 = vpop.f32.mrb[0].mxu0
      %v2849 = vpop.f32.mrb[0].mxu0
      %v2850 = vadd.f32 %v2643, %v2849
      %v2851 = vpop.f32.mrb[0].mxu0
      %2852 = vmatprep.mubr.bf16.mxu0 0
      %2853 = vmatmul.mubr.bf16.gmra.mrb[0].mxu0 %v2678
      %v2854 = vpop.f32.mrb[0].mxu0
      %v2855 = vadd.f32 %v2643, %v2854
      %v2856 = vpop.f32.mrb[0].mxu0
      %v2857 = vpop.f32.mrb[0].mxu0
      %v2858 = vadd.f32 %v2643, %v2857
      %v2859 = vpop.f32.mrb[0].mxu0
      %2860 = vmatprep.mubr.bf16.mxu0 0
      %2861 = vmatmul.mubr.bf16.gmra.mrb[0].mxu0 %v2681
      %v2862 = vpop.f32.mrb[0].mxu0
      %v2863 = vadd.f32 %v2643, %v2862
      %v2864 = vpop.f32.mrb[0].mxu0
      %v2865 = vpop.f32.mrb[0].mxu0
      %v2866 = vadd.f32 %v2643, %v2865
      %v2867 = vpop.f32.mrb[0].mxu0
      %2868 = vmatprep.mubr.bf16.mxu0 0
      %2869 = vmatmul.mubr.bf16.gmra.mrb[0].mxu0 %v2684
      %v2870 = vpop.f32.mrb[0].mxu0
      %v2871 = vadd.f32 %v2643, %v2870
      %v2872 = vpop.f32.mrb[0].mxu0
      %v2873 = vpop.f32.mrb[0].mxu0
      %v2874 = vadd.f32 %v2643, %v2873
      %v2875 = vpop.f32.mrb[0].mxu0
      %2876 = vmatprep.mubr.bf16.mxu0 0
      %2877 = vmatmul.mubr.bf16.gmra.mrb[0].mxu0 %v2687
      %v2878 = vpop.f32.mrb[0].mxu0
      %v2879 = vadd.f32 %v2643, %v2878
      %v2880 = vpop.f32.mrb[0].mxu0
      %v2881 = vpop.f32.mrb[0].mxu0
      %v2882 = vadd.f32 %v2643, %v2881
      %v2883 = vpop.f32.mrb[0].mxu0
      %2884 = vmatprep.mubr.bf16.mxu0 0
      %2885 = vmatmul.mubr.bf16.gmra.mrb[0].mxu0 %v2690
      %v2886 = vpop.f32.mrb[0].mxu0
      %v2887 = vadd.f32 %v2643, %v2886
      %v2888 = vpop.f32.mrb[0].mxu0
      %v2889 = vpop.f32.mrb[0].mxu0
      %v2890 = vadd.f32 %v2643, %v2889
      %v2891 = vpop.f32.mrb[0].mxu0
      %2892 = vmatprep.mubr.bf16.mxu0 0
      %2893 = vmatmul.mubr.bf16.gmra.mrb[0].mxu0 %v2693
      %v2894 = vpop.f32.mrb[0].mxu0
      %v2895 = vadd.f32 %v2643, %v2894
      %v2896 = vpop.f32.mrb[0].mxu0
      %v2897 = vpop.f32.mrb[0].mxu0
      %v2898 = vadd.f32 %v2643, %v2897
      %v2899 = vpop.f32.mrb[0].mxu0
      %2900 = vmatprep.mubr.bf16.mxu0 0
      %2901 = vmatmul.mubr.bf16.gmra.mrb[0].mxu0 %v2696
      %v2902 = vpop.f32.mrb[0].mxu0
      %v2903 = vadd.f32 %v2643, %v2902
      %v2904 = vpop.f32.mrb[0].mxu0
      %v2905 = vpop.f32.mrb[0].mxu0
      %v2906 = vadd.f32 %v2643, %v2905
      %v2907 = vpop.f32.mrb[0].mxu0
      %2908 = vmatprep.mubr.bf16.mxu0 0
      %2909 = vmatmul.mubr.bf16.gmra.mrb[0].mxu0 %v2699
      %v2910 = vpop.f32.mrb[0].mxu0
      %v2911 = vadd.f32 %v2643, %v2910
      %v2912 = vpop.f32.mrb[0].mxu0
      %v2913 = vpop.f32.mrb[0].mxu0
      %v2914 = vadd.f32 %v2643, %v2913
      %v2915 = vpop.f32.mrb[0].mxu0
      %2916 = vmatprep.mubr.bf16.mxu0 0
      %2917 = vmatmul.mubr.bf16.gmra.mrb[0].mxu0 %v2702
      %v2918 = vpop.f32.mrb[0].mxu0
      %v2919 = vadd.f32 %v2643, %v2918
      %v2920 = vpop.f32.mrb[0].mxu0
      %v2921 = vpop.f32.mrb[0].mxu0
      %v2922 = vadd.f32 %v2643, %v2921
      %v2923 = vpop.f32.mrb[0].mxu0
      %2924 = vmatprep.mubr.bf16.mxu0 0
      %2925 = vmatmul.mubr.bf16.gmra.mrb[0].mxu0 %v2705
      %v2926 = vpop.f32.mrb[0].mxu0
      %v2927 = vadd.f32 %v2643, %v2926
      %v2928 = vpop.f32.mrb[0].mxu0
      %v2929 = vpop.f32.mrb[0].mxu0
      %v2930 = vadd.f32 %v2643, %v2929
      %v2931 = vpop.f32.mrb[0].mxu0
      %2932 = vmatprep.mubr.bf16.mxu0 0
      %2933 = vmatmul.mubr.bf16.gmra.mrb[0].mxu0 %v2708
      %v2934 = vpop.f32.mrb[0].mxu0
      %v2935 = vadd.f32 %v2643, %v2934
      %v2936 = vpop.f32.mrb[0].mxu0
      %v2937 = vpop.f32.mrb[0].mxu0
      %v2938 = vadd.f32 %v2643, %v2937
      %v2939 = vpop.f32.mrb[0].mxu0
      %2940 = vmatprep.mubr.bf16.mxu0 0
      %2941 = vmatmul.mubr.bf16.gmra.mrb[0].mxu0 %v2711
      %v2942 = vpop.f32.mrb[0].mxu0
      %v2943 = vadd.f32 %v2643, %v2942
      %v2944 = vpop.f32.mrb[0].mxu0
      %v2945 = vpop.f32.mrb[0].mxu0
      %v2946 = vadd.f32 %v2643, %v2945
      %v2947 = vpop.f32.mrb[0].mxu0
      %2948 = vmatprep.mubr.bf16.mxu0 0
      %2949 = vmatmul.mubr.bf16.gmra.mrb[0].mxu0 %v2714
      %v2950 = vpop.f32.mrb[0].mxu0
      %v2951 = vadd.f32 %v2643, %v2950
      %v2952 = vpop.f32.mrb[0].mxu0
      %v2953 = vpop.f32.mrb[0].mxu0
      %v2954 = vadd.f32 %v2643, %v2953
      %v2955 = vpop.f32.mrb[0].mxu0
      %2956 = vmatprep.mubr.bf16.mxu0 0
      %2957 = vmatmul.mubr.bf16.gmra.mrb[0].mxu0 %v2717
      %v2958 = vpop.f32.mrb[0].mxu0
      %v2959 = vadd.f32 %v2643, %v2958
      %v2960 = vpop.f32.mrb[0].mxu0
      %v2961 = vpop.f32.mrb[0].mxu0
      %v2962 = vadd.f32 %v2643, %v2961
      %v2963 = vpop.f32.mrb[0].mxu0
      %2964 = vmatprep.mubr.bf16.mxu0 0
      %2965 = vmatmul.mubr.bf16.gmra.mrb[0].mxu0 %v2720
      %v2966 = vpop.f32.mrb[0].mxu0
      %v2967 = vadd.f32 %v2643, %v2966
      %v2968 = vpop.f32.mrb[0].mxu0
      %v2969 = vpop.f32.mrb[0].mxu0
      %v2970 = vadd.f32 %v2643, %v2969
      %v2971 = vpop.f32.mrb[0].mxu0
      %2972 = vmatprep.mubr.bf16.mxu0 0
      %2973 = vmatmul.mubr.bf16.gmra.mrb[0].mxu0 %v2723
      %v2974 = vpop.f32.mrb[0].mxu0
      %v2975 = vadd.f32 %v2643, %v2974
      %v2976 = vpop.f32.mrb[0].mxu0
      %v2977 = vpop.f32.mrb[0].mxu0
      %v2978 = vadd.f32 %v2643, %v2977
      %v2979 = vpop.f32.mrb[0].mxu0
      %2980 = vmatprep.mubr.bf16.mxu0 0
      %2981 = vmatmul.mubr.bf16.gmra.mrb[0].mxu0 %v2726
      %v2982 = vpop.f32.mrb[0].mxu0
      %v2983 = vadd.f32 %v2643, %v2982
      %v2984 = vpop.f32.mrb[0].mxu0
      %v2985 = vpop.f32.mrb[0].mxu0
      %v2986 = vadd.f32 %v2643, %v2985
      %v2987 = vpop.f32.mrb[0].mxu0
      %2988 = vmatprep.mubr.bf16.mxu0 0
      %2989 = vmatmul.mubr.bf16.gmra.mrb[0].mxu0 %v2729
      %v2990 = vpop.f32.mrb[0].mxu0
      %v2991 = vadd.f32 %v2643, %v2990
      %v2992 = vpop.f32.mrb[0].mxu0
      %v2993 = vpop.f32.mrb[0].mxu0
      %v2994 = vadd.f32 %v2643, %v2993
      %v2995 = vpop.f32.mrb[0].mxu0
      %2996 = vmatprep.mubr.bf16.mxu0 0
      %2997 = vmatmul.mubr.bf16.gmra.mrb[0].mxu0 %v2732
      %v2998 = vpop.f32.mrb[0].mxu0
      %v2999 = vadd.f32 %v2643, %v2998
      %v3000 = vpop.f32.mrb[0].mxu0
      %v3001 = vpop.f32.mrb[0].mxu0
      %v3002 = vadd.f32 %v2643, %v3001
      %v3003 = vpop.f32.mrb[0].mxu0
      %3004 = vmatprep.mubr.bf16.mxu0 0
      %3005 = vmatmul.mubr.bf16.gmra.mrb[0].mxu0 %v2735
      %v3006 = vpop.f32.mrb[0].mxu0
      %v3007 = vadd.f32 %v2643, %v3006
      %v3008 = vpop.f32.mrb[0].mxu0
      %v3009 = vpop.f32.mrb[0].mxu0
      %v3010 = vadd.f32 %v2643, %v3009
      %v3011 = vpop.f32.mrb[0].mxu0
      %3012 = vmatprep.mubr.bf16.mxu0 0
      %3013 = vmatmul.mubr.bf16.gmra.mrb[0].mxu0 %v2738
      %v3014 = vpop.f32.mrb[0].mxu0
      %v3015 = vadd.f32 %v2643, %v3014
      %v3016 = vpop.f32.mrb[0].mxu0
      %v3017 = vpop.f32.mrb[0].mxu0
      %v3018 = vadd.f32 %v2643, %v3017
      %v3019 = vpop.f32.mrb[0].mxu0
      %3020 = vmatprep.mubr.bf16.mxu0 0
      %3021 = vmatmul.mubr.bf16.gmra.mrb[0].mxu0 %v2741
      %v3022 = vpop.f32.mrb[0].mxu0
      %v3023 = vadd.f32 %v2643, %v3022
      %v3024 = vpop.f32.mrb[0].mxu0
      %v3025 = vpop.f32.mrb[0].mxu0
      %v3026 = vadd.f32 %v2643, %v3025
      %v3027 = vpop.f32.mrb[0].mxu0
      %3028 = vmatprep.mubr.bf16.mxu0 0
      %3029 = vmatmul.mubr.bf16.gmra.mrb[0].mxu0 %v2744
      %v3030 = vpop.f32.mrb[0].mxu0
      %v3031 = vadd.f32 %v2643, %v3030
      %v3032 = vpop.f32.mrb[0].mxu0
      %v3033 = vpop.f32.mrb[0].mxu0
      %v3034 = vadd.f32 %v2643, %v3033
      %v3035 = vpop.f32.mrb[0].mxu0
      %3036 = vmatprep.mubr.bf16.mxu0 0
      %3037 = vmatmul.mubr.bf16.gmra.mrb[0].mxu0 %v2747
      %v3038 = vpop.f32.mrb[0].mxu0
      %v3039 = vadd.f32 %v2643, %v3038
      %v3040 = vpop.f32.mrb[0].mxu0
      %v3041 = vpop.f32.mrb[0].mxu0
      %v3042 = vadd.f32 %v2643, %v3041
      %v3043 = vpop.f32.mrb[0].mxu0
      %3044 = vmatprep.mubr.bf16.mxu0 0
      %3045 = vmatmul.mubr.bf16.gmra.mrb[0].mxu0 %v2750
      %v3046 = vpop.f32.mrb[0].mxu0
      %v3047 = vadd.f32 %v2643, %v3046
      %v3048 = vpop.f32.mrb[0].mxu0
      %v3049 = vpop.f32.mrb[0].mxu0
      %v3050 = vadd.f32 %v2643, %v3049
      %v3051 = vpop.f32.mrb[0].mxu0
      %3052 = vmatprep.mubr.bf16.mxu0 0
      %3053 = vmatmul.mubr.bf16.gmra.mrb[0].mxu0 %v2753
      %v3054 = vpop.f32.mrb[0].mxu0
      %v3055 = vadd.f32 %v2643, %v3054
      %v3056 = vpop.f32.mrb[0].mxu0
      %v3057 = vpop.f32.mrb[0].mxu0
      %v3058 = vadd.f32 %v2643, %v3057
      %v3059 = vpop.f32.mrb[0].mxu0
      %3060 = vmatprep.mubr.bf16.mxu0 0
      %3061 = vmatmul.mubr.bf16.gmra.mrb[0].mxu0 %v2756
      %v3062 = vpop.f32.mrb[0].mxu0
      %v3063 = vadd.f32 %v2643, %v3062
      %v3064 = vpop.f32.mrb[0].mxu0
      %v3065 = vpop.f32.mrb[0].mxu0
      %v3066 = vadd.f32 %v2643, %v3065
      %v3067 = vpop.f32.mrb[0].mxu0
      %3068 = vmatprep.mubr.bf16.mxu0 0
      %3069 = vmatmul.mubr.bf16.gmra.mrb[0].mxu0 %v2759
      %v3070 = vpop.f32.mrb[0].mxu0
      %v3071 = vadd.f32 %v2643, %v3070
      %v3072 = vpop.f32.mrb[0].mxu0
      %v3073 = vpop.f32.mrb[0].mxu0
      %v3074 = vadd.f32 %v2643, %v3073
      %v3075 = vpop.f32.mrb[0].mxu0
      %3076 = vmatprep.mubr.bf16.mxu0 0
      %3077 = vmatmul.mubr.bf16.gmra.mrb[0].mxu0 %v2762
      %v3078 = vpop.f32.mrb[0].mxu0
      %v3079 = vadd.f32 %v2643, %v3078
      %v3080 = vpop.f32.mrb[0].mxu0
      %v3081 = vpop.f32.mrb[0].mxu0
      %v3082 = vadd.f32 %v2643, %v3081
      %v3083 = vpop.f32.mrb[0].mxu0
      %3084 = vdwg.mxu0
      %v3085 = vmax.f32 %v2799, 0.0
      %v3086 = vmax.f32 %v2802, 0.0
      %v3087 = vmax.f32 %v2807, 0.0
      %v3088 = vmax.f32 %v2810, 0.0
      %v3089 = vmax.f32 %v2815, 0.0
      %v3090 = vmax.f32 %v2818, 0.0
      %v3091 = vmax.f32 %v2823, 0.0
      %v3092 = vmax.f32 %v2826, 0.0
      %v3093 = vmax.f32 %v2831, 0.0
      %v3094 = vmax.f32 %v2834, 0.0
      %v3095 = vmax.f32 %v2839, 0.0
      %v3096 = vmax.f32 %v2842, 0.0
      %v3097 = vmax.f32 %v2847, 0.0
      %v3098 = vmax.f32 %v2850, 0.0
      %v3099 = vmax.f32 %v2855, 0.0
      %v3100 = vmax.f32 %v2858, 0.0
      %v3101 = vmax.f32 %v2863, 0.0
      %v3102 = vmax.f32 %v2866, 0.0
      %v3103 = vmax.f32 %v2871, 0.0
      %v3104 = vmax.f32 %v2874, 0.0
      %v3105 = vmax.f32 %v2879, 0.0
      %v3106 = vmax.f32 %v2882, 0.0
      %v3107 = vmax.f32 %v2887, 0.0
      %v3108 = vmax.f32 %v2890, 0.0
      %v3109 = vmax.f32 %v2895, 0.0
      %v3110 = vmax.f32 %v2898, 0.0
      %v3111 = vmax.f32 %v2903, 0.0
      %v3112 = vmax.f32 %v2906, 0.0
      %v3113 = vmax.f32 %v2911, 0.0
      %v3114 = vmax.f32 %v2914, 0.0
      %v3115 = vmax.f32 %v2919, 0.0
      %v3116 = vmax.f32 %v2922, 0.0
      %v3117 = vmax.f32 %v2927, 0.0
      %v3118 = vmax.f32 %v2930, 0.0
      %v3119 = vmax.f32 %v2935, 0.0
      %v3120 = vmax.f32 %v2938, 0.0
      %v3121 = vmax.f32 %v2943, 0.0
      %v3122 = vmax.f32 %v2946, 0.0
      %v3123 = vmax.f32 %v2951, 0.0
      %v3124 = vmax.f32 %v2954, 0.0
      %v3125 = vmax.f32 %v2959, 0.0
      %v3126 = vmax.f32 %v2962, 0.0
      %v3127 = vmax.f32 %v2967, 0.0
      %v3128 = vmax.f32 %v2970, 0.0
      %v3129 = vmax.f32 %v2975, 0.0
      %v3130 = vmax.f32 %v2978, 0.0
      %v3131 = vmax.f32 %v2983, 0.0
      %v3132 = vmax.f32 %v2986, 0.0
      %v3133 = vmax.f32 %v2991, 0.0
      %v3134 = vmax.f32 %v2994, 0.0
      %v3135 = vmax.f32 %v2999, 0.0
      %v3136 = vmax.f32 %v3002, 0.0
      %v3137 = vmax.f32 %v3007, 0.0
      %v3138 = vmax.f32 %v3010, 0.0
      %v3139 = vmax.f32 %v3015, 0.0
      %v3140 = vmax.f32 %v3018, 0.0
      %v3141 = vmax.f32 %v3023, 0.0
      %v3142 = vmax.f32 %v3026, 0.0
      %v3143 = vmax.f32 %v3031, 0.0
      %v3144 = vmax.f32 %v3034, 0.0
      %v3145 = vmax.f32 %v3039, 0.0
      %v3146 = vmax.f32 %v3042, 0.0
      %v3147 = vmax.f32 %v3047, 0.0
      %v3148 = vmax.f32 %v3050, 0.0
      %v3149 = vmax.f32 %v3055, 0.0
      %v3150 = vmax.f32 %v3058, 0.0
      %v3151 = vmax.f32 %v3063, 0.0
      %v3152 = vmax.f32 %v3066, 0.0
      %v3153 = vmax.f32 %v3071, 0.0
      %v3154 = vmax.f32 %v3074, 0.0
      %v3155 = vmax.f32 %v3079, 0.0
      %v3156 = vmax.f32 %v3082, 0.0
      %v3157 = vpack.c.bf16 %v3086, %v3085
      %v3158 = vpack.c.bf16 %v3088, %v3087
      %v3159 = vpack.c.bf16 %v3090, %v3089
      %v3160 = vpack.c.bf16 %v3092, %v3091
      %v3161 = vpack.c.bf16 %v3094, %v3093
      %v3162 = vpack.c.bf16 %v3096, %v3095
      %v3163 = vpack.c.bf16 %v3098, %v3097
      %v3164 = vpack.c.bf16 %v3100, %v3099
      %v3165 = vpack.c.bf16 %v3102, %v3101
      %v3166 = vpack.c.bf16 %v3104, %v3103
      %v3167 = vpack.c.bf16 %v3106, %v3105
      %v3168 = vpack.c.bf16 %v3108, %v3107
      %v3169 = vpack.c.bf16 %v3110, %v3109
      %v3170 = vpack.c.bf16 %v3112, %v3111
      %v3171 = vpack.c.bf16 %v3114, %v3113
      %v3172 = vpack.c.bf16 %v3116, %v3115
      %v3173 = vpack.c.bf16 %v3118, %v3117
      %v3174 = vpack.c.bf16 %v3120, %v3119
      %v3175 = vpack.c.bf16 %v3122, %v3121
      %v3176 = vpack.c.bf16 %v3124, %v3123
      %v3177 = vpack.c.bf16 %v3126, %v3125
      %v3178 = vpack.c.bf16 %v3128, %v3127
      %v3179 = vpack.c.bf16 %v3130, %v3129
      %v3180 = vpack.c.bf16 %v3132, %v3131
      %v3181 = vpack.c.bf16 %v3134, %v3133
      %v3182 = vpack.c.bf16 %v3136, %v3135
      %v3183 = vpack.c.bf16 %v3138, %v3137
      %v3184 = vpack.c.bf16 %v3140, %v3139
      %v3185 = vpack.c.bf16 %v3142, %v3141
      %v3186 = vpack.c.bf16 %v3144, %v3143
      %v3187 = vpack.c.bf16 %v3146, %v3145
      %v3188 = vpack.c.bf16 %v3148, %v3147
      %v3189 = vpack.c.bf16 %v3150, %v3149
      %v3190 = vpack.c.bf16 %v3152, %v3151
      %v3191 = vpack.c.bf16 %v3154, %v3153
      %v3192 = vpack.c.bf16 %v3156, %v3155
      %v3193 = vunpack.c.l.bf16 %v283
      %v3194 = vlaneseq
      %v3195 = vshrl.u32 %v3194, 7
      %v3196 = vsub.s32 0, %v3195
      %v3197 = vrot.slane %v3193, %v3196
      %v3202 = vunpack.c.l.b16 %v279
      %v3203 = vunpack.c.l.b16 %v280
      %v3204 = vunpack.c.l.b16 %v281
      %v3205 = vunpack.c.l.b16 %v282
      %v3206 = vpack.c.b16 %v3203, %v3202
      %v3207 = vpack.c.b16 %v3205, %v3204
      %v3211 = vsel %vm370, %v3157, 0
      %v3214 = vsel %vm370, %v3158, 0
      %v3217 = vsel %vm370, %v3159, 0
      %v3220 = vsel %vm370, %v3160, 0
      %v3223 = vsel %vm370, %v3161, 0
      %v3226 = vsel %vm370, %v3162, 0
      %v3229 = vsel %vm370, %v3163, 0
      %v3232 = vsel %vm370, %v3164, 0
      %v3235 = vsel %vm370, %v3165, 0
      %v3238 = vsel %vm370, %v3166, 0
      %v3241 = vsel %vm370, %v3167, 0
      %v3244 = vsel %vm370, %v3168, 0
      %v3247 = vsel %vm370, %v3169, 0
      %v3250 = vsel %vm370, %v3170, 0
      %v3253 = vsel %vm370, %v3171, 0
      %v3256 = vsel %vm370, %v3172, 0
      %v3259 = vsel %vm370, %v3173, 0
      %v3262 = vsel %vm370, %v3174, 0
      %v3265 = vsel %vm370, %v3175, 0
      %v3268 = vsel %vm370, %v3176, 0
      %v3271 = vsel %vm370, %v3177, 0
      %v3274 = vsel %vm370, %v3178, 0
      %v3277 = vsel %vm370, %v3179, 0
      %v3280 = vsel %vm370, %v3180, 0
      %v3283 = vsel %vm370, %v3181, 0
      %v3286 = vsel %vm370, %v3182, 0
      %v3289 = vsel %vm370, %v3183, 0
      %v3292 = vsel %vm370, %v3184, 0
      %v3295 = vsel %vm370, %v3185, 0
      %v3298 = vsel %vm370, %v3186, 0
      %v3301 = vsel %vm370, %v3187, 0
      %v3304 = vsel %vm370, %v3188, 0
      %v3307 = vsel %vm370, %v3189, 0
      %v3310 = vsel %vm370, %v3190, 0
      %v3313 = vsel %vm370, %v3191, 0
      %v3316 = vsel %vm370, %v3192, 0
      %3318 = vmatprep.subr.bf16.mxu0 0
      %3319 = vmatpush1.bf16.msra.mxu0 %v3206
      %3320 = vmatprep.subr.bf16.mxu0 0
      %3321 = vmatpush1.bf16.msra.mxu0 %v3207
      %3322 = vmatprep.subr.bf16.mxu0 0
      %3323 = vmatpush1.bf16.msra.mxu0 0
      %3324 = vmatprep.subr.bf16.mxu0 0
      %3325 = vmatpush1.bf16.msra.mxu0 0
      %3326 = vmatprep.subr.bf16.mxu0 0
      %3327 = vmatpush1.bf16.msra.mxu0 0
      %3328 = vmatprep.subr.bf16.mxu0 0
      %3329 = vmatpush1.bf16.msra.mxu0 0
      %3330 = vmatprep.subr.bf16.mxu0 0
      %3331 = vmatpush1.bf16.msra.mxu0 0
      %3332 = vmatprep.subr.bf16.mxu0 0
      %3333 = vmatpush1.bf16.msra.mxu0 0
      %3334 = vmatprep.subr.bf16.mxu0 0
      %3335 = vmatpush1.bf16.msra.mxu0 0
      %3336 = vmatprep.subr.bf16.mxu0 0
      %3337 = vmatpush1.bf16.msra.mxu0 0
      %3338 = vmatprep.subr.bf16.mxu0 0
      %3339 = vmatpush1.bf16.msra.mxu0 0
      %3340 = vmatprep.subr.bf16.mxu0 0
      %3341 = vmatpush1.bf16.msra.mxu0 0
      %3342 = vmatprep.subr.bf16.mxu0 0
      %3343 = vmatpush1.bf16.msra.mxu0 0
      %3344 = vmatprep.subr.bf16.mxu0 0
      %3345 = vmatpush1.bf16.msra.mxu0 0
      %3346 = vmatprep.subr.bf16.mxu0 0
      %3347 = vmatpush1.bf16.msra.mxu0 0
      %3348 = vmatprep.subr.bf16.mxu0 0
      %3349 = vmatpush1.bf16.msra.mxu0 0
      %3350 = vmatprep.mubr.bf16.mxu0 0
      %3351 = vmatmul.mubr.bf16.gmra.mrb[0].mxu0 %v3211
      %v3352 = vpop.f32.mrb[0].mxu0
      %v3353 = vadd.f32 %v3197, %v3352
      %v3354 = vpop.f32.mrb[0].mxu0
      %v3355 = vpop.f32.mrb[0].mxu0
      %v3356 = vadd.f32 %v3197, %v3355
      %v3357 = vpop.f32.mrb[0].mxu0
      %3358 = vmatprep.mubr.bf16.mxu0 0
      %3359 = vmatmul.mubr.bf16.gmra.mrb[0].mxu0 %v3214
      %v3360 = vpop.f32.mrb[0].mxu0
      %v3361 = vadd.f32 %v3197, %v3360
      %v3362 = vpop.f32.mrb[0].mxu0
      %v3363 = vpop.f32.mrb[0].mxu0
      %v3364 = vadd.f32 %v3197, %v3363
      %v3365 = vpop.f32.mrb[0].mxu0
      %3366 = vmatprep.mubr.bf16.mxu0 0
      %3367 = vmatmul.mubr.bf16.gmra.mrb[0].mxu0 %v3217
      %v3368 = vpop.f32.mrb[0].mxu0
      %v3369 = vadd.f32 %v3197, %v3368
      %v3370 = vpop.f32.mrb[0].mxu0
      %v3371 = vpop.f32.mrb[0].mxu0
      %v3372 = vadd.f32 %v3197, %v3371
      %v3373 = vpop.f32.mrb[0].mxu0
      %3374 = vmatprep.mubr.bf16.mxu0 0
      %3375 = vmatmul.mubr.bf16.gmra.mrb[0].mxu0 %v3220
      %v3376 = vpop.f32.mrb[0].mxu0
      %v3377 = vadd.f32 %v3197, %v3376
      %v3378 = vpop.f32.mrb[0].mxu0
      %v3379 = vpop.f32.mrb[0].mxu0
      %v3380 = vadd.f32 %v3197, %v3379
      %v3381 = vpop.f32.mrb[0].mxu0
      %3382 = vmatprep.mubr.bf16.mxu0 0
      %3383 = vmatmul.mubr.bf16.gmra.mrb[0].mxu0 %v3223
      %v3384 = vpop.f32.mrb[0].mxu0
      %v3385 = vadd.f32 %v3197, %v3384
      %v3386 = vpop.f32.mrb[0].mxu0
      %v3387 = vpop.f32.mrb[0].mxu0
      %v3388 = vadd.f32 %v3197, %v3387
      %v3389 = vpop.f32.mrb[0].mxu0
      %3390 = vmatprep.mubr.bf16.mxu0 0
      %3391 = vmatmul.mubr.bf16.gmra.mrb[0].mxu0 %v3226
      %v3392 = vpop.f32.mrb[0].mxu0
      %v3393 = vadd.f32 %v3197, %v3392
      %v3394 = vpop.f32.mrb[0].mxu0
      %v3395 = vpop.f32.mrb[0].mxu0
      %v3396 = vadd.f32 %v3197, %v3395
      %v3397 = vpop.f32.mrb[0].mxu0
      %3398 = vmatprep.mubr.bf16.mxu0 0
      %3399 = vmatmul.mubr.bf16.gmra.mrb[0].mxu0 %v3229
      %v3400 = vpop.f32.mrb[0].mxu0
      %v3401 = vadd.f32 %v3197, %v3400
      %v3402 = vpop.f32.mrb[0].mxu0
      %v3403 = vpop.f32.mrb[0].mxu0
      %v3404 = vadd.f32 %v3197, %v3403
      %v3405 = vpop.f32.mrb[0].mxu0
      %3406 = vmatprep.mubr.bf16.mxu0 0
      %3407 = vmatmul.mubr.bf16.gmra.mrb[0].mxu0 %v3232
      %v3408 = vpop.f32.mrb[0].mxu0
      %v3409 = vadd.f32 %v3197, %v3408
      %v3410 = vpop.f32.mrb[0].mxu0
      %v3411 = vpop.f32.mrb[0].mxu0
      %v3412 = vadd.f32 %v3197, %v3411
      %v3413 = vpop.f32.mrb[0].mxu0
      %3414 = vmatprep.mubr.bf16.mxu0 0
      %3415 = vmatmul.mubr.bf16.gmra.mrb[0].mxu0 %v3235
      %v3416 = vpop.f32.mrb[0].mxu0
      %v3417 = vadd.f32 %v3197, %v3416
      %v3418 = vpop.f32.mrb[0].mxu0
      %v3419 = vpop.f32.mrb[0].mxu0
      %v3420 = vadd.f32 %v3197, %v3419
      %v3421 = vpop.f32.mrb[0].mxu0
      %3422 = vmatprep.mubr.bf16.mxu0 0
      %3423 = vmatmul.mubr.bf16.gmra.mrb[0].mxu0 %v3238
      %v3424 = vpop.f32.mrb[0].mxu0
      %v3425 = vadd.f32 %v3197, %v3424
      %v3426 = vpop.f32.mrb[0].mxu0
      %v3427 = vpop.f32.mrb[0].mxu0
      %v3428 = vadd.f32 %v3197, %v3427
      %v3429 = vpop.f32.mrb[0].mxu0
      %3430 = vmatprep.mubr.bf16.mxu0 0
      %3431 = vmatmul.mubr.bf16.gmra.mrb[0].mxu0 %v3241
      %v3432 = vpop.f32.mrb[0].mxu0
      %v3433 = vadd.f32 %v3197, %v3432
      %v3434 = vpop.f32.mrb[0].mxu0
      %v3435 = vpop.f32.mrb[0].mxu0
      %v3436 = vadd.f32 %v3197, %v3435
      %v3437 = vpop.f32.mrb[0].mxu0
      %3438 = vmatprep.mubr.bf16.mxu0 0
      %3439 = vmatmul.mubr.bf16.gmra.mrb[0].mxu0 %v3244
      %v3440 = vpop.f32.mrb[0].mxu0
      %v3441 = vadd.f32 %v3197, %v3440
      %v3442 = vpop.f32.mrb[0].mxu0
      %v3443 = vpop.f32.mrb[0].mxu0
      %v3444 = vadd.f32 %v3197, %v3443
      %v3445 = vpop.f32.mrb[0].mxu0
      %3446 = vmatprep.mubr.bf16.mxu0 0
      %3447 = vmatmul.mubr.bf16.gmra.mrb[0].mxu0 %v3247
      %v3448 = vpop.f32.mrb[0].mxu0
      %v3449 = vadd.f32 %v3197, %v3448
      %v3450 = vpop.f32.mrb[0].mxu0
      %v3451 = vpop.f32.mrb[0].mxu0
      %v3452 = vadd.f32 %v3197, %v3451
      %v3453 = vpop.f32.mrb[0].mxu0
      %3454 = vmatprep.mubr.bf16.mxu0 0
      %3455 = vmatmul.mubr.bf16.gmra.mrb[0].mxu0 %v3250
      %v3456 = vpop.f32.mrb[0].mxu0
      %v3457 = vadd.f32 %v3197, %v3456
      %v3458 = vpop.f32.mrb[0].mxu0
      %v3459 = vpop.f32.mrb[0].mxu0
      %v3460 = vadd.f32 %v3197, %v3459
      %v3461 = vpop.f32.mrb[0].mxu0
      %3462 = vmatprep.mubr.bf16.mxu0 0
      %3463 = vmatmul.mubr.bf16.gmra.mrb[0].mxu0 %v3253
      %v3464 = vpop.f32.mrb[0].mxu0
      %v3465 = vadd.f32 %v3197, %v3464
      %v3466 = vpop.f32.mrb[0].mxu0
      %v3467 = vpop.f32.mrb[0].mxu0
      %v3468 = vadd.f32 %v3197, %v3467
      %v3469 = vpop.f32.mrb[0].mxu0
      %3470 = vmatprep.mubr.bf16.mxu0 0
      %3471 = vmatmul.mubr.bf16.gmra.mrb[0].mxu0 %v3256
      %v3472 = vpop.f32.mrb[0].mxu0
      %v3473 = vadd.f32 %v3197, %v3472
      %v3474 = vpop.f32.mrb[0].mxu0
      %v3475 = vpop.f32.mrb[0].mxu0
      %v3476 = vadd.f32 %v3197, %v3475
      %v3477 = vpop.f32.mrb[0].mxu0
      %3478 = vmatprep.mubr.bf16.mxu0 0
      %3479 = vmatmul.mubr.bf16.gmra.mrb[0].mxu0 %v3259
      %v3480 = vpop.f32.mrb[0].mxu0
      %v3481 = vadd.f32 %v3197, %v3480
      %v3482 = vpop.f32.mrb[0].mxu0
      %v3483 = vpop.f32.mrb[0].mxu0
      %v3484 = vadd.f32 %v3197, %v3483
      %v3485 = vpop.f32.mrb[0].mxu0
      %3486 = vmatprep.mubr.bf16.mxu0 0
      %3487 = vmatmul.mubr.bf16.gmra.mrb[0].mxu0 %v3262
      %v3488 = vpop.f32.mrb[0].mxu0
      %v3489 = vadd.f32 %v3197, %v3488
      %v3490 = vpop.f32.mrb[0].mxu0
      %v3491 = vpop.f32.mrb[0].mxu0
      %v3492 = vadd.f32 %v3197, %v3491
      %v3493 = vpop.f32.mrb[0].mxu0
      %3494 = vmatprep.mubr.bf16.mxu0 0
      %3495 = vmatmul.mubr.bf16.gmra.mrb[0].mxu0 %v3265
      %v3496 = vpop.f32.mrb[0].mxu0
      %v3497 = vadd.f32 %v3197, %v3496
      %v3498 = vpop.f32.mrb[0].mxu0
      %v3499 = vpop.f32.mrb[0].mxu0
      %v3500 = vadd.f32 %v3197, %v3499
      %v3501 = vpop.f32.mrb[0].mxu0
      %3502 = vmatprep.mubr.bf16.mxu0 0
      %3503 = vmatmul.mubr.bf16.gmra.mrb[0].mxu0 %v3268
      %v3504 = vpop.f32.mrb[0].mxu0
      %v3505 = vadd.f32 %v3197, %v3504
      %v3506 = vpop.f32.mrb[0].mxu0
      %v3507 = vpop.f32.mrb[0].mxu0
      %v3508 = vadd.f32 %v3197, %v3507
      %v3509 = vpop.f32.mrb[0].mxu0
      %3510 = vmatprep.mubr.bf16.mxu0 0
      %3511 = vmatmul.mubr.bf16.gmra.mrb[0].mxu0 %v3271
      %v3512 = vpop.f32.mrb[0].mxu0
      %v3513 = vadd.f32 %v3197, %v3512
      %v3514 = vpop.f32.mrb[0].mxu0
      %v3515 = vpop.f32.mrb[0].mxu0
      %v3516 = vadd.f32 %v3197, %v3515
      %v3517 = vpop.f32.mrb[0].mxu0
      %3518 = vmatprep.mubr.bf16.mxu0 0
      %3519 = vmatmul.mubr.bf16.gmra.mrb[0].mxu0 %v3274
      %v3520 = vpop.f32.mrb[0].mxu0
      %v3521 = vadd.f32 %v3197, %v3520
      %v3522 = vpop.f32.mrb[0].mxu0
      %v3523 = vpop.f32.mrb[0].mxu0
      %v3524 = vadd.f32 %v3197, %v3523
      %v3525 = vpop.f32.mrb[0].mxu0
      %3526 = vmatprep.mubr.bf16.mxu0 0
      %3527 = vmatmul.mubr.bf16.gmra.mrb[0].mxu0 %v3277
      %v3528 = vpop.f32.mrb[0].mxu0
      %v3529 = vadd.f32 %v3197, %v3528
      %v3530 = vpop.f32.mrb[0].mxu0
      %v3531 = vpop.f32.mrb[0].mxu0
      %v3532 = vadd.f32 %v3197, %v3531
      %v3533 = vpop.f32.mrb[0].mxu0
      %3534 = vmatprep.mubr.bf16.mxu0 0
      %3535 = vmatmul.mubr.bf16.gmra.mrb[0].mxu0 %v3280
      %v3536 = vpop.f32.mrb[0].mxu0
      %v3537 = vadd.f32 %v3197, %v3536
      %v3538 = vpop.f32.mrb[0].mxu0
      %v3539 = vpop.f32.mrb[0].mxu0
      %v3540 = vadd.f32 %v3197, %v3539
      %v3541 = vpop.f32.mrb[0].mxu0
      %3542 = vmatprep.mubr.bf16.mxu0 0
      %3543 = vmatmul.mubr.bf16.gmra.mrb[0].mxu0 %v3283
      %v3544 = vpop.f32.mrb[0].mxu0
      %v3545 = vadd.f32 %v3197, %v3544
      %v3546 = vpop.f32.mrb[0].mxu0
      %v3547 = vpop.f32.mrb[0].mxu0
      %v3548 = vadd.f32 %v3197, %v3547
      %v3549 = vpop.f32.mrb[0].mxu0
      %3550 = vmatprep.mubr.bf16.mxu0 0
      %3551 = vmatmul.mubr.bf16.gmra.mrb[0].mxu0 %v3286
      %v3552 = vpop.f32.mrb[0].mxu0
      %v3553 = vadd.f32 %v3197, %v3552
      %v3554 = vpop.f32.mrb[0].mxu0
      %v3555 = vpop.f32.mrb[0].mxu0
      %v3556 = vadd.f32 %v3197, %v3555
      %v3557 = vpop.f32.mrb[0].mxu0
      %3558 = vmatprep.mubr.bf16.mxu0 0
      %3559 = vmatmul.mubr.bf16.gmra.mrb[0].mxu0 %v3289
      %v3560 = vpop.f32.mrb[0].mxu0
      %v3561 = vadd.f32 %v3197, %v3560
      %v3562 = vpop.f32.mrb[0].mxu0
      %v3563 = vpop.f32.mrb[0].mxu0
      %v3564 = vadd.f32 %v3197, %v3563
      %v3565 = vpop.f32.mrb[0].mxu0
      %3566 = vmatprep.mubr.bf16.mxu0 0
      %3567 = vmatmul.mubr.bf16.gmra.mrb[0].mxu0 %v3292
      %v3568 = vpop.f32.mrb[0].mxu0
      %v3569 = vadd.f32 %v3197, %v3568
      %v3570 = vpop.f32.mrb[0].mxu0
      %v3571 = vpop.f32.mrb[0].mxu0
      %v3572 = vadd.f32 %v3197, %v3571
      %v3573 = vpop.f32.mrb[0].mxu0
      %3574 = vmatprep.mubr.bf16.mxu0 0
      %3575 = vmatmul.mubr.bf16.gmra.mrb[0].mxu0 %v3295
      %v3576 = vpop.f32.mrb[0].mxu0
      %v3577 = vadd.f32 %v3197, %v3576
      %v3578 = vpop.f32.mrb[0].mxu0
      %v3579 = vpop.f32.mrb[0].mxu0
      %v3580 = vadd.f32 %v3197, %v3579
      %v3581 = vpop.f32.mrb[0].mxu0
      %3582 = vmatprep.mubr.bf16.mxu0 0
      %3583 = vmatmul.mubr.bf16.gmra.mrb[0].mxu0 %v3298
      %v3584 = vpop.f32.mrb[0].mxu0
      %v3585 = vadd.f32 %v3197, %v3584
      %v3586 = vpop.f32.mrb[0].mxu0
      %v3587 = vpop.f32.mrb[0].mxu0
      %v3588 = vadd.f32 %v3197, %v3587
      %v3589 = vpop.f32.mrb[0].mxu0
      %3590 = vmatprep.mubr.bf16.mxu0 0
      %3591 = vmatmul.mubr.bf16.gmra.mrb[0].mxu0 %v3301
      %v3592 = vpop.f32.mrb[0].mxu0
      %v3593 = vadd.f32 %v3197, %v3592
      %v3594 = vpop.f32.mrb[0].mxu0
      %v3595 = vpop.f32.mrb[0].mxu0
      %v3596 = vadd.f32 %v3197, %v3595
      %v3597 = vpop.f32.mrb[0].mxu0
      %3598 = vmatprep.mubr.bf16.mxu0 0
      %3599 = vmatmul.mubr.bf16.gmra.mrb[0].mxu0 %v3304
      %v3600 = vpop.f32.mrb[0].mxu0
      %v3601 = vadd.f32 %v3197, %v3600
      %v3602 = vpop.f32.mrb[0].mxu0
      %v3603 = vpop.f32.mrb[0].mxu0
      %v3604 = vadd.f32 %v3197, %v3603
      %v3605 = vpop.f32.mrb[0].mxu0
      %3606 = vmatprep.mubr.bf16.mxu0 0
      %3607 = vmatmul.mubr.bf16.gmra.mrb[0].mxu0 %v3307
      %v3608 = vpop.f32.mrb[0].mxu0
      %v3609 = vadd.f32 %v3197, %v3608
      %v3610 = vpop.f32.mrb[0].mxu0
      %v3611 = vpop.f32.mrb[0].mxu0
      %v3612 = vadd.f32 %v3197, %v3611
      %v3613 = vpop.f32.mrb[0].mxu0
      %3614 = vmatprep.mubr.bf16.mxu0 0
      %3615 = vmatmul.mubr.bf16.gmra.mrb[0].mxu0 %v3310
      %v3616 = vpop.f32.mrb[0].mxu0
      %v3617 = vadd.f32 %v3197, %v3616
      %v3618 = vpop.f32.mrb[0].mxu0
      %v3619 = vpop.f32.mrb[0].mxu0
      %v3620 = vadd.f32 %v3197, %v3619
      %v3621 = vpop.f32.mrb[0].mxu0
      %3622 = vmatprep.mubr.bf16.mxu0 0
      %3623 = vmatmul.mubr.bf16.gmra.mrb[0].mxu0 %v3313
      %v3624 = vpop.f32.mrb[0].mxu0
      %v3625 = vadd.f32 %v3197, %v3624
      %v3626 = vpop.f32.mrb[0].mxu0
      %v3627 = vpop.f32.mrb[0].mxu0
      %v3628 = vadd.f32 %v3197, %v3627
      %v3629 = vpop.f32.mrb[0].mxu0
      %3630 = vmatprep.mubr.bf16.mxu0 0
      %3631 = vmatmul.mubr.bf16.gmra.mrb[0].mxu0 %v3316
      %v3632 = vpop.f32.mrb[0].mxu0
      %v3633 = vadd.f32 %v3197, %v3632
      %v3634 = vpop.f32.mrb[0].mxu0
      %v3635 = vpop.f32.mrb[0].mxu0
      %v3636 = vadd.f32 %v3197, %v3635
      %v3637 = vpop.f32.mrb[0].mxu0
      %3638 = vdwg.mxu0
      %v3639 = vmax.f32 %v3353, 0.0
      %v3640 = vmax.f32 %v3356, 0.0
      %v3641 = vmax.f32 %v3361, 0.0
      %v3642 = vmax.f32 %v3364, 0.0
      %v3643 = vmax.f32 %v3369, 0.0
      %v3644 = vmax.f32 %v3372, 0.0
      %v3645 = vmax.f32 %v3377, 0.0
      %v3646 = vmax.f32 %v3380, 0.0
      %v3647 = vmax.f32 %v3385, 0.0
      %v3648 = vmax.f32 %v3388, 0.0
      %v3649 = vmax.f32 %v3393, 0.0
      %v3650 = vmax.f32 %v3396, 0.0
      %v3651 = vmax.f32 %v3401, 0.0
      %v3652 = vmax.f32 %v3404, 0.0
      %v3653 = vmax.f32 %v3409, 0.0
      %v3654 = vmax.f32 %v3412, 0.0
      %v3655 = vmax.f32 %v3417, 0.0
      %v3656 = vmax.f32 %v3420, 0.0
      %v3657 = vmax.f32 %v3425, 0.0
      %v3658 = vmax.f32 %v3428, 0.0
      %v3659 = vmax.f32 %v3433, 0.0
      %v3660 = vmax.f32 %v3436, 0.0
      %v3661 = vmax.f32 %v3441, 0.0
      %v3662 = vmax.f32 %v3444, 0.0
      %v3663 = vmax.f32 %v3449, 0.0
      %v3664 = vmax.f32 %v3452, 0.0
      %v3665 = vmax.f32 %v3457, 0.0
      %v3666 = vmax.f32 %v3460, 0.0
      %v3667 = vmax.f32 %v3465, 0.0
      %v3668 = vmax.f32 %v3468, 0.0
      %v3669 = vmax.f32 %v3473, 0.0
      %v3670 = vmax.f32 %v3476, 0.0
      %v3671 = vmax.f32 %v3481, 0.0
      %v3672 = vmax.f32 %v3484, 0.0
      %v3673 = vmax.f32 %v3489, 0.0
      %v3674 = vmax.f32 %v3492, 0.0
      %v3675 = vmax.f32 %v3497, 0.0
      %v3676 = vmax.f32 %v3500, 0.0
      %v3677 = vmax.f32 %v3505, 0.0
      %v3678 = vmax.f32 %v3508, 0.0
      %v3679 = vmax.f32 %v3513, 0.0
      %v3680 = vmax.f32 %v3516, 0.0
      %v3681 = vmax.f32 %v3521, 0.0
      %v3682 = vmax.f32 %v3524, 0.0
      %v3683 = vmax.f32 %v3529, 0.0
      %v3684 = vmax.f32 %v3532, 0.0
      %v3685 = vmax.f32 %v3537, 0.0
      %v3686 = vmax.f32 %v3540, 0.0
      %v3687 = vmax.f32 %v3545, 0.0
      %v3688 = vmax.f32 %v3548, 0.0
      %v3689 = vmax.f32 %v3553, 0.0
      %v3690 = vmax.f32 %v3556, 0.0
      %v3691 = vmax.f32 %v3561, 0.0
      %v3692 = vmax.f32 %v3564, 0.0
      %v3693 = vmax.f32 %v3569, 0.0
      %v3694 = vmax.f32 %v3572, 0.0
      %v3695 = vmax.f32 %v3577, 0.0
      %v3696 = vmax.f32 %v3580, 0.0
      %v3697 = vmax.f32 %v3585, 0.0
      %v3698 = vmax.f32 %v3588, 0.0
      %v3699 = vmax.f32 %v3593, 0.0
      %v3700 = vmax.f32 %v3596, 0.0
      %v3701 = vmax.f32 %v3601, 0.0
      %v3702 = vmax.f32 %v3604, 0.0
      %v3703 = vmax.f32 %v3609, 0.0
      %v3704 = vmax.f32 %v3612, 0.0
      %v3705 = vmax.f32 %v3617, 0.0
      %v3706 = vmax.f32 %v3620, 0.0
      %v3707 = vmax.f32 %v3625, 0.0
      %v3708 = vmax.f32 %v3628, 0.0
      %v3709 = vmax.f32 %v3633, 0.0
      %v3710 = vmax.f32 %v3636, 0.0
      %v3711 = vsel %vm370, %v3639, -inf
      %v3712 = vsel %vm370, %v3648, -inf
      %v3713 = vmax.f32 %v3711, %v3712
      %v3714 = vsel %vm370, %v3657, -inf
      %v3715 = vmax.f32 %v3713, %v3714
      %v3716 = vsel %vm370, %v3666, -inf
      %v3717 = vmax.f32 %v3715, %v3716
      %v3718 = vsel %vm370, %v3675, -inf
      %v3719 = vmax.f32 %v3717, %v3718
      %v3720 = vsel %vm370, %v3684, -inf
      %v3721 = vmax.f32 %v3719, %v3720
      %v3722 = vsel %vm370, %v3693, -inf
      %v3723 = vmax.f32 %v3721, %v3722
      %v3724 = vsel %vm370, %v3702, -inf
      %v3725 = vmax.f32 %v3723, %v3724
      %v3726 = vsel %vm370, %v3640, -inf
      %v3727 = vsel %vm370, %v3649, -inf
      %v3728 = vmax.f32 %v3726, %v3727
      %v3729 = vsel %vm370, %v3658, -inf
      %v3730 = vmax.f32 %v3728, %v3729
      %v3731 = vsel %vm370, %v3667, -inf
      %v3732 = vmax.f32 %v3730, %v3731
      %v3733 = vsel %vm370, %v3676, -inf
      %v3734 = vmax.f32 %v3732, %v3733
      %v3735 = vsel %vm370, %v3685, -inf
      %v3736 = vmax.f32 %v3734, %v3735
      %v3737 = vsel %vm370, %v3694, -inf
      %v3738 = vmax.f32 %v3736, %v3737
      %v3739 = vsel %vm370, %v3703, -inf
      %v3740 = vmax.f32 %v3738, %v3739
      %v3741 = vsel %vm370, %v3641, -inf
      %v3742 = vsel %vm370, %v3650, -inf
      %v3743 = vmax.f32 %v3741, %v3742
      %v3744 = vsel %vm370, %v3659, -inf
      %v3745 = vmax.f32 %v3743, %v3744
      %v3746 = vsel %vm370, %v3668, -inf
      %v3747 = vmax.f32 %v3745, %v3746
      %v3748 = vsel %vm370, %v3677, -inf
      %v3749 = vmax.f32 %v3747, %v3748
      %v3750 = vsel %vm370, %v3686, -inf
      %v3751 = vmax.f32 %v3749, %v3750
      %v3752 = vsel %vm370, %v3695, -inf
      %v3753 = vmax.f32 %v3751, %v3752
      %v3754 = vsel %vm370, %v3704, -inf
      %v3755 = vmax.f32 %v3753, %v3754
      %v3756 = vsel %vm370, %v3642, -inf
      %v3757 = vsel %vm370, %v3651, -inf
      %v3758 = vmax.f32 %v3756, %v3757
      %v3759 = vsel %vm370, %v3660, -inf
      %v3760 = vmax.f32 %v3758, %v3759
      %v3761 = vsel %vm370, %v3669, -inf
      %v3762 = vmax.f32 %v3760, %v3761
      %v3763 = vsel %vm370, %v3678, -inf
      %v3764 = vmax.f32 %v3762, %v3763
      %v3765 = vsel %vm370, %v3687, -inf
      %v3766 = vmax.f32 %v3764, %v3765
      %v3767 = vsel %vm370, %v3696, -inf
      %v3768 = vmax.f32 %v3766, %v3767
      %v3769 = vsel %vm370, %v3705, -inf
      %v3770 = vmax.f32 %v3768, %v3769
      %v3771 = vsel %vm370, %v3643, -inf
      %v3772 = vsel %vm370, %v3652, -inf
      %v3773 = vmax.f32 %v3771, %v3772
      %v3774 = vsel %vm370, %v3661, -inf
      %v3775 = vmax.f32 %v3773, %v3774
      %v3776 = vsel %vm370, %v3670, -inf
      %v3777 = vmax.f32 %v3775, %v3776
      %v3778 = vsel %vm370, %v3679, -inf
      %v3779 = vmax.f32 %v3777, %v3778
      %v3780 = vsel %vm370, %v3688, -inf
      %v3781 = vmax.f32 %v3779, %v3780
      %v3782 = vsel %vm370, %v3697, -inf
      %v3783 = vmax.f32 %v3781, %v3782
      %v3784 = vsel %vm370, %v3706, -inf
      %v3785 = vmax.f32 %v3783, %v3784
      %v3786 = vsel %vm370, %v3644, -inf
      %v3787 = vsel %vm370, %v3653, -inf
      %v3788 = vmax.f32 %v3786, %v3787
      %v3789 = vsel %vm370, %v3662, -inf
      %v3790 = vmax.f32 %v3788, %v3789
      %v3791 = vsel %vm370, %v3671, -inf
      %v3792 = vmax.f32 %v3790, %v3791
      %v3793 = vsel %vm370, %v3680, -inf
      %v3794 = vmax.f32 %v3792, %v3793
      %v3795 = vsel %vm370, %v3689, -inf
      %v3796 = vmax.f32 %v3794, %v3795
      %v3797 = vsel %vm370, %v3698, -inf
      %v3798 = vmax.f32 %v3796, %v3797
      %v3799 = vsel %vm370, %v3707, -inf
      %v3800 = vmax.f32 %v3798, %v3799
      %v3801 = vsel %vm370, %v3645, -inf
      %v3802 = vsel %vm370, %v3654, -inf
      %v3803 = vmax.f32 %v3801, %v3802
      %v3804 = vsel %vm370, %v3663, -inf
      %v3805 = vmax.f32 %v3803, %v3804
      %v3806 = vsel %vm370, %v3672, -inf
      %v3807 = vmax.f32 %v3805, %v3806
      %v3808 = vsel %vm370, %v3681, -inf
      %v3809 = vmax.f32 %v3807, %v3808
      %v3810 = vsel %vm370, %v3690, -inf
      %v3811 = vmax.f32 %v3809, %v3810
      %v3812 = vsel %vm370, %v3699, -inf
      %v3813 = vmax.f32 %v3811, %v3812
      %v3814 = vsel %vm370, %v3708, -inf
      %v3815 = vmax.f32 %v3813, %v3814
      %v3816 = vsel %vm370, %v3646, -inf
      %v3817 = vsel %vm370, %v3655, -inf
      %v3818 = vmax.f32 %v3816, %v3817
      %v3819 = vsel %vm370, %v3664, -inf
      %v3820 = vmax.f32 %v3818, %v3819
      %v3821 = vsel %vm370, %v3673, -inf
      %v3822 = vmax.f32 %v3820, %v3821
      %v3823 = vsel %vm370, %v3682, -inf
      %v3824 = vmax.f32 %v3822, %v3823
      %v3825 = vsel %vm370, %v3691, -inf
      %v3826 = vmax.f32 %v3824, %v3825
      %v3827 = vsel %vm370, %v3700, -inf
      %v3828 = vmax.f32 %v3826, %v3827
      %v3829 = vsel %vm370, %v3709, -inf
      %v3830 = vmax.f32 %v3828, %v3829
      %v3831 = vsel %vm370, %v3647, -inf
      %v3832 = vsel %vm370, %v3656, -inf
      %v3833 = vmax.f32 %v3831, %v3832
      %v3834 = vsel %vm370, %v3665, -inf
      %v3835 = vmax.f32 %v3833, %v3834
      %v3836 = vsel %vm370, %v3674, -inf
      %v3837 = vmax.f32 %v3835, %v3836
      %v3838 = vsel %vm370, %v3683, -inf
      %v3839 = vmax.f32 %v3837, %v3838
      %v3840 = vsel %vm370, %v3692, -inf
      %v3841 = vmax.f32 %v3839, %v3840
      %v3842 = vsel %vm370, %v3701, -inf
      %v3843 = vmax.f32 %v3841, %v3842
      %v3844 = vsel %vm370, %v3710, -inf
      %v3845 = vmax.f32 %v3843, %v3844
      %v3846 = vpack.c.bf16 %v3740, %v3725
      %v3847 = vpack.c.bf16 %v3770, %v3755
      %v3848 = vpack.c.bf16 %v3800, %v3785
      %v3849 = vpack.c.bf16 %v3830, %v3815
      %v3850 = vpack.c.bf16 %v3845, %v3845
      %v3851 = vunpack.c.l.bf16 %v288
      %v3852 = vlaneseq
      %v3853 = vshrl.u32 %v3852, 7
      %v3854 = vsub.s32 0, %v3853
      %v3855 = vrot.slane %v3851, %v3854
      %v3860 = vunpack.c.l.b16 %v284
      %v3861 = vunpack.c.l.b16 %v285
      %v3862 = vunpack.c.l.b16 %v286
      %v3863 = vunpack.c.l.b16 %v287
      %v3864 = vpack.c.b16 %v3861, %v3860
      %v3865 = vpack.c.b16 %v3863, %v3862
      %v3869 = vsel %vm370, %v3846, 0
      %v3872 = vsel %vm370, %v3847, 0
      %v3875 = vsel %vm370, %v3848, 0
      %v3878 = vsel %vm370, %v3849, 0
      %v3881 = vsel %vm370, %v3850, 0
      %3883 = vmatprep.subr.bf16.mxu0 0
      %3884 = vmatpush1.bf16.msra.mxu0 %v3864
      %3885 = vmatprep.subr.bf16.mxu0 0
      %3886 = vmatpush1.bf16.msra.mxu0 %v3865
      %3887 = vmatprep.subr.bf16.mxu0 0
      %3888 = vmatpush1.bf16.msra.mxu0 0
      %3889 = vmatprep.subr.bf16.mxu0 0
      %3890 = vmatpush1.bf16.msra.mxu0 0
      %3891 = vmatprep.subr.bf16.mxu0 0
      %3892 = vmatpush1.bf16.msra.mxu0 0
      %3893 = vmatprep.subr.bf16.mxu0 0
      %3894 = vmatpush1.bf16.msra.mxu0 0
      %3895 = vmatprep.subr.bf16.mxu0 0
      %3896 = vmatpush1.bf16.msra.mxu0 0
      %3897 = vmatprep.subr.bf16.mxu0 0
      %3898 = vmatpush1.bf16.msra.mxu0 0
      %3899 = vmatprep.subr.bf16.mxu0 0
      %3900 = vmatpush1.bf16.msra.mxu0 0
      %3901 = vmatprep.subr.bf16.mxu0 0
      %3902 = vmatpush1.bf16.msra.mxu0 0
      %3903 = vmatprep.subr.bf16.mxu0 0
      %3904 = vmatpush1.bf16.msra.mxu0 0
      %3905 = vmatprep.subr.bf16.mxu0 0
      %3906 = vmatpush1.bf16.msra.mxu0 0
      %3907 = vmatprep.subr.bf16.mxu0 0
      %3908 = vmatpush1.bf16.msra.mxu0 0
      %3909 = vmatprep.subr.bf16.mxu0 0
      %3910 = vmatpush1.bf16.msra.mxu0 0
      %3911 = vmatprep.subr.bf16.mxu0 0
      %3912 = vmatpush1.bf16.msra.mxu0 0
      %3913 = vmatprep.subr.bf16.mxu0 0
      %3914 = vmatpush1.bf16.msra.mxu0 0
      %3915 = vmatprep.mubr.bf16.mxu0 0
      %3916 = vmatmul.mubr.bf16.gmra.mrb[0].mxu0 %v3869
      %v3917 = vpop.f32.mrb[0].mxu0
      %v3918 = vadd.f32 %v3855, %v3917
      %v3919 = vpop.f32.mrb[0].mxu0
      %v3920 = vpop.f32.mrb[0].mxu0
      %v3921 = vadd.f32 %v3855, %v3920
      %v3922 = vpop.f32.mrb[0].mxu0
      %3923 = vmatprep.mubr.bf16.mxu0 0
      %3924 = vmatmul.mubr.bf16.gmra.mrb[0].mxu0 %v3872
      %v3925 = vpop.f32.mrb[0].mxu0
      %v3926 = vadd.f32 %v3855, %v3925
      %v3927 = vpop.f32.mrb[0].mxu0
      %v3928 = vpop.f32.mrb[0].mxu0
      %v3929 = vadd.f32 %v3855, %v3928
      %v3930 = vpop.f32.mrb[0].mxu0
      %3931 = vmatprep.mubr.bf16.mxu0 0
      %3932 = vmatmul.mubr.bf16.gmra.mrb[0].mxu0 %v3875
      %v3933 = vpop.f32.mrb[0].mxu0
      %v3934 = vadd.f32 %v3855, %v3933
      %v3935 = vpop.f32.mrb[0].mxu0
      %v3936 = vpop.f32.mrb[0].mxu0
      %v3937 = vadd.f32 %v3855, %v3936
      %v3938 = vpop.f32.mrb[0].mxu0
      %3939 = vmatprep.mubr.bf16.mxu0 0
      %3940 = vmatmul.mubr.bf16.gmra.mrb[0].mxu0 %v3878
      %v3941 = vpop.f32.mrb[0].mxu0
      %v3942 = vadd.f32 %v3855, %v3941
      %v3943 = vpop.f32.mrb[0].mxu0
      %v3944 = vpop.f32.mrb[0].mxu0
      %v3945 = vadd.f32 %v3855, %v3944
      %v3946 = vpop.f32.mrb[0].mxu0
      %3947 = vmatprep.mubr.bf16.mxu0 0
      %3948 = vmatmul.mubr.bf16.gmra.mrb[0].mxu0 %v3881
      %v3949 = vpop.f32.mrb[0].mxu0
      %v3950 = vadd.f32 %v3855, %v3949
      %v3951 = vpop.f32.mrb[0].mxu0
      %v3952 = vpop.f32.mrb[0].mxu0
      %v3953 = vpop.f32.mrb[0].mxu0
      %3954 = vdwg.mxu0
      %v3955 = vmax.f32 %v3918, 0.0
      %v3956 = vmax.f32 %v3921, 0.0
      %v3957 = vmax.f32 %v3926, 0.0
      %v3958 = vmax.f32 %v3929, 0.0
      %v3959 = vmax.f32 %v3934, 0.0
      %v3960 = vmax.f32 %v3937, 0.0
      %v3961 = vmax.f32 %v3942, 0.0
      %v3962 = vmax.f32 %v3945, 0.0
      %v3963 = vmax.f32 %v3950, 0.0
      %v3964 = vpack.c.bf16 %v3956, %v3955
      %v3965 = vpack.c.bf16 %v3958, %v3957
      %v3966 = vpack.c.bf16 %v3960, %v3959
      %v3967 = vpack.c.bf16 %v3962, %v3961
      %v3968 = vpack.c.bf16 %v3963, %v3963
      %v3969 = vunpack.c.l.bf16 %v293
      %v3970 = vlaneseq
      %v3971 = vshrl.u32 %v3970, 7
      %v3972 = vsub.s32 0, %v3971
      %v3973 = vrot.slane %v3969, %v3972
      %v3978 = vunpack.c.l.b16 %v289
      %v3979 = vunpack.c.l.b16 %v290
      %v3980 = vunpack.c.l.b16 %v291
      %v3981 = vunpack.c.l.b16 %v292
      %v3982 = vpack.c.b16 %v3979, %v3978
      %v3983 = vpack.c.b16 %v3981, %v3980
      %v3987 = vsel %vm370, %v3964, 0
      %v3990 = vsel %vm370, %v3965, 0
      %v3993 = vsel %vm370, %v3966, 0
      %v3996 = vsel %vm370, %v3967, 0
      %v3999 = vsel %vm370, %v3968, 0
      %4001 = vmatprep.subr.bf16.mxu0 0
      %4002 = vmatpush1.bf16.msra.mxu0 %v3982
      %4003 = vmatprep.subr.bf16.mxu0 0
      %4004 = vmatpush1.bf16.msra.mxu0 %v3983
      %4005 = vmatprep.subr.bf16.mxu0 0
      %4006 = vmatpush1.bf16.msra.mxu0 0
      %4007 = vmatprep.subr.bf16.mxu0 0
      %4008 = vmatpush1.bf16.msra.mxu0 0
      %4009 = vmatprep.subr.bf16.mxu0 0
      %4010 = vmatpush1.bf16.msra.mxu0 0
      %4011 = vmatprep.subr.bf16.mxu0 0
      %4012 = vmatpush1.bf16.msra.mxu0 0
      %4013 = vmatprep.subr.bf16.mxu0 0
      %4014 = vmatpush1.bf16.msra.mxu0 0
      %4015 = vmatprep.subr.bf16.mxu0 0
      %4016 = vmatpush1.bf16.msra.mxu0 0
      %4017 = vmatprep.subr.bf16.mxu0 0
      %4018 = vmatpush1.bf16.msra.mxu0 0
      %4019 = vmatprep.subr.bf16.mxu0 0
      %4020 = vmatpush1.bf16.msra.mxu0 0
      %4021 = vmatprep.subr.bf16.mxu0 0
      %4022 = vmatpush1.bf16.msra.mxu0 0
      %4023 = vmatprep.subr.bf16.mxu0 0
      %4024 = vmatpush1.bf16.msra.mxu0 0
      %4025 = vmatprep.subr.bf16.mxu0 0
      %4026 = vmatpush1.bf16.msra.mxu0 0
      %4027 = vmatprep.subr.bf16.mxu0 0
      %4028 = vmatpush1.bf16.msra.mxu0 0
      %4029 = vmatprep.subr.bf16.mxu0 0
      %4030 = vmatpush1.bf16.msra.mxu0 0
      %4031 = vmatprep.subr.bf16.mxu0 0
      %4032 = vmatpush1.bf16.msra.mxu0 0
      %4033 = vmatprep.mubr.bf16.mxu0 0
      %4034 = vmatmul.mubr.bf16.gmra.mrb[0].mxu0 %v3987
      %v4035 = vpop.f32.mrb[0].mxu0
      %v4036 = vadd.f32 %v3973, %v4035
      %v4037 = vpop.f32.mrb[0].mxu0
      %v4038 = vpop.f32.mrb[0].mxu0
      %v4039 = vadd.f32 %v3973, %v4038
      %v4040 = vpop.f32.mrb[0].mxu0
      %4041 = vmatprep.mubr.bf16.mxu0 0
      %4042 = vmatmul.mubr.bf16.gmra.mrb[0].mxu0 %v3990
      %v4043 = vpop.f32.mrb[0].mxu0
      %v4044 = vadd.f32 %v3973, %v4043
      %v4045 = vpop.f32.mrb[0].mxu0
      %v4046 = vpop.f32.mrb[0].mxu0
      %v4047 = vadd.f32 %v3973, %v4046
      %v4048 = vpop.f32.mrb[0].mxu0
      %4049 = vmatprep.mubr.bf16.mxu0 0
      %4050 = vmatmul.mubr.bf16.gmra.mrb[0].mxu0 %v3993
      %v4051 = vpop.f32.mrb[0].mxu0
      %v4052 = vadd.f32 %v3973, %v4051
      %v4053 = vpop.f32.mrb[0].mxu0
      %v4054 = vpop.f32.mrb[0].mxu0
      %v4055 = vadd.f32 %v3973, %v4054
      %v4056 = vpop.f32.mrb[0].mxu0
      %4057 = vmatprep.mubr.bf16.mxu0 0
      %4058 = vmatmul.mubr.bf16.gmra.mrb[0].mxu0 %v3996
      %v4059 = vpop.f32.mrb[0].mxu0
      %v4060 = vadd.f32 %v3973, %v4059
      %v4061 = vpop.f32.mrb[0].mxu0
      %v4062 = vpop.f32.mrb[0].mxu0
      %v4063 = vadd.f32 %v3973, %v4062
      %v4064 = vpop.f32.mrb[0].mxu0
      %4065 = vmatprep.mubr.bf16.mxu0 0
      %4066 = vmatmul.mubr.bf16.gmra.mrb[0].mxu0 %v3999
      %v4067 = vpop.f32.mrb[0].mxu0
      %v4068 = vadd.f32 %v3973, %v4067
      %v4069 = vpop.f32.mrb[0].mxu0
      %v4070 = vpop.f32.mrb[0].mxu0
      %v4071 = vpop.f32.mrb[0].mxu0
      %4072 = vdwg.mxu0
      %v4073 = vmax.f32 %v4036, 0.0
      %v4074 = vmax.f32 %v4039, 0.0
      %v4075 = vmax.f32 %v4044, 0.0
      %v4076 = vmax.f32 %v4047, 0.0
      %v4077 = vmax.f32 %v4052, 0.0
      %v4078 = vmax.f32 %v4055, 0.0
      %v4079 = vmax.f32 %v4060, 0.0
      %v4080 = vmax.f32 %v4063, 0.0
      %v4081 = vmax.f32 %v4068, 0.0
      %v4082 = vpack.c.bf16 %v4074, %v4073
      %v4083 = vpack.c.bf16 %v4076, %v4075
      %v4084 = vpack.c.bf16 %v4078, %v4077
      %v4085 = vpack.c.bf16 %v4080, %v4079
      %v4086 = vpack.c.bf16 %v4081, %v4081
      %v4087 = vunpack.c.l.bf16 %v298
      %v4088 = vlaneseq
      %v4089 = vshrl.u32 %v4088, 7
      %v4090 = vsub.s32 0, %v4089
      %v4091 = vrot.slane %v4087, %v4090
      %v4096 = vunpack.c.l.b16 %v294
      %v4097 = vunpack.c.l.b16 %v295
      %v4098 = vunpack.c.l.b16 %v296
      %v4099 = vunpack.c.l.b16 %v297
      %v4100 = vpack.c.b16 %v4097, %v4096
      %v4101 = vpack.c.b16 %v4099, %v4098
      %v4105 = vsel %vm370, %v4082, 0
      %v4108 = vsel %vm370, %v4083, 0
      %v4111 = vsel %vm370, %v4084, 0
      %v4114 = vsel %vm370, %v4085, 0
      %v4117 = vsel %vm370, %v4086, 0
      %4119 = vmatprep.subr.bf16.mxu0 0
      %4120 = vmatpush1.bf16.msra.mxu0 %v4100
      %4121 = vmatprep.subr.bf16.mxu0 0
      %4122 = vmatpush1.bf16.msra.mxu0 %v4101
      %4123 = vmatprep.subr.bf16.mxu0 0
      %4124 = vmatpush1.bf16.msra.mxu0 0
      %4125 = vmatprep.subr.bf16.mxu0 0
      %4126 = vmatpush1.bf16.msra.mxu0 0
      %4127 = vmatprep.subr.bf16.mxu0 0
      %4128 = vmatpush1.bf16.msra.mxu0 0
      %4129 = vmatprep.subr.bf16.mxu0 0
      %4130 = vmatpush1.bf16.msra.mxu0 0
      %4131 = vmatprep.subr.bf16.mxu0 0
      %4132 = vmatpush1.bf16.msra.mxu0 0
      %4133 = vmatprep.subr.bf16.mxu0 0
      %4134 = vmatpush1.bf16.msra.mxu0 0
      %4135 = vmatprep.subr.bf16.mxu0 0
      %4136 = vmatpush1.bf16.msra.mxu0 0
      %4137 = vmatprep.subr.bf16.mxu0 0
      %4138 = vmatpush1.bf16.msra.mxu0 0
      %4139 = vmatprep.subr.bf16.mxu0 0
      %4140 = vmatpush1.bf16.msra.mxu0 0
      %4141 = vmatprep.subr.bf16.mxu0 0
      %4142 = vmatpush1.bf16.msra.mxu0 0
      %4143 = vmatprep.subr.bf16.mxu0 0
      %4144 = vmatpush1.bf16.msra.mxu0 0
      %4145 = vmatprep.subr.bf16.mxu0 0
      %4146 = vmatpush1.bf16.msra.mxu0 0
      %4147 = vmatprep.subr.bf16.mxu0 0
      %4148 = vmatpush1.bf16.msra.mxu0 0
      %4149 = vmatprep.subr.bf16.mxu0 0
      %4150 = vmatpush1.bf16.msra.mxu0 0
      %4151 = vmatprep.mubr.bf16.mxu0 0
      %4152 = vmatmul.mubr.bf16.gmra.mrb[0].mxu0 %v4105
      %v4153 = vpop.f32.mrb[0].mxu0
      %v4154 = vadd.f32 %v4091, %v4153
      %v4155 = vpop.f32.mrb[0].mxu0
      %v4156 = vpop.f32.mrb[0].mxu0
      %v4157 = vadd.f32 %v4091, %v4156
      %v4158 = vpop.f32.mrb[0].mxu0
      %4159 = vmatprep.mubr.bf16.mxu0 0
      %4160 = vmatmul.mubr.bf16.gmra.mrb[0].mxu0 %v4108
      %v4161 = vpop.f32.mrb[0].mxu0
      %v4162 = vadd.f32 %v4091, %v4161
      %v4163 = vpop.f32.mrb[0].mxu0
      %v4164 = vpop.f32.mrb[0].mxu0
      %v4165 = vadd.f32 %v4091, %v4164
      %v4166 = vpop.f32.mrb[0].mxu0
      %4167 = vmatprep.mubr.bf16.mxu0 0
      %4168 = vmatmul.mubr.bf16.gmra.mrb[0].mxu0 %v4111
      %v4169 = vpop.f32.mrb[0].mxu0
      %v4170 = vadd.f32 %v4091, %v4169
      %v4171 = vpop.f32.mrb[0].mxu0
      %v4172 = vpop.f32.mrb[0].mxu0
      %v4173 = vadd.f32 %v4091, %v4172
      %v4174 = vpop.f32.mrb[0].mxu0
      %4175 = vmatprep.mubr.bf16.mxu0 0
      %4176 = vmatmul.mubr.bf16.gmra.mrb[0].mxu0 %v4114
      %v4177 = vpop.f32.mrb[0].mxu0
      %v4178 = vadd.f32 %v4091, %v4177
      %v4179 = vpop.f32.mrb[0].mxu0
      %v4180 = vpop.f32.mrb[0].mxu0
      %v4181 = vadd.f32 %v4091, %v4180
      %v4182 = vpop.f32.mrb[0].mxu0
      %4183 = vmatprep.mubr.bf16.mxu0 0
      %4184 = vmatmul.mubr.bf16.gmra.mrb[0].mxu0 %v4117
      %v4185 = vpop.f32.mrb[0].mxu0
      %v4186 = vadd.f32 %v4091, %v4185
      %v4187 = vpop.f32.mrb[0].mxu0
      %v4188 = vpop.f32.mrb[0].mxu0
      %v4189 = vpop.f32.mrb[0].mxu0
      %4190 = vdwg.mxu0
      %4191 = vst.msk [vmem:[%s265] sm:$0xff] %vm300, %v4154
      %4192 = vst.msk [vmem:[%s265 + $0x8] sm:$0xff] %vm300, %v4157
      %4193 = vst.msk [vmem:[%s265 + $0x10] sm:$0xff] %vm300, %v4162
      %4194 = vst.msk [vmem:[%s265 + $0x18] sm:$0xff] %vm300, %v4165
      %4195 = vst.msk [vmem:[%s265 + $0x20] sm:$0xff] %vm300, %v4170
      %4196 = vst.msk [vmem:[%s265 + $0x28] sm:$0xff] %vm300, %v4173
      %4197 = vst.msk [vmem:[%s265 + $0x30] sm:$0xff] %vm300, %v4178
      %4198 = vst.msk [vmem:[%s265 + $0x38] sm:$0xff] %vm300, %v4181
      %4199 = vst.msk [vmem:[%s265 + $0x40] sm:$0xff] %vm300, %v4186
      %p4200 = scmp.lt.s32.totalorder %s19, 1
      %s4201 = scalar_select %p4200, %s19, 1
      %p4202 = scmp.lt.s32.totalorder %s20, 0
      %s4203 = scalar_select %p4202, %s20, 0
      %s4204 = smul.addr %s4201, 9
      %s4205 = sadd.s32 %s4203, %s4204
      %s4206 = smul.addr %s4205, 8
      %s4207 = scalar_lea.vmem %s4, %s4206
      // Predicated region
      $region37: #{tpu_custom_call.1} parent=35 // pred_check
        %p4208 = pneg %p148
      $region38: #{tpu_custom_call.1} parent=35 // pred_check_branch
        %4210 = sbr.rel (%p4208) target = $region40
      $region39: #{tpu_custom_call.1} parent=35 // pred_region
        _
      $region40: #{tpu_custom_call.1} parent=35 // pred_fallthru
        _
    $region36: #{tpu_custom_call.1} parent=5 // pred_fallthru
      _
    %p4211 = scmp.le.s32.totalorder 2, %s10
    // Predicated region
    $region41: #{tpu_custom_call.1} parent=5 // pred_check
      %p4212 = pneg %p4211
    $region42: #{tpu_custom_call.1} parent=5 // pred_check_branch
      %4214 = sbr.rel (%p4212) target = $region44
    $region43: #{tpu_custom_call.1} parent=5 // pred_region
      %s4215 = ssub.s32 %s10, 2
      // Predicated region
      $region45: #{tpu_custom_call.1} parent=43 // pred_check
        %p4216 = pneg %p154
      $region46: #{tpu_custom_call.1} parent=43 // pred_check_branch
        %4218 = sbr.rel (%p4216) target = $region48
      $region47: #{tpu_custom_call.1} parent=43 // pred_region
        %p4219 = scmp.lt.s32.totalorder %s21, 1
        %s4220 = scalar_select %p4219, %s21, 1
        %p4221 = scmp.lt.s32.totalorder %s22, 0
        %s4222 = scalar_select %p4221, %s22, 0
        %s4223 = smul.addr %s4220, 9
        %s4224 = sadd.s32 %s4222, %s4223
        %s4225 = smul.addr %s4224, 8
        %s4226 = scalar_lea.vmem %s4, %s4225
      $region48: #{tpu_custom_call.1} parent=43 // pred_fallthru
        _
    $region44: #{tpu_custom_call.1} parent=5 // pred_fallthru
      _
  $region6: #{tpu_custom_call.1} parent=0 // loop_footer
    %s14 = sadd.s32 1, %s10
  $region7: #{tpu_custom_call.1} parent=0 // loop_footer_branch
    %9 = sbr.rel target = $region3
  $region8: #{tpu_custom_call.1} parent=0 // loop_exit
    _

</llo_original>
